<compile_context>
chip_gen: v7x
topology: tpu7x:2x2x1
jax: 0.10.0
libtpu: 0.0.40
codegen_flags: <defaults>
</compile_context>

<pallas_src>
import functools

import jax
import jax.numpy as jnp
from jax.experimental import pallas as pl
from jax.experimental.pallas import tpu as pltpu

LN_EPS = 1e-5


# ---------------------------------------------------------------------------
# in-kernel helpers (operate on values, not refs)
# ---------------------------------------------------------------------------
def _layer_norm(x, gamma, beta):
    """LayerNorm over the last dim; residual is added by the caller before."""
    mu = jnp.mean(x, axis=-1, keepdims=True)
    xc = x - mu
    var = jnp.mean(xc * xc, axis=-1, keepdims=True)
    return xc * jax.lax.rsqrt(var + LN_EPS) * gamma + beta


def _mha(q_in, k_in, v_in, wq, bq, wk, bk, wv, bv, wo, bo, nhead):
    """Multi-head attention with packed projections.

    q_in: (B, Lq, D); k_in / v_in: (B, Lk, D)
    wq/wk/wv/wo: (D, D) packed weights (x @ W convention, heads contiguous
    along output columns).  The 1/sqrt(dh) softmax scale is pre-folded into
    wq and bq at parameter-prep time.  bq/bk/bv/bo: (1, D).

    Projections and the out-projection are single 2-D matmuls over (B*L, D);
    heads move to the leading batch axis with one relayout so the score /
    context contractions are two head-batched einsums.
    """
    B, Lq, D = q_in.shape
    Lk = k_in.shape[1]
    dh = D // nhead

    q = jnp.dot(q_in.reshape(B * Lq, D), wq,
                preferred_element_type=jnp.float32) + bq
    k = jnp.dot(k_in.reshape(B * Lk, D), wk,
                preferred_element_type=jnp.float32) + bk
    v = jnp.dot(v_in.reshape(B * Lk, D), wv,
                preferred_element_type=jnp.float32) + bv
    q = q.reshape(B, Lq, D)
    k = k.reshape(B, Lk, D)
    v = v.reshape(B, Lk, D)

    # Head relayout: lanes -> leading batch axis (static slices, one concat).
    def split(x):
        return jnp.concatenate(
            [x[:, :, h * dh:(h + 1) * dh] for h in range(nhead)], axis=0)

    qb = split(q)                              # (H*B, Lq, dh)
    kb = split(k)                              # (H*B, Lk, dh)
    vb = split(v)                              # (H*B, Lk, dh)

    s = jnp.einsum('bqd,bkd->bqk', qb, kb,
                   preferred_element_type=jnp.float32)
    s = s - jnp.max(s, axis=-1, keepdims=True)
    p = jnp.exp(s)
    p = p * pl.reciprocal(jnp.sum(p, axis=-1, keepdims=True), approx=True)
    ctx = jnp.einsum('bqk,bkd->bqd', p, vb,
                     preferred_element_type=jnp.float32)    # (H*B, Lq, dh)

    # Merge heads back onto lanes, single packed out-projection.
    ctx = jnp.concatenate(
        [ctx[h * B:(h + 1) * B] for h in range(nhead)], axis=-1)  # (B, Lq, D)
    out = jnp.dot(ctx.reshape(B * Lq, D), wo,
                  preferred_element_type=jnp.float32) + bo
    return out.reshape(B, Lq, D)


# ---------------------------------------------------------------------------
# fused decoder-stack kernel: grid = (batch, layer); the target sequence is
# carried in an f32 VMEM scratch across the layer axis and only the final
# (post three-way final-LayerNorm) result is stored to the output.
# ---------------------------------------------------------------------------
def _decoder_stack_kernel(qpos_ref, mem_ref, memk_ref, fln_ref,
                          attn_w_ref, vec_ref, ff_w1_ref, ff_b1_ref, ff_w2_ref,
                          o_ref, tgt_acc, *, nhead):
    layer = pl.program_id(1)

    # output_*_embed start as zeros (reference: torch.zeros_like(*_query)).
    @pl.when(layer == 0)
    def _():
        tgt_acc[...] = jnp.zeros_like(tgt_acc)

    tgt = tgt_acc[...]                              # (1, Lt, D) f32, resident
    qpos = qpos_ref[...].astype(jnp.float32)        # (1, Lt, D) query pos embed
    mem = mem_ref[...].astype(jnp.float32)          # (1, Lm, D) memory (values)
    memk = memk_ref[...].astype(jnp.float32)        # (1, Lm, D) memory + pos
    vec = vec_ref[...].astype(jnp.float32)          # (15, D) biases + ln rows
    # vec rows: 0 sa_bq(scaled) 1 sa_bk 2 sa_bv 3 sa_bo
    #           4 ca_bq(scaled) 5 ca_bk 6 ca_bv 7 ca_bo
    #           8 ff_b2  9/10 ln1 g/b  11/12 ln2 g/b  13/14 ln3 g/b

    # --- self-attention over fused pose|shape|cam queries (post-norm) -------
    qk_in = tgt + qpos
    sa = _mha(qk_in, qk_in, tgt,
              attn_w_ref[0], vec[0:1], attn_w_ref[1], vec[1:2],
              attn_w_ref[2], vec[2:3], attn_w_ref[3], vec[3:4], nhead)
    tgt = _layer_norm(tgt + sa, vec[9:10], vec[10:11])        # residual fused

    # --- cross-attention to image memory (pos added to K once, in wrapper) --
    ca = _mha(tgt + qpos, memk, mem,
              attn_w_ref[4], vec[4:5], attn_w_ref[5], vec[5:6],
              attn_w_ref[6], vec[6:7], attn_w_ref[7], vec[7:8], nhead)
    tgt = _layer_norm(tgt + ca, vec[11:12], vec[12:13])

    # --- feed-forward MLP (linear -> ReLU -> linear), 2-D matmuls ------------
    B, Lt, D = tgt.shape
    h = jnp.dot(tgt.reshape(B * Lt, D), ff_w1_ref[...],
                preferred_element_type=jnp.float32) + ff_b1_ref[...]
    h = jnp.maximum(h, 0.0)
    y = jnp.dot(h, ff_w2_ref[...],
                preferred_element_type=jnp.float32) + vec[8:9]
    tgt = _layer_norm(tgt + y.reshape(B, Lt, D), vec[13:14], vec[14:15])

    tgt_acc[...] = tgt

    # --- the three stream-specific final LayerNorms, folded into per-row
    #     gamma/beta (rows [0, n_pose) -> norm0, next -> norm1, last -> norm2).
    #     Output is written exactly once, on the last layer.
    @pl.when(layer == pl.num_programs(1) - 1)
    def _():
        fln = fln_ref[...].astype(jnp.float32)       # (2, Lt, D)
        o_ref[...] = _layer_norm(tgt, fln[0], fln[1]).astype(o_ref.dtype)


# ---------------------------------------------------------------------------
# public wrapper (PyTorch seq-first (L, B, D) at the API edge)
# ---------------------------------------------------------------------------
def transformer_decoder(params, memory, pos, pose_query, shape_query, cam_query,
                        *, nhead):
    n_pose = pose_query.shape[0]
    n_shape = shape_query.shape[0]

    query_pos = jnp.concatenate([pose_query, shape_query, cam_query], axis=0)
    to_bf = lambda x: jnp.transpose(x, (1, 0, 2))
    qpos = to_bf(query_pos)                  # (B, Lt, D)
    mem = to_bf(memory)                      # (B, Lm, D) attention values
    memk = to_bf(memory + pos)               # (B, Lm, D) K-side input

    B, Lt, D = qpos.shape
    Lm = mem.shape[1]
    attn_w = params['attn_w']                # (L, 8, D, D)
    num_layers = attn_w.shape[0]
    F = params['ff_w1'].shape[-1]

    # Advisory cost estimate (lets XLA schedule the edge transposes sensibly).
    flops = int(2 * B * num_layers * (
        4 * Lt * D * D + 2 * Lt * Lt * D                 # self-attn
        + 2 * (Lt + Lm) * D * D + 2 * Lt * Lm * D        # cross-attn
        + 2 * Lt * D * F))                               # ffn
    transcendentals = int(B * num_layers * nhead * (Lt * Lt + Lt * Lm))
    weight_bytes = 4 * sum(int(params[k].size) for k in
                           ('attn_w', 'vec', 'ff_w1', 'ff_b1', 'ff_w2'))
    bytes_accessed = int(4 * (qpos.size + mem.size + memk.size + B * Lt * D
                              + params['final_ln'].size) + B * weight_bytes)

    in_specs = [
        pl.BlockSpec((1, Lt, D), lambda b, l: (b, 0, 0)),          # qpos
        pl.BlockSpec((1, Lm, D), lambda b, l: (b, 0, 0)),          # memory (V)
        pl.BlockSpec((1, Lm, D), lambda b, l: (b, 0, 0)),          # memory+pos (K)
        pl.BlockSpec((2, Lt, D), lambda b, l: (0, 0, 0)),          # final norms
        pl.BlockSpec((None, 8, D, D), lambda b, l: (l, 0, 0, 0)),  # attn weights
        pl.BlockSpec((None, 15, D), lambda b, l: (l, 0, 0)),       # biases + ln
        pl.BlockSpec((None, D, F), lambda b, l: (l, 0, 0)),        # ff_w1
        pl.BlockSpec((None, 1, F), lambda b, l: (l, 0, 0)),        # ff_b1
        pl.BlockSpec((None, F, D), lambda b, l: (l, 0, 0)),        # ff_w2
    ]

    out = pl.pallas_call(
        functools.partial(_decoder_stack_kernel, nhead=nhead),
        out_shape=jax.ShapeDtypeStruct((B, Lt, D), jnp.float32),
        grid=(B, num_layers),
        in_specs=in_specs,
        out_specs=pl.BlockSpec((1, Lt, D), lambda b, l: (b, 0, 0)),
        scratch_shapes=[pltpu.VMEM((1, Lt, D), jnp.float32)],
        compiler_params=pltpu.CompilerParams(
            dimension_semantics=("parallel", "arbitrary"),
            vmem_limit_bytes=32 * 1024 * 1024),
        cost_estimate=pl.CostEstimate(flops=flops,
                                      transcendentals=transcendentals,
                                      bytes_accessed=bytes_accessed),
    )(qpos, mem, memk, params['final_ln'],
      attn_w, params['vec'], params['ff_w1'], params['ff_b1'], params['ff_w2'])

    out = jnp.transpose(out, (1, 0, 2))      # back to seq-first (Lt, B, D)
    return (out[:n_pose], out[n_pose:n_pose + n_shape],
            out[n_pose + n_shape:])


# ---------------------------------------------------------------------------
# deterministic parameter init (packed slab layout the kernel expects)
# ---------------------------------------------------------------------------
def _init_linear(key, din, dout, scale=0.05):
    kw, kb = jax.random.split(key)
    return (scale * jax.random.normal(kw, (din, dout), jnp.float32),
            scale * jax.random.normal(kb, (dout,), jnp.float32))


def _init_layer(key, d, dff, nhead):
    ks = jax.random.split(key, 10)
    sa_wq, sa_bq = _init_linear(ks[0], d, d)
    sa_wk, sa_bk = _init_linear(ks[1], d, d)
    sa_wv, sa_bv = _init_linear(ks[2], d, d)
    sa_wo, sa_bo = _init_linear(ks[3], d, d)
    ca_wq, ca_bq = _init_linear(ks[4], d, d)
    ca_wk, ca_bk = _init_linear(ks[5], d, d)
    ca_wv, ca_bv = _init_linear(ks[6], d, d)
    ca_wo, ca_bo = _init_linear(ks[7], d, d)
    w1, b1 = _init_linear(ks[8], d, dff)
    w2, b2 = _init_linear(ks[9], dff, d)

    # 1/sqrt(dh) softmax scale folded into the Q projection at prep time.
    scale = float(d // nhead) ** -0.5

    attn_w = jnp.stack([sa_wq * scale, sa_wk, sa_wv, sa_wo,
                        ca_wq * scale, ca_wk, ca_wv, ca_wo], axis=0)  # (8,D,D)
    ones, zeros = jnp.ones((d,), jnp.float32), jnp.zeros((d,), jnp.float32)
    vec = jnp.stack([sa_bq * scale, sa_bk, sa_bv, sa_bo,
                     ca_bq * scale, ca_bk, ca_bv, ca_bo,
                     b2,
                     ones, zeros,      # norm1 gamma/beta
                     ones, zeros,      # norm2 gamma/beta
                     ones, zeros],     # norm3 gamma/beta
                    axis=0)            # (15, D)
    return {'attn_w': attn_w, 'vec': vec,
            'ff_w1': w1, 'ff_b1': b1.reshape(1, dff), 'ff_w2': w2}


def init_decoder(key, d, dff, num_layers, nhead, n_pose, n_shape, n_cam):
    keys = jax.random.split(key, num_layers)
    per_layer = [_init_layer(k, d, dff, nhead) for k in keys]
    params = jax.tree_util.tree_map(lambda *xs: jnp.stack(xs, axis=0),
                                    *per_layer)
    # three stream-specific final LayerNorms folded into per-row gamma/beta
    # over the fused (pose|shape|cam) target sequence.
    g = [jnp.ones((d,), jnp.float32)] * 3
    b = [jnp.zeros((d,), jnp.float32)] * 3
    rows_g = [g[0]] * n_pose + [g[1]] * n_shape + [g[2]] * n_cam
    rows_b = [b[0]] * n_pose + [b[1]] * n_shape + [b[2]] * n_cam
    params['final_ln'] = jnp.stack([jnp.stack(rows_g, axis=0),
                                    jnp.stack(rows_b, axis=0)], axis=0)
    return params


# ---------------------------------------------------------------------------
if __name__ == "__main__":
    D_MODEL = 32
    NHEAD = 4
    DIM_FF = 64
    NUM_LAYERS = 2
    BATCH = 2
    SEQ_MEM = 16
    NUM_POSE_QUERIES = 6

    root = jax.random.PRNGKey(0)
    k_param, k_mem, k_pos, k_pq, k_sq, k_cq = jax.random.split(root, 6)

    params = init_decoder(k_param, D_MODEL, DIM_FF, NUM_LAYERS, NHEAD,
                          NUM_POSE_QUERIES, 1, 1)

    # PyTorch seq-first layout (L, B, D)
    memory = jax.random.normal(k_mem, (SEQ_MEM, BATCH, D_MODEL), jnp.float32)
    pos = jax.random.normal(k_pos, (SEQ_MEM, BATCH, D_MODEL), jnp.float32)
    pose_query = jax.random.normal(k_pq, (NUM_POSE_QUERIES, BATCH, D_MODEL),
                                   jnp.float32)
    shape_query = jax.random.normal(k_sq, (1, BATCH, D_MODEL), jnp.float32)
    cam_query = jax.random.normal(k_cq, (1, BATCH, D_MODEL), jnp.float32)

    run = jax.jit(functools.partial(transformer_decoder, nhead=NHEAD))
    out_pose, out_shape, out_cam = run(params, memory, pos, pose_query,
                                       shape_query, cam_query)
    jax.block_until_ready((out_pose, out_shape, out_cam))

    assert out_pose.shape == (NUM_POSE_QUERIES, BATCH, D_MODEL)
    assert out_shape.shape == (1, BATCH, D_MODEL)
    assert out_cam.shape == (1, BATCH, D_MODEL)
    assert jnp.all(jnp.isfinite(out_pose))
    assert jnp.all(jnp.isfinite(out_shape))
    assert jnp.all(jnp.isfinite(out_cam))
    print("KERNEL_OK")
</pallas_src>

<mosaic_0001>
module attributes {stable_mosaic.version = 11 : i64} {
  func.func @_decoder_stack_kernel(%arg0: i32, %arg1: i32, %arg2: memref<1x8x32xf32, #tpu.memory_space<vmem>>, %arg3: memref<1x16x32xf32, #tpu.memory_space<vmem>>, %arg4: memref<1x16x32xf32, #tpu.memory_space<vmem>>, %arg5: memref<2x8x32xf32, #tpu.memory_space<vmem>>, %arg6: memref<1x8x32x32xf32, #tpu.memory_space<vmem>>, %arg7: memref<1x15x32xf32, #tpu.memory_space<vmem>>, %arg8: memref<1x32x64xf32, #tpu.memory_space<vmem>>, %arg9: memref<1x1x64xf32, #tpu.memory_space<vmem>>, %arg10: memref<1x64x32xf32, #tpu.memory_space<vmem>>, %arg11: memref<1x8x32xf32, #tpu.memory_space<vmem>>, %arg12: memref<1x8x32xf32, #tpu.memory_space<vmem>>) attributes {dimension_semantics = [#tpu.dimension_semantics<parallel>, #tpu.dimension_semantics<arbitrary>], iteration_bounds = array<i64: 2, 2>, scalar_prefetch = 0 : i64, scratch_operands = 1 : i64, tpu.core_type = #tpu.core_type<tc>, window_params = [{transform_indices = @transform_0, window_bounds = array<i64: 1, 8, 32>}, {transform_indices = @transform_1, window_bounds = array<i64: 1, 16, 32>}, {transform_indices = @transform_2, window_bounds = array<i64: 1, 16, 32>}, {pipeline_mode = #tpu.pipeline_mode<synchronous>, transform_indices = @transform_3, window_bounds = array<i64: 2, 8, 32>}, {transform_indices = @transform_4, window_bounds = array<i64: 1, 8, 32, 32>}, {transform_indices = @transform_5, window_bounds = array<i64: 1, 15, 32>}, {transform_indices = @transform_6, window_bounds = array<i64: 1, 32, 64>}, {transform_indices = @transform_7, window_bounds = array<i64: 1, 1, 64>}, {transform_indices = @transform_8, window_bounds = array<i64: 1, 64, 32>}, {transform_indices = @transform_9, window_bounds = array<i64: 1, 8, 32>}]} {
    %c0_i32 = arith.constant 0 : i32
    %0 = arith.cmpi eq, %arg1, %c0_i32 : i32
    %1 = arith.extui %0 : i1 to i32
    %c0_i32_0 = arith.constant 0 : i32
    %2 = arith.cmpi ne, %1, %c0_i32_0 : i32
    scf.if %2 {
      %cst_86 = arith.constant 0.000000e+00 : f32
      %235 = vector.broadcast %cst_86 : f32 to vector<1x8x32xf32>
      %c0_87 = arith.constant 0 : index
      %c0_88 = arith.constant 0 : index
      %c0_89 = arith.constant 0 : index
      %236 = vector.load %arg12[%c0_87, %c0_88, %c0_89] : memref<1x8x32xf32, #tpu.memory_space<vmem>>, vector<1x8x32xf32>
      tpu.vector_store %arg12[%c0_87, %c0_88, %c0_89], %235 {strides = array<i32>} : memref<1x8x32xf32, #tpu.memory_space<vmem>>, vector<1x8x32xf32>,
    } else {
    }
    %c0 = arith.constant 0 : index
    %c0_1 = arith.constant 0 : index
    %c0_2 = arith.constant 0 : index
    %3 = vector.load %arg12[%c0, %c0_1, %c0_2] : memref<1x8x32xf32, #tpu.memory_space<vmem>>, vector<1x8x32xf32>
    %c0_3 = arith.constant 0 : index
    %c0_4 = arith.constant 0 : index
    %c0_5 = arith.constant 0 : index
    %4 = vector.load %arg2[%c0_3, %c0_4, %c0_5] : memref<1x8x32xf32, #tpu.memory_space<vmem>>, vector<1x8x32xf32>
    %c0_6 = arith.constant 0 : index
    %c0_7 = arith.constant 0 : index
    %c0_8 = arith.constant 0 : index
    %5 = vector.load %arg3[%c0_6, %c0_7, %c0_8] : memref<1x16x32xf32, #tpu.memory_space<vmem>>, vector<1x16x32xf32>
    %c0_9 = arith.constant 0 : index
    %c0_10 = arith.constant 0 : index
    %c0_11 = arith.constant 0 : index
    %6 = vector.load %arg4[%c0_9, %c0_10, %c0_11] : memref<1x16x32xf32, #tpu.memory_space<vmem>>, vector<1x16x32xf32>
    %c0_12 = arith.constant 0 : index
    %c0_13 = arith.constant 0 : index
    %c0_14 = arith.constant 0 : index
    %7 = vector.load %arg7[%c0_12, %c0_13, %c0_14] : memref<1x15x32xf32, #tpu.memory_space<vmem>>, vector<1x15x32xf32>
    %8 = vector.shape_cast %7 : vector<1x15x32xf32> to vector<15x32xf32>
    %9 = arith.addf %3, %4 : vector<1x8x32xf32>
    %c0_15 = arith.constant 0 : index
    %c0_16 = arith.constant 0 : index
    %c0_17 = arith.constant 0 : index
    %c0_18 = arith.constant 0 : index
    %10 = vector.load %arg6[%c0_15, %c0_16, %c0_17, %c0_18] : memref<1x8x32x32xf32, #tpu.memory_space<vmem>>, vector<1x1x32x32xf32>
    %11 = vector.shape_cast %10 : vector<1x1x32x32xf32> to vector<32x32xf32>
    %12 = vector.extract_strided_slice %8 {offsets = [0, 0], sizes = [1, 32], strides = [1, 1]} : vector<15x32xf32> to vector<1x32xf32>
    %c0_19 = arith.constant 0 : index
    %c1 = arith.constant 1 : index
    %c0_20 = arith.constant 0 : index
    %c0_21 = arith.constant 0 : index
    %13 = vector.load %arg6[%c0_19, %c1, %c0_20, %c0_21] : memref<1x8x32x32xf32, #tpu.memory_space<vmem>>, vector<1x1x32x32xf32>
    %14 = vector.shape_cast %13 : vector<1x1x32x32xf32> to vector<32x32xf32>
    %15 = vector.extract_strided_slice %8 {offsets = [1, 0], sizes = [1, 32], strides = [1, 1]} : vector<15x32xf32> to vector<1x32xf32>
    %c0_22 = arith.constant 0 : index
    %c2 = arith.constant 2 : index
    %c0_23 = arith.constant 0 : index
    %c0_24 = arith.constant 0 : index
    %16 = vector.load %arg6[%c0_22, %c2, %c0_23, %c0_24] : memref<1x8x32x32xf32, #tpu.memory_space<vmem>>, vector<1x1x32x32xf32>
    %17 = vector.shape_cast %16 : vector<1x1x32x32xf32> to vector<32x32xf32>
    %18 = vector.extract_strided_slice %8 {offsets = [2, 0], sizes = [1, 32], strides = [1, 1]} : vector<15x32xf32> to vector<1x32xf32>
    %c0_25 = arith.constant 0 : index
    %c3 = arith.constant 3 : index
    %c0_26 = arith.constant 0 : index
    %c0_27 = arith.constant 0 : index
    %19 = vector.load %arg6[%c0_25, %c3, %c0_26, %c0_27] : memref<1x8x32x32xf32, #tpu.memory_space<vmem>>, vector<1x1x32x32xf32>
    %20 = vector.shape_cast %19 : vector<1x1x32x32xf32> to vector<32x32xf32>
    %21 = vector.extract_strided_slice %8 {offsets = [3, 0], sizes = [1, 32], strides = [1, 1]} : vector<15x32xf32> to vector<1x32xf32>
    %22 = vector.shape_cast %9 : vector<1x8x32xf32> to vector<8x32xf32>
    %cst = arith.constant dense<0.000000e+00> : vector<8x32xf32>
    %23 = tpu.matmul %22, %11, %cst {dimension_numbers = #tpu.dot_dimension_numbers<[1], [0], [0], [1], [0, 0, 1, 1], [], []>} : vector<8x32xf32>, vector<32x32xf32>, vector<8x32xf32> -> vector<8x32xf32>
    %24 = vector.broadcast %12 : vector<1x32xf32> to vector<8x32xf32>
    %25 = arith.addf %23, %24 : vector<8x32xf32>
    %26 = vector.shape_cast %9 : vector<1x8x32xf32> to vector<8x32xf32>
    %cst_28 = arith.constant dense<0.000000e+00> : vector<8x32xf32>
    %27 = tpu.matmul %26, %14, %cst_28 {dimension_numbers = #tpu.dot_dimension_numbers<[1], [0], [0], [1], [0, 0, 1, 1], [], []>} : vector<8x32xf32>, vector<32x32xf32>, vector<8x32xf32> -> vector<8x32xf32>
    %28 = vector.broadcast %15 : vector<1x32xf32> to vector<8x32xf32>
    %29 = arith.addf %27, %28 : vector<8x32xf32>
    %30 = vector.shape_cast %3 : vector<1x8x32xf32> to vector<8x32xf32>
    %cst_29 = arith.constant dense<0.000000e+00> : vector<8x32xf32>
    %31 = tpu.matmul %30, %17, %cst_29 {dimension_numbers = #tpu.dot_dimension_numbers<[1], [0], [0], [1], [0, 0, 1, 1], [], []>} : vector<8x32xf32>, vector<32x32xf32>, vector<8x32xf32> -> vector<8x32xf32>
    %32 = vector.broadcast %18 : vector<1x32xf32> to vector<8x32xf32>
    %33 = arith.addf %31, %32 : vector<8x32xf32>
    %34 = vector.shape_cast %25 : vector<8x32xf32> to vector<1x8x32xf32>
    %35 = vector.shape_cast %29 : vector<8x32xf32> to vector<1x8x32xf32>
    %36 = vector.shape_cast %33 : vector<8x32xf32> to vector<1x8x32xf32>
    %37 = vector.extract_strided_slice %34 {offsets = [0, 0, 0], sizes = [1, 8, 8], strides = [1, 1, 1]} : vector<1x8x32xf32> to vector<1x8x8xf32>
    %38 = vector.extract_strided_slice %34 {offsets = [0, 0, 8], sizes = [1, 8, 8], strides = [1, 1, 1]} : vector<1x8x32xf32> to vector<1x8x8xf32>
    %39 = vector.extract_strided_slice %34 {offsets = [0, 0, 16], sizes = [1, 8, 8], strides = [1, 1, 1]} : vector<1x8x32xf32> to vector<1x8x8xf32>
    %40 = vector.extract_strided_slice %34 {offsets = [0, 0, 24], sizes = [1, 8, 8], strides = [1, 1, 1]} : vector<1x8x32xf32> to vector<1x8x8xf32>
    %41 = tpu.concatenate %37, %38, %39, %40 in 0 : vector<1x8x8xf32>, vector<1x8x8xf32>, vector<1x8x8xf32>, vector<1x8x8xf32> -> vector<4x8x8xf32>
    %42 = vector.extract_strided_slice %35 {offsets = [0, 0, 0], sizes = [1, 8, 8], strides = [1, 1, 1]} : vector<1x8x32xf32> to vector<1x8x8xf32>
    %43 = vector.extract_strided_slice %35 {offsets = [0, 0, 8], sizes = [1, 8, 8], strides = [1, 1, 1]} : vector<1x8x32xf32> to vector<1x8x8xf32>
    %44 = vector.extract_strided_slice %35 {offsets = [0, 0, 16], sizes = [1, 8, 8], strides = [1, 1, 1]} : vector<1x8x32xf32> to vector<1x8x8xf32>
    %45 = vector.extract_strided_slice %35 {offsets = [0, 0, 24], sizes = [1, 8, 8], strides = [1, 1, 1]} : vector<1x8x32xf32> to vector<1x8x8xf32>
    %46 = tpu.concatenate %42, %43, %44, %45 in 0 : vector<1x8x8xf32>, vector<1x8x8xf32>, vector<1x8x8xf32>, vector<1x8x8xf32> -> vector<4x8x8xf32>
    %47 = vector.extract_strided_slice %36 {offsets = [0, 0, 0], sizes = [1, 8, 8], strides = [1, 1, 1]} : vector<1x8x32xf32> to vector<1x8x8xf32>
    %48 = vector.extract_strided_slice %36 {offsets = [0, 0, 8], sizes = [1, 8, 8], strides = [1, 1, 1]} : vector<1x8x32xf32> to vector<1x8x8xf32>
    %49 = vector.extract_strided_slice %36 {offsets = [0, 0, 16], sizes = [1, 8, 8], strides = [1, 1, 1]} : vector<1x8x32xf32> to vector<1x8x8xf32>
    %50 = vector.extract_strided_slice %36 {offsets = [0, 0, 24], sizes = [1, 8, 8], strides = [1, 1, 1]} : vector<1x8x32xf32> to vector<1x8x8xf32>
    %51 = tpu.concatenate %47, %48, %49, %50 in 0 : vector<1x8x8xf32>, vector<1x8x8xf32>, vector<1x8x8xf32>, vector<1x8x8xf32> -> vector<4x8x8xf32>
    "tpu.trace_start"() <{level = 10 : i32, message = "bqd,bkd->bqk"}> : () -> ()
    %cst_30 = arith.constant dense<0.000000e+00> : vector<4x8x8xf32>
    %52 = tpu.matmul %41, %46, %cst_30 {dimension_numbers = #tpu.dot_dimension_numbers<[2], [2], [1], [1], [0, 0, 0, 1, 1, 1], [0], [0]>} : vector<4x8x8xf32>, vector<4x8x8xf32>, vector<4x8x8xf32> -> vector<4x8x8xf32>
    "tpu.trace_stop"() : () -> ()
    %cst_31 = arith.constant dense<0xFF800000> : vector<4x8xf32>
    %53 = vector.multi_reduction <maximumf>, %52, %cst_31 [2] : vector<4x8x8xf32> to vector<4x8xf32>
    %54 = vector.shape_cast %53 : vector<4x8xf32> to vector<4x8x1xf32>
    %55 = vector.broadcast %54 : vector<4x8x1xf32> to vector<4x8x8xf32>
    %56 = arith.subf %52, %55 : vector<4x8x8xf32>
    %57 = math.exp %56 : vector<4x8x8xf32>
    %cst_32 = arith.constant dense<0.000000e+00> : vector<4x8xf32>
    %58 = vector.multi_reduction <add>, %57, %cst_32 [2] : vector<4x8x8xf32> to vector<4x8xf32>
    %59 = vector.shape_cast %58 : vector<4x8xf32> to vector<4x8x1xf32>
    %60 = tpu.reciprocal %59 {approx = true} : vector<4x8x1xf32> -> vector<4x8x1xf32>
    %61 = vector.broadcast %60 : vector<4x8x1xf32> to vector<4x8x8xf32>
    %62 = arith.mulf %57, %61 : vector<4x8x8xf32>
    "tpu.trace_start"() <{level = 10 : i32, message = "bqk,bkd->bqd"}> : () -> ()
    %cst_33 = arith.constant dense<0.000000e+00> : vector<4x8x8xf32>
    %63 = tpu.matmul %62, %51, %cst_33 {dimension_numbers = #tpu.dot_dimension_numbers<[2], [1], [1], [2], [0, 0, 0, 1, 1, 2], [0], [0]>} : vector<4x8x8xf32>, vector<4x8x8xf32>, vector<4x8x8xf32> -> vector<4x8x8xf32>
    "tpu.trace_stop"() : () -> ()
    %64 = vector.extract_strided_slice %63 {offsets = [0, 0, 0], sizes = [1, 8, 8], strides = [1, 1, 1]} : vector<4x8x8xf32> to vector<1x8x8xf32>
    %65 = vector.extract_strided_slice %63 {offsets = [1, 0, 0], sizes = [1, 8, 8], strides = [1, 1, 1]} : vector<4x8x8xf32> to vector<1x8x8xf32>
    %66 = vector.extract_strided_slice %63 {offsets = [2, 0, 0], sizes = [1, 8, 8], strides = [1, 1, 1]} : vector<4x8x8xf32> to vector<1x8x8xf32>
    %67 = vector.extract_strided_slice %63 {offsets = [3, 0, 0], sizes = [1, 8, 8], strides = [1, 1, 1]} : vector<4x8x8xf32> to vector<1x8x8xf32>
    %68 = tpu.concatenate %64, %65, %66, %67 in 2 : vector<1x8x8xf32>, vector<1x8x8xf32>, vector<1x8x8xf32>, vector<1x8x8xf32> -> vector<1x8x32xf32>
    %69 = vector.shape_cast %68 : vector<1x8x32xf32> to vector<8x32xf32>
    %cst_34 = arith.constant dense<0.000000e+00> : vector<8x32xf32>
    %70 = tpu.matmul %69, %20, %cst_34 {dimension_numbers = #tpu.dot_dimension_numbers<[1], [0], [0], [1], [0, 0, 1, 1], [], []>} : vector<8x32xf32>, vector<32x32xf32>, vector<8x32xf32> -> vector<8x32xf32>
    %71 = vector.broadcast %21 : vector<1x32xf32> to vector<8x32xf32>
    %72 = arith.addf %70, %71 : vector<8x32xf32>
    %73 = vector.shape_cast %72 : vector<8x32xf32> to vector<1x8x32xf32>
    %74 = arith.addf %3, %73 : vector<1x8x32xf32>
    %75 = vector.extract_strided_slice %8 {offsets = [9, 0], sizes = [1, 32], strides = [1, 1]} : vector<15x32xf32> to vector<1x32xf32>
    %76 = vector.extract_strided_slice %8 {offsets = [10, 0], sizes = [1, 32], strides = [1, 1]} : vector<15x32xf32> to vector<1x32xf32>
    %cst_35 = arith.constant dense<0.000000e+00> : vector<1x8xf32>
    %77 = vector.multi_reduction <add>, %74, %cst_35 [2] : vector<1x8x32xf32> to vector<1x8xf32>
    %78 = vector.shape_cast %77 : vector<1x8xf32> to vector<1x8x1xf32>
    %cst_36 = arith.constant 3.200000e+01 : f32
    %79 = vector.broadcast %cst_36 : f32 to vector<1x8x1xf32>
    %80 = arith.divf %78, %79 : vector<1x8x1xf32>
    %81 = vector.broadcast %80 : vector<1x8x1xf32> to vector<1x8x32xf32>
    %82 = arith.subf %74, %81 : vector<1x8x32xf32>
    %83 = arith.mulf %82, %82 : vector<1x8x32xf32>
    %cst_37 = arith.constant dense<0.000000e+00> : vector<1x8xf32>
    %84 = vector.multi_reduction <add>, %83, %cst_37 [2] : vector<1x8x32xf32> to vector<1x8xf32>
    %85 = vector.shape_cast %84 : vector<1x8xf32> to vector<1x8x1xf32>
    %cst_38 = arith.constant 3.200000e+01 : f32
    %86 = vector.broadcast %cst_38 : f32 to vector<1x8x1xf32>
    %87 = arith.divf %85, %86 : vector<1x8x1xf32>
    %cst_39 = arith.constant 9.99999974E-6 : f32
    %88 = vector.broadcast %cst_39 : f32 to vector<1x8x1xf32>
    %89 = arith.addf %87, %88 : vector<1x8x1xf32>
    %90 = math.rsqrt %89 : vector<1x8x1xf32>
    %91 = vector.broadcast %90 : vector<1x8x1xf32> to vector<1x8x32xf32>
    %92 = arith.mulf %82, %91 : vector<1x8x32xf32>
    %93 = vector.shape_cast %75 : vector<1x32xf32> to vector<1x1x32xf32>
    %94 = vector.broadcast %93 : vector<1x1x32xf32> to vector<1x8x32xf32>
    %95 = arith.mulf %92, %94 : vector<1x8x32xf32>
    %96 = vector.shape_cast %76 : vector<1x32xf32> to vector<1x1x32xf32>
    %97 = vector.broadcast %96 : vector<1x1x32xf32> to vector<1x8x32xf32>
    %98 = arith.addf %95, %97 : vector<1x8x32xf32>
    %99 = arith.addf %98, %4 : vector<1x8x32xf32>
    %c0_40 = arith.constant 0 : index
    %c4 = arith.constant 4 : index
    %c0_41 = arith.constant 0 : index
    %c0_42 = arith.constant 0 : index
    %100 = vector.load %arg6[%c0_40, %c4, %c0_41, %c0_42] : memref<1x8x32x32xf32, #tpu.memory_space<vmem>>, vector<1x1x32x32xf32>
    %101 = vector.shape_cast %100 : vector<1x1x32x32xf32> to vector<32x32xf32>
    %102 = vector.extract_strided_slice %8 {offsets = [4, 0], sizes = [1, 32], strides = [1, 1]} : vector<15x32xf32> to vector<1x32xf32>
    %c0_43 = arith.constant 0 : index
    %c5 = arith.constant 5 : index
    %c0_44 = arith.constant 0 : index
    %c0_45 = arith.constant 0 : index
    %103 = vector.load %arg6[%c0_43, %c5, %c0_44, %c0_45] : memref<1x8x32x32xf32, #tpu.memory_space<vmem>>, vector<1x1x32x32xf32>
    %104 = vector.shape_cast %103 : vector<1x1x32x32xf32> to vector<32x32xf32>
    %105 = vector.extract_strided_slice %8 {offsets = [5, 0], sizes = [1, 32], strides = [1, 1]} : vector<15x32xf32> to vector<1x32xf32>
    %c0_46 = arith.constant 0 : index
    %c6 = arith.constant 6 : index
    %c0_47 = arith.constant 0 : index
    %c0_48 = arith.constant 0 : index
    %106 = vector.load %arg6[%c0_46, %c6, %c0_47, %c0_48] : memref<1x8x32x32xf32, #tpu.memory_space<vmem>>, vector<1x1x32x32xf32>
    %107 = vector.shape_cast %106 : vector<1x1x32x32xf32> to vector<32x32xf32>
    %108 = vector.extract_strided_slice %8 {offsets = [6, 0], sizes = [1, 32], strides = [1, 1]} : vector<15x32xf32> to vector<1x32xf32>
    %c0_49 = arith.constant 0 : index
    %c7 = arith.constant 7 : index
    %c0_50 = arith.constant 0 : index
    %c0_51 = arith.constant 0 : index
    %109 = vector.load %arg6[%c0_49, %c7, %c0_50, %c0_51] : memref<1x8x32x32xf32, #tpu.memory_space<vmem>>, vector<1x1x32x32xf32>
    %110 = vector.shape_cast %109 : vector<1x1x32x32xf32> to vector<32x32xf32>
    %111 = vector.extract_strided_slice %8 {offsets = [7, 0], sizes = [1, 32], strides = [1, 1]} : vector<15x32xf32> to vector<1x32xf32>
    %112 = vector.shape_cast %99 : vector<1x8x32xf32> to vector<8x32xf32>
    %cst_52 = arith.constant dense<0.000000e+00> : vector<8x32xf32>
    %113 = tpu.matmul %112, %101, %cst_52 {dimension_numbers = #tpu.dot_dimension_numbers<[1], [0], [0], [1], [0, 0, 1, 1], [], []>} : vector<8x32xf32>, vector<32x32xf32>, vector<8x32xf32> -> vector<8x32xf32>
    %114 = vector.broadcast %102 : vector<1x32xf32> to vector<8x32xf32>
    %115 = arith.addf %113, %114 : vector<8x32xf32>
    %116 = vector.shape_cast %6 : vector<1x16x32xf32> to vector<16x32xf32>
    %cst_53 = arith.constant dense<0.000000e+00> : vector<16x32xf32>
    %117 = tpu.matmul %116, %104, %cst_53 {dimension_numbers = #tpu.dot_dimension_numbers<[1], [0], [0], [1], [0, 0, 1, 1], [], []>} : vector<16x32xf32>, vector<32x32xf32>, vector<16x32xf32> -> vector<16x32xf32>
    %118 = vector.broadcast %105 : vector<1x32xf32> to vector<16x32xf32>
    %119 = arith.addf %117, %118 : vector<16x32xf32>
    %120 = vector.shape_cast %5 : vector<1x16x32xf32> to vector<16x32xf32>
    %cst_54 = arith.constant dense<0.000000e+00> : vector<16x32xf32>
    %121 = tpu.matmul %120, %107, %cst_54 {dimension_numbers = #tpu.dot_dimension_numbers<[1], [0], [0], [1], [0, 0, 1, 1], [], []>} : vector<16x32xf32>, vector<32x32xf32>, vector<16x32xf32> -> vector<16x32xf32>
    %122 = vector.broadcast %108 : vector<1x32xf32> to vector<16x32xf32>
    %123 = arith.addf %121, %122 : vector<16x32xf32>
    %124 = vector.shape_cast %115 : vector<8x32xf32> to vector<1x8x32xf32>
    %125 = vector.shape_cast %119 : vector<16x32xf32> to vector<1x16x32xf32>
    %126 = vector.shape_cast %123 : vector<16x32xf32> to vector<1x16x32xf32>
    %127 = vector.extract_strided_slice %124 {offsets = [0, 0, 0], sizes = [1, 8, 8], strides = [1, 1, 1]} : vector<1x8x32xf32> to vector<1x8x8xf32>
    %128 = vector.extract_strided_slice %124 {offsets = [0, 0, 8], sizes = [1, 8, 8], strides = [1, 1, 1]} : vector<1x8x32xf32> to vector<1x8x8xf32>
    %129 = vector.extract_strided_slice %124 {offsets = [0, 0, 16], sizes = [1, 8, 8], strides = [1, 1, 1]} : vector<1x8x32xf32> to vector<1x8x8xf32>
    %130 = vector.extract_strided_slice %124 {offsets = [0, 0, 24], sizes = [1, 8, 8], strides = [1, 1, 1]} : vector<1x8x32xf32> to vector<1x8x8xf32>
    %131 = tpu.concatenate %127, %128, %129, %130 in 0 : vector<1x8x8xf32>, vector<1x8x8xf32>, vector<1x8x8xf32>, vector<1x8x8xf32> -> vector<4x8x8xf32>
    %132 = vector.extract_strided_slice %125 {offsets = [0, 0, 0], sizes = [1, 16, 8], strides = [1, 1, 1]} : vector<1x16x32xf32> to vector<1x16x8xf32>
    %133 = vector.extract_strided_slice %125 {offsets = [0, 0, 8], sizes = [1, 16, 8], strides = [1, 1, 1]} : vector<1x16x32xf32> to vector<1x16x8xf32>
    %134 = vector.extract_strided_slice %125 {offsets = [0, 0, 16], sizes = [1, 16, 8], strides = [1, 1, 1]} : vector<1x16x32xf32> to vector<1x16x8xf32>
    %135 = vector.extract_strided_slice %125 {offsets = [0, 0, 24], sizes = [1, 16, 8], strides = [1, 1, 1]} : vector<1x16x32xf32> to vector<1x16x8xf32>
    %136 = tpu.concatenate %132, %133, %134, %135 in 0 : vector<1x16x8xf32>, vector<1x16x8xf32>, vector<1x16x8xf32>, vector<1x16x8xf32> -> vector<4x16x8xf32>
    %137 = vector.extract_strided_slice %126 {offsets = [0, 0, 0], sizes = [1, 16, 8], strides = [1, 1, 1]} : vector<1x16x32xf32> to vector<1x16x8xf32>
    %138 = vector.extract_strided_slice %126 {offsets = [0, 0, 8], sizes = [1, 16, 8], strides = [1, 1, 1]} : vector<1x16x32xf32> to vector<1x16x8xf32>
    %139 = vector.extract_strided_slice %126 {offsets = [0, 0, 16], sizes = [1, 16, 8], strides = [1, 1, 1]} : vector<1x16x32xf32> to vector<1x16x8xf32>
    %140 = vector.extract_strided_slice %126 {offsets = [0, 0, 24], sizes = [1, 16, 8], strides = [1, 1, 1]} : vector<1x16x32xf32> to vector<1x16x8xf32>
    %141 = tpu.concatenate %137, %138, %139, %140 in 0 : vector<1x16x8xf32>, vector<1x16x8xf32>, vector<1x16x8xf32>, vector<1x16x8xf32> -> vector<4x16x8xf32>
    "tpu.trace_start"() <{level = 10 : i32, message = "bqd,bkd->bqk"}> : () -> ()
    %cst_55 = arith.constant dense<0.000000e+00> : vector<4x8x16xf32>
    %142 = tpu.matmul %131, %136, %cst_55 {dimension_numbers = #tpu.dot_dimension_numbers<[2], [2], [1], [1], [0, 0, 0, 1, 1, 1], [0], [0]>} : vector<4x8x8xf32>, vector<4x16x8xf32>, vector<4x8x16xf32> -> vector<4x8x16xf32>
    "tpu.trace_stop"() : () -> ()
    %cst_56 = arith.constant dense<0xFF800000> : vector<4x8xf32>
    %143 = vector.multi_reduction <maximumf>, %142, %cst_56 [2] : vector<4x8x16xf32> to vector<4x8xf32>
    %144 = vector.shape_cast %143 : vector<4x8xf32> to vector<4x8x1xf32>
    %145 = vector.broadcast %144 : vector<4x8x1xf32> to vector<4x8x16xf32>
    %146 = arith.subf %142, %145 : vector<4x8x16xf32>
    %147 = math.exp %146 : vector<4x8x16xf32>
    %cst_57 = arith.constant dense<0.000000e+00> : vector<4x8xf32>
    %148 = vector.multi_reduction <add>, %147, %cst_57 [2] : vector<4x8x16xf32> to vector<4x8xf32>
    %149 = vector.shape_cast %148 : vector<4x8xf32> to vector<4x8x1xf32>
    %150 = tpu.reciprocal %149 {approx = true} : vector<4x8x1xf32> -> vector<4x8x1xf32>
    %151 = vector.broadcast %150 : vector<4x8x1xf32> to vector<4x8x16xf32>
    %152 = arith.mulf %147, %151 : vector<4x8x16xf32>
    "tpu.trace_start"() <{level = 10 : i32, message = "bqk,bkd->bqd"}> : () -> ()
    %cst_58 = arith.constant dense<0.000000e+00> : vector<4x8x8xf32>
    %153 = tpu.matmul %152, %141, %cst_58 {dimension_numbers = #tpu.dot_dimension_numbers<[2], [1], [1], [2], [0, 0, 0, 1, 1, 2], [0], [0]>} : vector<4x8x16xf32>, vector<4x16x8xf32>, vector<4x8x8xf32> -> vector<4x8x8xf32>
    "tpu.trace_stop"() : () -> ()
    %154 = vector.extract_strided_slice %153 {offsets = [0, 0, 0], sizes = [1, 8, 8], strides = [1, 1, 1]} : vector<4x8x8xf32> to vector<1x8x8xf32>
    %155 = vector.extract_strided_slice %153 {offsets = [1, 0, 0], sizes = [1, 8, 8], strides = [1, 1, 1]} : vector<4x8x8xf32> to vector<1x8x8xf32>
    %156 = vector.extract_strided_slice %153 {offsets = [2, 0, 0], sizes = [1, 8, 8], strides = [1, 1, 1]} : vector<4x8x8xf32> to vector<1x8x8xf32>
    %157 = vector.extract_strided_slice %153 {offsets = [3, 0, 0], sizes = [1, 8, 8], strides = [1, 1, 1]} : vector<4x8x8xf32> to vector<1x8x8xf32>
    %158 = tpu.concatenate %154, %155, %156, %157 in 2 : vector<1x8x8xf32>, vector<1x8x8xf32>, vector<1x8x8xf32>, vector<1x8x8xf32> -> vector<1x8x32xf32>
    %159 = vector.shape_cast %158 : vector<1x8x32xf32> to vector<8x32xf32>
    %cst_59 = arith.constant dense<0.000000e+00> : vector<8x32xf32>
    %160 = tpu.matmul %159, %110, %cst_59 {dimension_numbers = #tpu.dot_dimension_numbers<[1], [0], [0], [1], [0, 0, 1, 1], [], []>} : vector<8x32xf32>, vector<32x32xf32>, vector<8x32xf32> -> vector<8x32xf32>
    %161 = vector.broadcast %111 : vector<1x32xf32> to vector<8x32xf32>
    %162 = arith.addf %160, %161 : vector<8x32xf32>
    %163 = vector.shape_cast %162 : vector<8x32xf32> to vector<1x8x32xf32>
    %164 = arith.addf %98, %163 : vector<1x8x32xf32>
    %165 = vector.extract_strided_slice %8 {offsets = [11, 0], sizes = [1, 32], strides = [1, 1]} : vector<15x32xf32> to vector<1x32xf32>
    %166 = vector.extract_strided_slice %8 {offsets = [12, 0], sizes = [1, 32], strides = [1, 1]} : vector<15x32xf32> to vector<1x32xf32>
    %cst_60 = arith.constant dense<0.000000e+00> : vector<1x8xf32>
    %167 = vector.multi_reduction <add>, %164, %cst_60 [2] : vector<1x8x32xf32> to vector<1x8xf32>
    %168 = vector.shape_cast %167 : vector<1x8xf32> to vector<1x8x1xf32>
    %cst_61 = arith.constant 3.200000e+01 : f32
    %169 = vector.broadcast %cst_61 : f32 to vector<1x8x1xf32>
    %170 = arith.divf %168, %169 : vector<1x8x1xf32>
    %171 = vector.broadcast %170 : vector<1x8x1xf32> to vector<1x8x32xf32>
    %172 = arith.subf %164, %171 : vector<1x8x32xf32>
    %173 = arith.mulf %172, %172 : vector<1x8x32xf32>
    %cst_62 = arith.constant dense<0.000000e+00> : vector<1x8xf32>
    %174 = vector.multi_reduction <add>, %173, %cst_62 [2] : vector<1x8x32xf32> to vector<1x8xf32>
    %175 = vector.shape_cast %174 : vector<1x8xf32> to vector<1x8x1xf32>
    %cst_63 = arith.constant 3.200000e+01 : f32
    %176 = vector.broadcast %cst_63 : f32 to vector<1x8x1xf32>
    %177 = arith.divf %175, %176 : vector<1x8x1xf32>
    %cst_64 = arith.constant 9.99999974E-6 : f32
    %178 = vector.broadcast %cst_64 : f32 to vector<1x8x1xf32>
    %179 = arith.addf %177, %178 : vector<1x8x1xf32>
    %180 = math.rsqrt %179 : vector<1x8x1xf32>
    %181 = vector.broadcast %180 : vector<1x8x1xf32> to vector<1x8x32xf32>
    %182 = arith.mulf %172, %181 : vector<1x8x32xf32>
    %183 = vector.shape_cast %165 : vector<1x32xf32> to vector<1x1x32xf32>
    %184 = vector.broadcast %183 : vector<1x1x32xf32> to vector<1x8x32xf32>
    %185 = arith.mulf %182, %184 : vector<1x8x32xf32>
    %186 = vector.shape_cast %166 : vector<1x32xf32> to vector<1x1x32xf32>
    %187 = vector.broadcast %186 : vector<1x1x32xf32> to vector<1x8x32xf32>
    %188 = arith.addf %185, %187 : vector<1x8x32xf32>
    %189 = vector.shape_cast %188 : vector<1x8x32xf32> to vector<8x32xf32>
    %c0_65 = arith.constant 0 : index
    %c0_66 = arith.constant 0 : index
    %c0_67 = arith.constant 0 : index
    %190 = vector.load %arg8[%c0_65, %c0_66, %c0_67] : memref<1x32x64xf32, #tpu.memory_space<vmem>>, vector<1x32x64xf32>
    %191 = vector.shape_cast %190 : vector<1x32x64xf32> to vector<32x64xf32>
    %cst_68 = arith.constant dense<0.000000e+00> : vector<8x64xf32>
    %192 = tpu.matmul %189, %191, %cst_68 {dimension_numbers = #tpu.dot_dimension_numbers<[1], [0], [0], [1], [0, 0, 1, 1], [], []>} : vector<8x32xf32>, vector<32x64xf32>, vector<8x64xf32> -> vector<8x64xf32>
    %c0_69 = arith.constant 0 : index
    %c0_70 = arith.constant 0 : index
    %c0_71 = arith.constant 0 : index
    %193 = vector.load %arg9[%c0_69, %c0_70, %c0_71] : memref<1x1x64xf32, #tpu.memory_space<vmem>>, vector<1x1x64xf32>
    %194 = vector.shape_cast %193 : vector<1x1x64xf32> to vector<1x64xf32>
    %195 = vector.broadcast %194 : vector<1x64xf32> to vector<8x64xf32>
    %196 = arith.addf %192, %195 : vector<8x64xf32>
    %cst_72 = arith.constant 0.000000e+00 : f32
    %197 = vector.broadcast %cst_72 : f32 to vector<8x64xf32>
    %198 = arith.maximumf %196, %197 : vector<8x64xf32>
    %c0_73 = arith.constant 0 : index
    %c0_74 = arith.constant 0 : index
    %c0_75 = arith.constant 0 : index
    %199 = vector.load %arg10[%c0_73, %c0_74, %c0_75] : memref<1x64x32xf32, #tpu.memory_space<vmem>>, vector<1x64x32xf32>
    %200 = vector.shape_cast %199 : vector<1x64x32xf32> to vector<64x32xf32>
    %cst_76 = arith.constant dense<0.000000e+00> : vector<8x32xf32>
    %201 = tpu.matmul %198, %200, %cst_76 {dimension_numbers = #tpu.dot_dimension_numbers<[1], [0], [0], [1], [0, 0, 1, 1], [], []>} : vector<8x64xf32>, vector<64x32xf32>, vector<8x32xf32> -> vector<8x32xf32>
    %202 = vector.extract_strided_slice %8 {offsets = [8, 0], sizes = [1, 32], strides = [1, 1]} : vector<15x32xf32> to vector<1x32xf32>
    %203 = vector.broadcast %202 : vector<1x32xf32> to vector<8x32xf32>
    %204 = arith.addf %201, %203 : vector<8x32xf32>
    %205 = vector.shape_cast %204 : vector<8x32xf32> to vector<1x8x32xf32>
    %206 = arith.addf %188, %205 : vector<1x8x32xf32>
    %207 = vector.extract_strided_slice %8 {offsets = [13, 0], sizes = [1, 32], strides = [1, 1]} : vector<15x32xf32> to vector<1x32xf32>
    %208 = vector.extract_strided_slice %8 {offsets = [14, 0], sizes = [1, 32], strides = [1, 1]} : vector<15x32xf32> to vector<1x32xf32>
    %cst_77 = arith.constant dense<0.000000e+00> : vector<1x8xf32>
    %209 = vector.multi_reduction <add>, %206, %cst_77 [2] : vector<1x8x32xf32> to vector<1x8xf32>
    %210 = vector.shape_cast %209 : vector<1x8xf32> to vector<1x8x1xf32>
    %cst_78 = arith.constant 3.200000e+01 : f32
    %211 = vector.broadcast %cst_78 : f32 to vector<1x8x1xf32>
    %212 = arith.divf %210, %211 : vector<1x8x1xf32>
    %213 = vector.broadcast %212 : vector<1x8x1xf32> to vector<1x8x32xf32>
    %214 = arith.subf %206, %213 : vector<1x8x32xf32>
    %215 = arith.mulf %214, %214 : vector<1x8x32xf32>
    %cst_79 = arith.constant dense<0.000000e+00> : vector<1x8xf32>
    %216 = vector.multi_reduction <add>, %215, %cst_79 [2] : vector<1x8x32xf32> to vector<1x8xf32>
    %217 = vector.shape_cast %216 : vector<1x8xf32> to vector<1x8x1xf32>
    %cst_80 = arith.constant 3.200000e+01 : f32
    %218 = vector.broadcast %cst_80 : f32 to vector<1x8x1xf32>
    %219 = arith.divf %217, %218 : vector<1x8x1xf32>
    %cst_81 = arith.constant 9.99999974E-6 : f32
    %220 = vector.broadcast %cst_81 : f32 to vector<1x8x1xf32>
    %221 = arith.addf %219, %220 : vector<1x8x1xf32>
    %222 = math.rsqrt %221 : vector<1x8x1xf32>
    %223 = vector.broadcast %222 : vector<1x8x1xf32> to vector<1x8x32xf32>
    %224 = arith.mulf %214, %223 : vector<1x8x32xf32>
    %225 = vector.shape_cast %207 : vector<1x32xf32> to vector<1x1x32xf32>
    %226 = vector.broadcast %225 : vector<1x1x32xf32> to vector<1x8x32xf32>
    %227 = arith.mulf %224, %226 : vector<1x8x32xf32>
    %228 = vector.shape_cast %208 : vector<1x32xf32> to vector<1x1x32xf32>
    %229 = vector.broadcast %228 : vector<1x1x32xf32> to vector<1x8x32xf32>
    %230 = arith.addf %227, %229 : vector<1x8x32xf32>
    %c0_82 = arith.constant 0 : index
    %c0_83 = arith.constant 0 : index
    %c0_84 = arith.constant 0 : index
    %231 = vector.load %arg12[%c0_82, %c0_83, %c0_84] : memref<1x8x32xf32, #tpu.memory_space<vmem>>, vector<1x8x32xf32>
    tpu.vector_store %arg12[%c0_82, %c0_83, %c0_84], %230 {strides = array<i32>} : memref<1x8x32xf32, #tpu.memory_space<vmem>>, vector<1x8x32xf32>,
    %c1_i32 = arith.constant 1 : i32
    %232 = arith.cmpi eq, %arg1, %c1_i32 : i32
    %233 = arith.extui %232 : i1 to i32
    %c0_i32_85 = arith.constant 0 : i32
    %234 = arith.cmpi ne, %233, %c0_i32_85 : i32
    scf.if %234 {
      %c0_86 = arith.constant 0 : index
      %c0_87 = arith.constant 0 : index
      %c0_88 = arith.constant 0 : index
      %235 = vector.load %arg5[%c0_86, %c0_87, %c0_88] : memref<2x8x32xf32, #tpu.memory_space<vmem>>, vector<2x8x32xf32>
      %236 = vector.extract_strided_slice %235 {offsets = [0, 0, 0], sizes = [1, 8, 32], strides = [1, 1, 1]} : vector<2x8x32xf32> to vector<1x8x32xf32>
      %237 = vector.shape_cast %236 : vector<1x8x32xf32> to vector<8x32xf32>
      %238 = vector.extract_strided_slice %235 {offsets = [1, 0, 0], sizes = [1, 8, 32], strides = [1, 1, 1]} : vector<2x8x32xf32> to vector<1x8x32xf32>
      %239 = vector.shape_cast %238 : vector<1x8x32xf32> to vector<8x32xf32>
      %cst_89 = arith.constant dense<0.000000e+00> : vector<1x8xf32>
      %240 = vector.multi_reduction <add>, %230, %cst_89 [2] : vector<1x8x32xf32> to vector<1x8xf32>
      %241 = vector.shape_cast %240 : vector<1x8xf32> to vector<1x8x1xf32>
      %cst_90 = arith.constant 3.200000e+01 : f32
      %242 = vector.broadcast %cst_90 : f32 to vector<1x8x1xf32>
      %243 = arith.divf %241, %242 : vector<1x8x1xf32>
      %244 = vector.broadcast %243 : vector<1x8x1xf32> to vector<1x8x32xf32>
      %245 = arith.subf %230, %244 : vector<1x8x32xf32>
      %246 = arith.mulf %245, %245 : vector<1x8x32xf32>
      %cst_91 = arith.constant dense<0.000000e+00> : vector<1x8xf32>
      %247 = vector.multi_reduction <add>, %246, %cst_91 [2] : vector<1x8x32xf32> to vector<1x8xf32>
      %248 = vector.shape_cast %247 : vector<1x8xf32> to vector<1x8x1xf32>
      %cst_92 = arith.constant 3.200000e+01 : f32
      %249 = vector.broadcast %cst_92 : f32 to vector<1x8x1xf32>
      %250 = arith.divf %248, %249 : vector<1x8x1xf32>
      %cst_93 = arith.constant 9.99999974E-6 : f32
      %251 = vector.broadcast %cst_93 : f32 to vector<1x8x1xf32>
      %252 = arith.addf %250, %251 : vector<1x8x1xf32>
      %253 = math.rsqrt %252 : vector<1x8x1xf32>
      %254 = vector.broadcast %253 : vector<1x8x1xf32> to vector<1x8x32xf32>
      %255 = arith.mulf %245, %254 : vector<1x8x32xf32>
      %256 = vector.shape_cast %237 : vector<8x32xf32> to vector<1x8x32xf32>
      %257 = arith.mulf %255, %256 : vector<1x8x32xf32>
      %258 = vector.shape_cast %239 : vector<8x32xf32> to vector<1x8x32xf32>
      %259 = arith.addf %257, %258 : vector<1x8x32xf32>
      %c0_94 = arith.constant 0 : index
      %c0_95 = arith.constant 0 : index
      %c0_96 = arith.constant 0 : index
      %260 = vector.load %arg11[%c0_94, %c0_95, %c0_96] : memref<1x8x32xf32, #tpu.memory_space<vmem>>, vector<1x8x32xf32>
      tpu.vector_store %arg11[%c0_94, %c0_95, %c0_96], %259 {strides = array<i32>} : memref<1x8x32xf32, #tpu.memory_space<vmem>>, vector<1x8x32xf32>,
    } else {
    }
    return
  }
  func.func @transform_0(%arg0: i32, %arg1: i32) -> (i32, i32, i32) {
    %c0_i32 = arith.constant 0 : i32
    %c0_i32_0 = arith.constant 0 : i32
    %c0_i32_1 = arith.constant 0 : i32
    return %arg0, %c0_i32, %c0_i32_0 : i32, i32, i32
  }
  func.func @transform_1(%arg0: i32, %arg1: i32) -> (i32, i32, i32) {
    %c0_i32 = arith.constant 0 : i32
    %c0_i32_0 = arith.constant 0 : i32
    %c0_i32_1 = arith.constant 0 : i32
    return %arg0, %c0_i32, %c0_i32_0 : i32, i32, i32
  }
  func.func @transform_2(%arg0: i32, %arg1: i32) -> (i32, i32, i32) {
    %c0_i32 = arith.constant 0 : i32
    %c0_i32_0 = arith.constant 0 : i32
    %c0_i32_1 = arith.constant 0 : i32
    return %arg0, %c0_i32, %c0_i32_0 : i32, i32, i32
  }
  func.func @transform_3(%arg0: i32, %arg1: i32) -> (i32, i32, i32) {
    %c0_i32 = arith.constant 0 : i32
    %c0_i32_0 = arith.constant 0 : i32
    %c0_i32_1 = arith.constant 0 : i32
    %c0_i32_2 = arith.constant 0 : i32
    return %c0_i32, %c0_i32_0, %c0_i32_1 : i32, i32, i32
  }
  func.func @transform_4(%arg0: i32, %arg1: i32) -> (i32, i32, i32, i32) {
    %c0_i32 = arith.constant 0 : i32
    %c0_i32_0 = arith.constant 0 : i32
    %c0_i32_1 = arith.constant 0 : i32
    %c0_i32_2 = arith.constant 0 : i32
    return %arg1, %c0_i32, %c0_i32_0, %c0_i32_1 : i32, i32, i32, i32
  }
  func.func @transform_5(%arg0: i32, %arg1: i32) -> (i32, i32, i32) {
    %c0_i32 = arith.constant 0 : i32
    %c0_i32_0 = arith.constant 0 : i32
    %c0_i32_1 = arith.constant 0 : i32
    return %arg1, %c0_i32, %c0_i32_0 : i32, i32, i32
  }
  func.func @transform_6(%arg0: i32, %arg1: i32) -> (i32, i32, i32) {
    %c0_i32 = arith.constant 0 : i32
    %c0_i32_0 = arith.constant 0 : i32
    %c0_i32_1 = arith.constant 0 : i32
    return %arg1, %c0_i32, %c0_i32_0 : i32, i32, i32
  }
  func.func @transform_7(%arg0: i32, %arg1: i32) -> (i32, i32, i32) {
    %c0_i32 = arith.constant 0 : i32
    %c0_i32_0 = arith.constant 0 : i32
    %c0_i32_1 = arith.constant 0 : i32
    return %arg1, %c0_i32, %c0_i32_0 : i32, i32, i32
  }
  func.func @transform_8(%arg0: i32, %arg1: i32) -> (i32, i32, i32) {
    %c0_i32 = arith.constant 0 : i32
    %c0_i32_0 = arith.constant 0 : i32
    %c0_i32_1 = arith.constant 0 : i32
    return %arg1, %c0_i32, %c0_i32_0 : i32, i32, i32
  }
  func.func @transform_9(%arg0: i32, %arg1: i32) -> (i32, i32, i32) {
    %c0_i32 = arith.constant 0 : i32
    %c0_i32_0 = arith.constant 0 : i32
    %c0_i32_1 = arith.constant 0 : i32
    return %arg0, %c0_i32, %c0_i32_0 : i32, i32, i32
  }
}

</mosaic_0001>

<llo_original>
// kernel: transformer_decoder.1
$region0: #{transformer_decoder.1}
  #allocation0 [shape = 'u32[]', space=smem, size = 0x4, offset = 0x4, fixed_abs, tag = 'smem constant byte address 0x4 - core index']
  #allocation1 [shape = 'u32[144,128]{1,0:T(1,128)}', space=vmem, size = 0x12000, scoped, tag = 'internal scratch']
  #allocation2 [shape = 'f32[1,8,32]{2,1,0:T(8,128)}', space=vmem, size = 0x1000, scoped, tag = 'scratch operand']
  %s0 = inlined_call_operand.vmem [shape: f32[2,8,32], index: 0, kind: input, shape index: {}]
  %s1 = inlined_call_operand.vmem [shape: f32[2,16,32], index: 1, kind: input, shape index: {}]
  %s2 = inlined_call_operand.vmem [shape: f32[2,16,32], index: 2, kind: input, shape index: {}]
  %s3 = inlined_call_operand.vmem [shape: f32[2,8,32], index: 3, kind: input, shape index: {}]
  %s4 = inlined_call_operand.hbm [shape: f32[2,8,32,32], index: 4, kind: input, shape index: {}]
  %s5 = inlined_call_operand.vmem [shape: f32[2,15,32], index: 5, kind: input, shape index: {}]
  %s6 = inlined_call_operand.vmem [shape: f32[2,32,64], index: 6, kind: input, shape index: {}]
  %s7 = inlined_call_operand.vmem [shape: f32[2,1,64], index: 7, kind: input, shape index: {}]
  %s8 = inlined_call_operand.vmem [shape: f32[2,64,32], index: 8, kind: input, shape index: {}]
  %s9 = inlined_call_operand.vmem [shape: f32[2,8,32], index: 9, kind: output, shape index: {}]
  %s10 = sld [smem:[#allocation0]]
  $region81: #{transformer_decoder.1} parent=0
    _
  %s12 = ssub.s32 1, %s10
  %s13 = scalar_select 0, %s12, %s10
  $region1: #{transformer_decoder.1} parent=0
    #allocation3 [shape = 'u8[262144]{0}', space=vmem, size = 0x40000, scoped, tag = 'input window, operand 4']
    #allocation4 [shape = 's32[2]{0}', space=sflag, size = 0x8, scoped, tag = 'scoped memory for transformer_decoder.1']
    %14 = vsyncpa [#allocation4], 0
    %s15 = scalar_lea.sflag [#allocation4], 1
    %16 = vsyncpa %s15, 0
    loop: start=0, step=1, limit=6
    $region2: #{transformer_decoder.1} parent=1 // loop_pre_header
      _
    $region3: #{transformer_decoder.1} parent=1 // loop_header
      %s18 = sphi 0, %s22
      %p19 = scmp.ge.s32.totalorder %s18, 6
      %s25 = sphi 0, %s37
      %s26 = sphi 0, %s33
      %s27 = sphi 0, %s25
      %s28 = sphi 0, %s26
      %s29 = sphi 0, %s27
      %s30 = sphi 0, %s28
      %s40 = sphi 0, %s42
      %s43 = sphi 0, %s40
      %s44 = sphi 0, %s43
      %s60 = sphi 0, %s44
      %s66 = sphi 0, %s68
      %s69 = sphi 0, %s66
      %s70 = sphi 0, %s69
      %s86 = sphi 0, %s70
      %s92 = sphi 0, %s94
      %s95 = sphi 0, %s92
      %s96 = sphi 0, %s95
      %s112 = sphi 0, %s96
      %s116 = sphi 0, %s116
      %s118 = sphi 0, %s116
      %s119 = sphi 0, %s118
      %s133 = sphi 0, %s119
      %s139 = sphi 0, %s141
      %s142 = sphi 0, %s139
      %s143 = sphi 0, %s142
      %s159 = sphi 0, %s143
      %s165 = sphi 0, %s167
      %s168 = sphi 0, %s165
      %s169 = sphi 0, %s168
      %s185 = sphi 0, %s169
      %s191 = sphi 0, %s193
      %s194 = sphi 0, %s191
      %s195 = sphi 0, %s194
      %s211 = sphi 0, %s195
      %s217 = sphi 0, %s219
      %s220 = sphi 0, %s217
      %s221 = sphi 0, %s220
      %s237 = sphi 0, %s221
      %s243 = sphi 0, %s245
      %s246 = sphi 0, %s243
      %s247 = sphi 0, %s246
      %s263 = sphi 0, %s247
      %s269 = sphi 0, %s271
      %s272 = sphi 0, %s269
      %s273 = sphi 0, %s272
      %s289 = sphi 0, %s273
    $region4: #{transformer_decoder.1} parent=1 // loop_header_branch
      %21 = sbr.rel (%p19) target = $region8
    $region5: #{transformer_decoder.1} parent=1 // loop_body
      %s23 = ssub.s32 %s18, 1
      %s24 = ssub.s32 %s18, 2
      %s31 = sadd.s32 1, %s26
      %p32 = scmp.ge.s32.totalorder %s31, 2
      %s33 = scalar_select %p32, 0, %s31
      %s34 = sadd.s32 1, %s25
      %s35 = scalar_select %p32, %s34, %s25
      %p36 = scmp.ge.s32.totalorder %s35, 2
      %s37 = scalar_select %p36, 0, %s35
      %s38 = ssub.s32 %s25, %s37
      %p39 = scmp.eq.s32.totalorder %s38, 0
      %s41 = sadd.s32 %s40, 1
      %s42 = scalar_select %p39, %s40, %s41
      %p45 = pneg %p39
      %p46 = scmp.eq.s32.totalorder %s18, 3
      %p47 = por %p45, %p46
      %p48 = scmp.ne.s32.totalorder %s40, %s43
      %p49 = scmp.eq.s32.totalorder %s18, 0
      %p50 = por %p48, %p49
      %p51 = scmp.ne.s32.totalorder %s40, %s43
      %p52 = scmp.eq.s32.totalorder %s23, 3
      %p53 = por %p51, %p52
      %p54 = scmp.ne.s32.totalorder %s43, %s44
      %p55 = scmp.eq.s32.totalorder %s23, 0
      %p56 = por %p54, %p55
      %p57 = scmp.ne.s32.totalorder %s43, %s44
      %p58 = scmp.eq.s32.totalorder %s24, 3
      %p59 = por %p57, %p58
      %p61 = scmp.ne.s32.totalorder %s44, %s60
      %p62 = scmp.eq.s32.totalorder %s24, 0
      %p63 = por %p61, %p62
      %s64 = ssub.s32 %s25, %s37
      %p65 = scmp.eq.s32.totalorder %s64, 0
      %s67 = sadd.s32 %s66, 1
      %s68 = scalar_select %p65, %s66, %s67
      %p71 = pneg %p65
      %p72 = scmp.eq.s32.totalorder %s18, 3
      %p73 = por %p71, %p72
      %p74 = scmp.ne.s32.totalorder %s66, %s69
      %p75 = scmp.eq.s32.totalorder %s18, 0
      %p76 = por %p74, %p75
      %p77 = scmp.ne.s32.totalorder %s66, %s69
      %p78 = scmp.eq.s32.totalorder %s23, 3
      %p79 = por %p77, %p78
      %p80 = scmp.ne.s32.totalorder %s69, %s70
      %p81 = scmp.eq.s32.totalorder %s23, 0
      %p82 = por %p80, %p81
      %p83 = scmp.ne.s32.totalorder %s69, %s70
      %p84 = scmp.eq.s32.totalorder %s24, 3
      %p85 = por %p83, %p84
      %p87 = scmp.ne.s32.totalorder %s70, %s86
      %p88 = scmp.eq.s32.totalorder %s24, 0
      %p89 = por %p87, %p88
      %s90 = ssub.s32 %s25, %s37
      %p91 = scmp.eq.s32.totalorder %s90, 0
      %s93 = sadd.s32 %s92, 1
      %s94 = scalar_select %p91, %s92, %s93
      %p97 = pneg %p91
      %p98 = scmp.eq.s32.totalorder %s18, 3
      %p99 = por %p97, %p98
      %p100 = scmp.ne.s32.totalorder %s92, %s95
      %p101 = scmp.eq.s32.totalorder %s18, 0
      %p102 = por %p100, %p101
      %p103 = scmp.ne.s32.totalorder %s92, %s95
      %p104 = scmp.eq.s32.totalorder %s23, 3
      %p105 = por %p103, %p104
      %p106 = scmp.ne.s32.totalorder %s95, %s96
      %p107 = scmp.eq.s32.totalorder %s23, 0
      %p108 = por %p106, %p107
      %p109 = scmp.ne.s32.totalorder %s95, %s96
      %p110 = scmp.eq.s32.totalorder %s24, 3
      %p111 = por %p109, %p110
      %p113 = scmp.ne.s32.totalorder %s96, %s112
      %p114 = scmp.eq.s32.totalorder %s24, 0
      %p115 = por %p113, %p114
      %s117 = sadd.s32 %s116, 1
      %p120 = scmp.eq.s32.totalorder %s18, 3
      %p121 = scmp.ne.s32.totalorder %s116, %s118
      %p122 = scmp.eq.s32.totalorder %s18, 0
      %p123 = por %p121, %p122
      %p124 = scmp.ne.s32.totalorder %s116, %s118
      %p125 = scmp.eq.s32.totalorder %s23, 3
      %p126 = por %p124, %p125
      %p127 = scmp.ne.s32.totalorder %s118, %s119
      %p128 = scmp.eq.s32.totalorder %s23, 0
      %p129 = por %p127, %p128
      %p130 = scmp.ne.s32.totalorder %s118, %s119
      %p131 = scmp.eq.s32.totalorder %s24, 3
      %p132 = por %p130, %p131
      %p134 = scmp.ne.s32.totalorder %s119, %s133
      %p135 = scmp.eq.s32.totalorder %s24, 0
      %p136 = por %p134, %p135
      %s137 = ssub.s32 %s26, %s33
      %p138 = scmp.eq.s32.totalorder %s137, 0
      %s140 = sadd.s32 %s139, 1
      %s141 = scalar_select %p138, %s139, %s140
      %p144 = pneg %p138
      %p145 = scmp.eq.s32.totalorder %s18, 3
      %p146 = por %p144, %p145
      %p147 = scmp.ne.s32.totalorder %s139, %s142
      %p148 = scmp.eq.s32.totalorder %s18, 0
      %p149 = por %p147, %p148
      %p150 = scmp.ne.s32.totalorder %s139, %s142
      %p151 = scmp.eq.s32.totalorder %s23, 3
      %p152 = por %p150, %p151
      %p153 = scmp.ne.s32.totalorder %s142, %s143
      %p154 = scmp.eq.s32.totalorder %s23, 0
      %p155 = por %p153, %p154
      %p156 = scmp.ne.s32.totalorder %s142, %s143
      %p157 = scmp.eq.s32.totalorder %s24, 3
      %p158 = por %p156, %p157
      %p160 = scmp.ne.s32.totalorder %s143, %s159
      %p161 = scmp.eq.s32.totalorder %s24, 0
      %p162 = por %p160, %p161
      %s163 = ssub.s32 %s26, %s33
      %p164 = scmp.eq.s32.totalorder %s163, 0
      %s166 = sadd.s32 %s165, 1
      %s167 = scalar_select %p164, %s165, %s166
      %p170 = pneg %p164
      %p171 = scmp.eq.s32.totalorder %s18, 3
      %p172 = por %p170, %p171
      %p173 = scmp.ne.s32.totalorder %s165, %s168
      %p174 = scmp.eq.s32.totalorder %s18, 0
      %p175 = por %p173, %p174
      %p176 = scmp.ne.s32.totalorder %s165, %s168
      %p177 = scmp.eq.s32.totalorder %s23, 3
      %p178 = por %p176, %p177
      %p179 = scmp.ne.s32.totalorder %s168, %s169
      %p180 = scmp.eq.s32.totalorder %s23, 0
      %p181 = por %p179, %p180
      %p182 = scmp.ne.s32.totalorder %s168, %s169
      %p183 = scmp.eq.s32.totalorder %s24, 3
      %p184 = por %p182, %p183
      %p186 = scmp.ne.s32.totalorder %s169, %s185
      %p187 = scmp.eq.s32.totalorder %s24, 0
      %p188 = por %p186, %p187
      %s189 = ssub.s32 %s26, %s33
      %p190 = scmp.eq.s32.totalorder %s189, 0
      %s192 = sadd.s32 %s191, 1
      %s193 = scalar_select %p190, %s191, %s192
      %p196 = pneg %p190
      %p197 = scmp.eq.s32.totalorder %s18, 3
      %p198 = por %p196, %p197
      %p199 = scmp.ne.s32.totalorder %s191, %s194
      %p200 = scmp.eq.s32.totalorder %s18, 0
      %p201 = por %p199, %p200
      %p202 = scmp.ne.s32.totalorder %s191, %s194
      %p203 = scmp.eq.s32.totalorder %s23, 3
      %p204 = por %p202, %p203
      %p205 = scmp.ne.s32.totalorder %s194, %s195
      %p206 = scmp.eq.s32.totalorder %s23, 0
      %p207 = por %p205, %p206
      %p208 = scmp.ne.s32.totalorder %s194, %s195
      %p209 = scmp.eq.s32.totalorder %s24, 3
      %p210 = por %p208, %p209
      %p212 = scmp.ne.s32.totalorder %s195, %s211
      %p213 = scmp.eq.s32.totalorder %s24, 0
      %p214 = por %p212, %p213
      %s215 = ssub.s32 %s26, %s33
      %p216 = scmp.eq.s32.totalorder %s215, 0
      %s218 = sadd.s32 %s217, 1
      %s219 = scalar_select %p216, %s217, %s218
      %p222 = pneg %p216
      %p223 = scmp.eq.s32.totalorder %s18, 3
      %p224 = por %p222, %p223
      %p225 = scmp.ne.s32.totalorder %s217, %s220
      %p226 = scmp.eq.s32.totalorder %s18, 0
      %p227 = por %p225, %p226
      %p228 = scmp.ne.s32.totalorder %s217, %s220
      %p229 = scmp.eq.s32.totalorder %s23, 3
      %p230 = por %p228, %p229
      %p231 = scmp.ne.s32.totalorder %s220, %s221
      %p232 = scmp.eq.s32.totalorder %s23, 0
      %p233 = por %p231, %p232
      %p234 = scmp.ne.s32.totalorder %s220, %s221
      %p235 = scmp.eq.s32.totalorder %s24, 3
      %p236 = por %p234, %p235
      %p238 = scmp.ne.s32.totalorder %s221, %s237
      %p239 = scmp.eq.s32.totalorder %s24, 0
      %p240 = por %p238, %p239
      %s241 = ssub.s32 %s26, %s33
      %p242 = scmp.eq.s32.totalorder %s241, 0
      %s244 = sadd.s32 %s243, 1
      %s245 = scalar_select %p242, %s243, %s244
      %p248 = pneg %p242
      %p249 = scmp.eq.s32.totalorder %s18, 3
      %p250 = por %p248, %p249
      %p251 = scmp.ne.s32.totalorder %s243, %s246
      %p252 = scmp.eq.s32.totalorder %s18, 0
      %p253 = por %p251, %p252
      %p254 = scmp.ne.s32.totalorder %s243, %s246
      %p255 = scmp.eq.s32.totalorder %s23, 3
      %p256 = por %p254, %p255
      %p257 = scmp.ne.s32.totalorder %s246, %s247
      %p258 = scmp.eq.s32.totalorder %s23, 0
      %p259 = por %p257, %p258
      %p260 = scmp.ne.s32.totalorder %s246, %s247
      %p261 = scmp.eq.s32.totalorder %s24, 3
      %p262 = por %p260, %p261
      %p264 = scmp.ne.s32.totalorder %s247, %s263
      %p265 = scmp.eq.s32.totalorder %s24, 0
      %p266 = por %p264, %p265
      %s267 = ssub.s32 %s25, %s37
      %p268 = scmp.eq.s32.totalorder %s267, 0
      %s270 = sadd.s32 %s269, 1
      %s271 = scalar_select %p268, %s269, %s270
      %p274 = pneg %p268
      %p275 = scmp.eq.s32.totalorder %s18, 3
      %p276 = por %p274, %p275
      %p277 = scmp.ne.s32.totalorder %s269, %s272
      %p278 = scmp.eq.s32.totalorder %s18, 0
      %p279 = por %p277, %p278
      %p280 = scmp.ne.s32.totalorder %s269, %s272
      %p281 = scmp.eq.s32.totalorder %s23, 3
      %p282 = por %p280, %p281
      %p283 = scmp.ne.s32.totalorder %s272, %s273
      %p284 = scmp.eq.s32.totalorder %s23, 0
      %p285 = por %p283, %p284
      %p286 = scmp.ne.s32.totalorder %s272, %s273
      %p287 = scmp.eq.s32.totalorder %s24, 3
      %p288 = por %p286, %p287
      %p290 = scmp.ne.s32.totalorder %s273, %s289
      %p291 = scmp.eq.s32.totalorder %s24, 0
      %p292 = por %p290, %p291
      %p293 = scmp.le.s32.totalorder 1, %s18
      %p294 = scmp.lt.s32.totalorder %s18, 5
      %p295 = pnand %p293, %p294
      %p296 = pneg %p295
      // Predicated region
      $region9: #{transformer_decoder.1} parent=5 // pred_check
        _
      $region10: #{transformer_decoder.1} parent=5 // pred_check_branch
        %298 = sbr.rel (%p295) target = $region12
      $region11: #{transformer_decoder.1} parent=5 // pred_region
        %s299 = ssub.s32 %s18, 1
        // Predicated region
        $region13: #{transformer_decoder.1} parent=11 // pred_check
          %p300 = pneg %p129
        $region14: #{transformer_decoder.1} parent=11 // pred_check_branch
          %302 = sbr.rel (%p300) target = $region16
        $region15: #{transformer_decoder.1} parent=11 // pred_region
          _
        $region16: #{transformer_decoder.1} parent=11 // pred_fallthru
          _
      $region12: #{transformer_decoder.1} parent=5 // pred_fallthru
        _
      %p303 = scmp.lt.s32.totalorder %s18, 4
      // Predicated region
      $region17: #{transformer_decoder.1} parent=5 // pred_check
        %p304 = pneg %p303
      $region18: #{transformer_decoder.1} parent=5 // pred_check_branch
        %306 = sbr.rel (%p304) target = $region20
      $region19: #{transformer_decoder.1} parent=5 // pred_region
        // Predicated region
        $region21: #{transformer_decoder.1} parent=19 // pred_check
          %p307 = pneg %p50
        $region22: #{transformer_decoder.1} parent=19 // pred_check_branch
          %309 = sbr.rel (%p307) target = $region24
        $region23: #{transformer_decoder.1} parent=19 // pred_region
          %p310 = scmp.lt.s32.totalorder %s25, 1
          %s311 = scalar_select %p310, %s25, 1
          %s312 = smul.addr %s311, 8
          %s313 = scalar_lea.vmem %s0, %s312
        $region24: #{transformer_decoder.1} parent=19 // pred_fallthru
          _
        // Predicated region
        $region25: #{transformer_decoder.1} parent=19 // pred_check
          %p314 = pneg %p76
        $region26: #{transformer_decoder.1} parent=19 // pred_check_branch
          %316 = sbr.rel (%p314) target = $region28
        $region27: #{transformer_decoder.1} parent=19 // pred_region
          %p317 = scmp.lt.s32.totalorder %s25, 1
          %s318 = scalar_select %p317, %s25, 1
          %s319 = smul.addr %s318, 2
          %s320 = smul.addr %s319, 8
          %s321 = scalar_lea.vmem %s1, %s320
        $region28: #{transformer_decoder.1} parent=19 // pred_fallthru
          _
        // Predicated region
        $region29: #{transformer_decoder.1} parent=19 // pred_check
          %p322 = pneg %p102
        $region30: #{transformer_decoder.1} parent=19 // pred_check_branch
          %324 = sbr.rel (%p322) target = $region32
        $region31: #{transformer_decoder.1} parent=19 // pred_region
          %p325 = scmp.lt.s32.totalorder %s25, 1
          %s326 = scalar_select %p325, %s25, 1
          %s327 = smul.addr %s326, 2
          %s328 = smul.addr %s327, 8
          %s329 = scalar_lea.vmem %s2, %s328
        $region32: #{transformer_decoder.1} parent=19 // pred_fallthru
          _
        // Predicated region
        $region33: #{transformer_decoder.1} parent=19 // pred_check
          %p330 = pneg %p149
        $region34: #{transformer_decoder.1} parent=19 // pred_check_branch
          %332 = sbr.rel (%p330) target = $region36
        $region35: #{transformer_decoder.1} parent=19 // pred_region
          %s333 = sand.u32 %s139, 1
          %s334 = scalar_lea.sflag [#allocation4], %s333
          %s335 = sand.u32 %s139, 1
          %s336 = smul.addr %s335, 256
          %s337 = scalar_lea.vmem [#allocation3], %s336
          %s339 = ssub.s32 4096, 4096
          %340 = vsyncadd %s334, %s339
          %s341 = smul.addr %s26, 32
          %s342 = smul.addr %s341, 128
          %s343 = scalar_lea.hbm %s4, %s342
          %s344 = sshll.u32 %s337, 4
          %s345 = int_to_ptr.vmem [resolvable:$true] %s344
          %350 = dma.hbm_to_vmem [thread:$0]  %s343, 4096, %s345, %s334, 128, 128, 8
        $region36: #{transformer_decoder.1} parent=19 // pred_fallthru
          _
        // Predicated region
        $region37: #{transformer_decoder.1} parent=19 // pred_check
          %p351 = pneg %p175
        $region38: #{transformer_decoder.1} parent=19 // pred_check_branch
          %353 = sbr.rel (%p351) target = $region40
        $region39: #{transformer_decoder.1} parent=19 // pred_region
          %p354 = scmp.lt.s32.totalorder %s26, 1
          %s355 = scalar_select %p354, %s26, 1
          %s356 = smul.addr %s355, 2
          %s357 = smul.addr %s356, 8
          %s358 = scalar_lea.vmem %s5, %s357
        $region40: #{transformer_decoder.1} parent=19 // pred_fallthru
          _
        // Predicated region
        $region41: #{transformer_decoder.1} parent=19 // pred_check
          %p359 = pneg %p201
        $region42: #{transformer_decoder.1} parent=19 // pred_check_branch
          %361 = sbr.rel (%p359) target = $region44
        $region43: #{transformer_decoder.1} parent=19 // pred_region
          %p362 = scmp.lt.s32.totalorder %s26, 1
          %s363 = scalar_select %p362, %s26, 1
          %s364 = smul.addr %s363, 4
          %s365 = smul.addr %s364, 8
          %s366 = scalar_lea.vmem %s6, %s365
        $region44: #{transformer_decoder.1} parent=19 // pred_fallthru
          _
        // Predicated region
        $region45: #{transformer_decoder.1} parent=19 // pred_check
          %p367 = pneg %p227
        $region46: #{transformer_decoder.1} parent=19 // pred_check_branch
          %369 = sbr.rel (%p367) target = $region48
        $region47: #{transformer_decoder.1} parent=19 // pred_region
          %p370 = scmp.lt.s32.totalorder %s26, 1
          %s371 = scalar_select %p370, %s26, 1
          %s372 = scalar_lea.vmem %s7, %s371
        $region48: #{transformer_decoder.1} parent=19 // pred_fallthru
          _
        // Predicated region
        $region49: #{transformer_decoder.1} parent=19 // pred_check
          %p373 = pneg %p253
        $region50: #{transformer_decoder.1} parent=19 // pred_check_branch
          %375 = sbr.rel (%p373) target = $region52
        $region51: #{transformer_decoder.1} parent=19 // pred_region
          %p376 = scmp.lt.s32.totalorder %s26, 1
          %s377 = scalar_select %p376, %s26, 1
          %s378 = smul.addr %s377, 8
          %s379 = smul.addr %s378, 8
          %s380 = scalar_lea.vmem %s8, %s379
        $region52: #{transformer_decoder.1} parent=19 // pred_fallthru
          _
      $region20: #{transformer_decoder.1} parent=5 // pred_fallthru
        _
      %p381 = scmp.le.s32.totalorder 1, %s18
      %p382 = scmp.lt.s32.totalorder %s18, 5
      %p383 = pnand %p381, %p382
      %p384 = pneg %p383
      // Predicated region
      $region53: #{transformer_decoder.1} parent=5 // pred_check
        _
      $region54: #{transformer_decoder.1} parent=5 // pred_check_branch
        %386 = sbr.rel (%p383) target = $region56
      $region55: #{transformer_decoder.1} parent=5 // pred_region
        %s387 = ssub.s32 %s18, 1
        %s388 = sand.u32 %s142, 1
        %s389 = scalar_lea.sflag [#allocation4], %s388
        %s390 = sand.u32 %s142, 1
        %s391 = smul.addr %s390, 256
        %s392 = scalar_lea.vmem [#allocation3], %s391
        // Predicated region
        $region57: #{transformer_decoder.1} parent=55 // pred_check
          %p393 = pneg %p155
        $region58: #{transformer_decoder.1} parent=55 // pred_check_branch
          %395 = sbr.rel (%p393) target = $region60
        $region59: #{transformer_decoder.1} parent=55 // pred_region
          %396 = dma.done %s389, 4096
        $region60: #{transformer_decoder.1} parent=55 // pred_fallthru
          _
        %p397 = scmp.lt.s32.totalorder %s27, 1
        %s398 = scalar_select %p397, %s27, 1
        %s399 = smul.addr %s398, 8
        %s400 = scalar_lea.vmem %s0, %s399
        %p401 = pneg %p56
        %p402 = pneg %p53
        %p403 = scmp.lt.s32.totalorder %s27, 1
        %s404 = scalar_select %p403, %s27, 1
        %s405 = smul.addr %s404, 2
        %s406 = smul.addr %s405, 8
        %s407 = scalar_lea.vmem %s1, %s406
        %p408 = pneg %p82
        %p409 = pneg %p79
        %p410 = scmp.lt.s32.totalorder %s27, 1
        %s411 = scalar_select %p410, %s27, 1
        %s412 = smul.addr %s411, 2
        %s413 = smul.addr %s412, 8
        %s414 = scalar_lea.vmem %s2, %s413
        %p415 = pneg %p108
        %p416 = pneg %p105
        %p417 = pneg %p129
        %p418 = pneg %p126
        %s419 = sand.u32 %s142, 1
        %s420 = scalar_lea.sflag [#allocation4], %s419
        %s421 = sand.u32 %s142, 1
        %s422 = smul.addr %s421, 256
        %s423 = scalar_lea.vmem [#allocation3], %s422
        %p424 = pneg %p155
        %p425 = pneg %p152
        %p426 = scmp.lt.s32.totalorder %s28, 1
        %s427 = scalar_select %p426, %s28, 1
        %s428 = smul.addr %s427, 2
        %s429 = smul.addr %s428, 8
        %s430 = scalar_lea.vmem %s5, %s429
        %p431 = pneg %p181
        %p432 = pneg %p178
        %p433 = scmp.lt.s32.totalorder %s28, 1
        %s434 = scalar_select %p433, %s28, 1
        %s435 = smul.addr %s434, 4
        %s436 = smul.addr %s435, 8
        %s437 = scalar_lea.vmem %s6, %s436
        %p438 = pneg %p207
        %p439 = pneg %p204
        %p440 = scmp.lt.s32.totalorder %s28, 1
        %s441 = scalar_select %p440, %s28, 1
        %s442 = scalar_lea.vmem %s7, %s441
        %p443 = pneg %p233
        %p444 = pneg %p230
        %p445 = scmp.lt.s32.totalorder %s28, 1
        %s446 = scalar_select %p445, %s28, 1
        %s447 = smul.addr %s446, 8
        %s448 = smul.addr %s447, 8
        %s449 = scalar_lea.vmem %s8, %s448
        %p450 = pneg %p259
        %p451 = pneg %p256
        %p452 = pneg %p285
        %p453 = pneg %p282
        %p454 = scmp.lt.s32.totalorder %s27, 1
        %s455 = scalar_select %p454, %s27, 1
        %s456 = smul.addr %s455, 8
        %s457 = scalar_lea.vmem %s9, %s456
        %p458 = scmp.lt.s32.totalorder %s27, 1
        %s459 = scalar_select %p458, %s27, 1
        %s460 = smul.addr %s459, 8
        %s461 = scalar_lea.vmem %s0, %s460
        %p462 = scmp.lt.s32.totalorder %s27, 1
        %s463 = scalar_select %p462, %s27, 1
        %s464 = smul.addr %s463, 2
        %s465 = smul.addr %s464, 8
        %s466 = scalar_lea.vmem %s1, %s465
        %p467 = scmp.lt.s32.totalorder %s27, 1
        %s468 = scalar_select %p467, %s27, 1
        %s469 = smul.addr %s468, 2
        %s470 = smul.addr %s469, 8
        %s471 = scalar_lea.vmem %s2, %s470
        %p472 = scmp.lt.s32.totalorder %s28, 1
        %s473 = scalar_select %p472, %s28, 1
        %s474 = smul.addr %s473, 2
        %s475 = smul.addr %s474, 8
        %s476 = scalar_lea.vmem %s5, %s475
        %p477 = scmp.lt.s32.totalorder %s28, 1
        %s478 = scalar_select %p477, %s28, 1
        %s479 = smul.addr %s478, 4
        %s480 = smul.addr %s479, 8
        %s481 = scalar_lea.vmem %s6, %s480
        %p482 = scmp.lt.s32.totalorder %s28, 1
        %s483 = scalar_select %p482, %s28, 1
        %s484 = scalar_lea.vmem %s7, %s483
        %p485 = scmp.lt.s32.totalorder %s28, 1
        %s486 = scalar_select %p485, %s28, 1
        %s487 = smul.addr %s486, 8
        %s488 = smul.addr %s487, 8
        %s489 = scalar_lea.vmem %s8, %s488
        %p490 = scmp.lt.s32.totalorder %s27, 1
        %s491 = scalar_select %p490, %s27, 1
        %s492 = smul.addr %s491, 8
        %s493 = scalar_lea.vmem %s9, %s492
        %p494 = scmp.eq.s32.totalorder %s28, 0
        // Predicated region
        $region61: #{transformer_decoder.1} parent=55 // pred_check
          %p495 = pneg %p494
        $region62: #{transformer_decoder.1} parent=55 // pred_check_branch
          %497 = sbr.rel (%p495) target = $region64
        $region63: #{transformer_decoder.1} parent=55 // pred_region
          %vm498 = vcmask 261120
          %499 = vst.msk [vmem:[#allocation2] sm:$0xff] %vm498, 0.0
        $region64: #{transformer_decoder.1} parent=55 // pred_fallthru
          _
        %v500 = vld [vmem:[#allocation2] sm:$0xff]
        %v501 = vld [vmem:[%s461] sm:$0xff]
        %v502 = vld [vmem:[%s466] sm:$0xff]
        %v503 = vld [vmem:[%s466 + $0x8] sm:$0xff]
        %v504 = vld [vmem:[%s471] sm:$0xff]
        %v505 = vld [vmem:[%s471 + $0x8] sm:$0xff]
        %v506 = vld [vmem:[%s476] sm:$0xff]
        %v507 = vld [vmem:[%s476 + $0x8] sm:$0x7f]
        %v508 = vadd.f32 %v500, %v501
        %v509 = vld [vmem:[%s392] sm:$0xff]
        %v510 = vld [vmem:[%s392 + $0x8] sm:$0xff]
        %v511 = vld [vmem:[%s392 + $0x10] sm:$0xff]
        %v512 = vld [vmem:[%s392 + $0x18] sm:$0xff]
        %s513 = scalar_lea.vmem %s392, 32 [#allocation3]
        %v514 = vld [vmem:[%s513] sm:$0xff]
        %v515 = vld [vmem:[%s513 + $0x8] sm:$0xff]
        %v516 = vld [vmem:[%s513 + $0x10] sm:$0xff]
        %v517 = vld [vmem:[%s513 + $0x18] sm:$0xff]
        %s518 = scalar_lea.vmem %s392, 64 [#allocation3]
        %v519 = vld [vmem:[%s518] sm:$0xff]
        %v520 = vld [vmem:[%s518 + $0x8] sm:$0xff]
        %v521 = vld [vmem:[%s518 + $0x10] sm:$0xff]
        %v522 = vld [vmem:[%s518 + $0x18] sm:$0xff]
        %s523 = scalar_lea.vmem %s392, 96 [#allocation3]
        %v524 = vld [vmem:[%s523] sm:$0xff]
        %v525 = vld [vmem:[%s523 + $0x8] sm:$0xff]
        %v526 = vld [vmem:[%s523 + $0x10] sm:$0xff]
        %v527 = vld [vmem:[%s523 + $0x18] sm:$0xff]
        %v528 = vlaneseq
        %v529 = vshrl.u32 %v528, 7
        %v530 = vsub.s32 0, %v529
        %v531 = vrot.slane %v506, %v530
        %vm532 = vcmask 261120
        %v534 = vsel %vm532, %v508, 0
        %536 = vmatprep.subr.mxu0 0.0
        %537 = vmatpush1.msra.mxu0 %v509
        %538 = vmatprep.subr.mxu0 0.0
        %539 = vmatpush1.msra.mxu0 %v510
        %540 = vmatprep.subr.mxu0 0.0
        %541 = vmatpush1.msra.mxu0 %v511
        %542 = vmatprep.subr.mxu0 0.0
        %543 = vmatpush1.msra.mxu0 %v512
        %544 = vmatprep.subr.mxu0 0.0
        %545 = vmatpush1.msra.mxu0 0.0
        %546 = vmatprep.subr.mxu0 0.0
        %547 = vmatpush1.msra.mxu0 0.0
        %548 = vmatprep.subr.mxu0 0.0
        %549 = vmatpush1.msra.mxu0 0.0
        %550 = vmatprep.subr.mxu0 0.0
        %551 = vmatpush1.msra.mxu0 0.0
        %552 = vmatprep.subr.mxu0 0.0
        %553 = vmatpush1.msra.mxu0 0.0
        %554 = vmatprep.subr.mxu0 0.0
        %555 = vmatpush1.msra.mxu0 0.0
        %556 = vmatprep.subr.mxu0 0.0
        %557 = vmatpush1.msra.mxu0 0.0
        %558 = vmatprep.subr.mxu0 0.0
        %559 = vmatpush1.msra.mxu0 0.0
        %560 = vmatprep.subr.mxu0 0.0
        %561 = vmatpush1.msra.mxu0 0.0
        %562 = vmatprep.subr.mxu0 0.0
        %563 = vmatpush1.msra.mxu0 0.0
        %564 = vmatprep.subr.mxu0 0.0
        %565 = vmatpush1.msra.mxu0 0.0
        %566 = vmatprep.subr.mxu0 0.0
        %567 = vmatpush1.msra.mxu0 0.0
        %568 = vmatprep.subr.mxu0 0.0
        %569 = vmatpush1.msra.mxu0 0.0
        %570 = vmatprep.subr.mxu0 0.0
        %571 = vmatpush1.msra.mxu0 0.0
        %572 = vmatprep.subr.mxu0 0.0
        %573 = vmatpush1.msra.mxu0 0.0
        %574 = vmatprep.subr.mxu0 0.0
        %575 = vmatpush1.msra.mxu0 0.0
        %576 = vmatprep.subr.mxu0 0.0
        %577 = vmatpush1.msra.mxu0 0.0
        %578 = vmatprep.subr.mxu0 0.0
        %579 = vmatpush1.msra.mxu0 0.0
        %580 = vmatprep.subr.mxu0 0.0
        %581 = vmatpush1.msra.mxu0 0.0
        %582 = vmatprep.subr.mxu0 0.0
        %583 = vmatpush1.msra.mxu0 0.0
        %584 = vmatprep.subr.mxu0 0.0
        %585 = vmatpush1.msra.mxu0 0.0
        %586 = vmatprep.subr.mxu0 0.0
        %587 = vmatpush1.msra.mxu0 0.0
        %588 = vmatprep.subr.mxu0 0.0
        %589 = vmatpush1.msra.mxu0 0.0
        %590 = vmatprep.subr.mxu0 0.0
        %591 = vmatpush1.msra.mxu0 0.0
        %592 = vmatprep.subr.mxu0 0.0
        %593 = vmatpush1.msra.mxu0 0.0
        %594 = vmatprep.subr.mxu0 0.0
        %595 = vmatpush1.msra.mxu0 0.0
        %596 = vmatprep.subr.mxu0 0.0
        %597 = vmatpush1.msra.mxu0 0.0
        %598 = vmatprep.subr.mxu0 0.0
        %599 = vmatpush1.msra.mxu0 0.0
        %600 = vmatprep.mubr.f32.mxu0 0.0
        %601 = vmatmul.mubr.f32.gmra.mrb[0].mxu0 %v534
        %v602 = vpop.f32.mrb[0].mxu0
        %v603 = vadd.f32 %v531, %v602
        %v604 = vpop.f32.mrb[0].mxu0
        %605 = vdwg.mxu0
        %v606 = vlaneseq
        %v607 = vshrl.u32 %v606, 7
        %v608 = vsub.s32 1, %v607
        %v609 = vrot.slane %v506, %v608
        %610 = vmatprep.subr.mxu0 0.0
        %611 = vmatpush1.msra.mxu0 %v514
        %612 = vmatprep.subr.mxu0 0.0
        %613 = vmatpush1.msra.mxu0 %v515
        %614 = vmatprep.subr.mxu0 0.0
        %615 = vmatpush1.msra.mxu0 %v516
        %616 = vmatprep.subr.mxu0 0.0
        %617 = vmatpush1.msra.mxu0 %v517
        %618 = vmatprep.subr.mxu0 0.0
        %619 = vmatpush1.msra.mxu0 0.0
        %620 = vmatprep.subr.mxu0 0.0
        %621 = vmatpush1.msra.mxu0 0.0
        %622 = vmatprep.subr.mxu0 0.0
        %623 = vmatpush1.msra.mxu0 0.0
        %624 = vmatprep.subr.mxu0 0.0
        %625 = vmatpush1.msra.mxu0 0.0
        %626 = vmatprep.subr.mxu0 0.0
        %627 = vmatpush1.msra.mxu0 0.0
        %628 = vmatprep.subr.mxu0 0.0
        %629 = vmatpush1.msra.mxu0 0.0
        %630 = vmatprep.subr.mxu0 0.0
        %631 = vmatpush1.msra.mxu0 0.0
        %632 = vmatprep.subr.mxu0 0.0
        %633 = vmatpush1.msra.mxu0 0.0
        %634 = vmatprep.subr.mxu0 0.0
        %635 = vmatpush1.msra.mxu0 0.0
        %636 = vmatprep.subr.mxu0 0.0
        %637 = vmatpush1.msra.mxu0 0.0
        %638 = vmatprep.subr.mxu0 0.0
        %639 = vmatpush1.msra.mxu0 0.0
        %640 = vmatprep.subr.mxu0 0.0
        %641 = vmatpush1.msra.mxu0 0.0
        %642 = vmatprep.subr.mxu0 0.0
        %643 = vmatpush1.msra.mxu0 0.0
        %644 = vmatprep.subr.mxu0 0.0
        %645 = vmatpush1.msra.mxu0 0.0
        %646 = vmatprep.subr.mxu0 0.0
        %647 = vmatpush1.msra.mxu0 0.0
        %648 = vmatprep.subr.mxu0 0.0
        %649 = vmatpush1.msra.mxu0 0.0
        %650 = vmatprep.subr.mxu0 0.0
        %651 = vmatpush1.msra.mxu0 0.0
        %652 = vmatprep.subr.mxu0 0.0
        %653 = vmatpush1.msra.mxu0 0.0
        %654 = vmatprep.subr.mxu0 0.0
        %655 = vmatpush1.msra.mxu0 0.0
        %656 = vmatprep.subr.mxu0 0.0
        %657 = vmatpush1.msra.mxu0 0.0
        %658 = vmatprep.subr.mxu0 0.0
        %659 = vmatpush1.msra.mxu0 0.0
        %660 = vmatprep.subr.mxu0 0.0
        %661 = vmatpush1.msra.mxu0 0.0
        %662 = vmatprep.subr.mxu0 0.0
        %663 = vmatpush1.msra.mxu0 0.0
        %664 = vmatprep.subr.mxu0 0.0
        %665 = vmatpush1.msra.mxu0 0.0
        %666 = vmatprep.subr.mxu0 0.0
        %667 = vmatpush1.msra.mxu0 0.0
        %668 = vmatprep.subr.mxu0 0.0
        %669 = vmatpush1.msra.mxu0 0.0
        %670 = vmatprep.subr.mxu0 0.0
        %671 = vmatpush1.msra.mxu0 0.0
        %672 = vmatprep.subr.mxu0 0.0
        %673 = vmatpush1.msra.mxu0 0.0
        %674 = vmatprep.mubr.f32.mxu0 0.0
        %675 = vmatmul.mubr.f32.gmra.mrb[0].mxu0 %v534
        %v676 = vpop.f32.mrb[0].mxu0
        %v677 = vadd.f32 %v609, %v676
        %v678 = vpop.f32.mrb[0].mxu0
        %679 = vdwg.mxu0
        %v680 = vlaneseq
        %v681 = vshrl.u32 %v680, 7
        %v682 = vsub.s32 2, %v681
        %v683 = vrot.slane %v506, %v682
        %v685 = vsel %vm532, %v500, 0
        %687 = vmatprep.subr.mxu0 0.0
        %688 = vmatpush1.msra.mxu0 %v519
        %689 = vmatprep.subr.mxu0 0.0
        %690 = vmatpush1.msra.mxu0 %v520
        %691 = vmatprep.subr.mxu0 0.0
        %692 = vmatpush1.msra.mxu0 %v521
        %693 = vmatprep.subr.mxu0 0.0
        %694 = vmatpush1.msra.mxu0 %v522
        %695 = vmatprep.subr.mxu0 0.0
        %696 = vmatpush1.msra.mxu0 0.0
        %697 = vmatprep.subr.mxu0 0.0
        %698 = vmatpush1.msra.mxu0 0.0
        %699 = vmatprep.subr.mxu0 0.0
        %700 = vmatpush1.msra.mxu0 0.0
        %701 = vmatprep.subr.mxu0 0.0
        %702 = vmatpush1.msra.mxu0 0.0
        %703 = vmatprep.subr.mxu0 0.0
        %704 = vmatpush1.msra.mxu0 0.0
        %705 = vmatprep.subr.mxu0 0.0
        %706 = vmatpush1.msra.mxu0 0.0
        %707 = vmatprep.subr.mxu0 0.0
        %708 = vmatpush1.msra.mxu0 0.0
        %709 = vmatprep.subr.mxu0 0.0
        %710 = vmatpush1.msra.mxu0 0.0
        %711 = vmatprep.subr.mxu0 0.0
        %712 = vmatpush1.msra.mxu0 0.0
        %713 = vmatprep.subr.mxu0 0.0
        %714 = vmatpush1.msra.mxu0 0.0
        %715 = vmatprep.subr.mxu0 0.0
        %716 = vmatpush1.msra.mxu0 0.0
        %717 = vmatprep.subr.mxu0 0.0
        %718 = vmatpush1.msra.mxu0 0.0
        %719 = vmatprep.subr.mxu0 0.0
        %720 = vmatpush1.msra.mxu0 0.0
        %721 = vmatprep.subr.mxu0 0.0
        %722 = vmatpush1.msra.mxu0 0.0
        %723 = vmatprep.subr.mxu0 0.0
        %724 = vmatpush1.msra.mxu0 0.0
        %725 = vmatprep.subr.mxu0 0.0
        %726 = vmatpush1.msra.mxu0 0.0
        %727 = vmatprep.subr.mxu0 0.0
        %728 = vmatpush1.msra.mxu0 0.0
        %729 = vmatprep.subr.mxu0 0.0
        %730 = vmatpush1.msra.mxu0 0.0
        %731 = vmatprep.subr.mxu0 0.0
        %732 = vmatpush1.msra.mxu0 0.0
        %733 = vmatprep.subr.mxu0 0.0
        %734 = vmatpush1.msra.mxu0 0.0
        %735 = vmatprep.subr.mxu0 0.0
        %736 = vmatpush1.msra.mxu0 0.0
        %737 = vmatprep.subr.mxu0 0.0
        %738 = vmatpush1.msra.mxu0 0.0
        %739 = vmatprep.subr.mxu0 0.0
        %740 = vmatpush1.msra.mxu0 0.0
        %741 = vmatprep.subr.mxu0 0.0
        %742 = vmatpush1.msra.mxu0 0.0
        %743 = vmatprep.subr.mxu0 0.0
        %744 = vmatpush1.msra.mxu0 0.0
        %745 = vmatprep.subr.mxu0 0.0
        %746 = vmatpush1.msra.mxu0 0.0
        %747 = vmatprep.subr.mxu0 0.0
        %748 = vmatpush1.msra.mxu0 0.0
        %749 = vmatprep.subr.mxu0 0.0
        %750 = vmatpush1.msra.mxu0 0.0
        %751 = vmatprep.mubr.f32.mxu0 0.0
        %752 = vmatmul.mubr.f32.gmra.mrb[0].mxu0 %v685
        %v753 = vpop.f32.mrb[0].mxu0
        %v754 = vadd.f32 %v683, %v753
        %v755 = vpop.f32.mrb[0].mxu0
        %756 = vdwg.mxu0
        %758 = vrot.lane.b32.xlu0 %v603, 120
        %v759 = vpop.permute.xlu0 %758
        %760 = vrot.lane.b32.xlu0 %v603, 112
        %v761 = vpop.permute.xlu0 %760
        %762 = vrot.lane.b32.xlu0 %v603, 104
        %v763 = vpop.permute.xlu0 %762
        %765 = vrot.lane.b32.xlu0 %v677, 120
        %v766 = vpop.permute.xlu0 %765
        %767 = vrot.lane.b32.xlu0 %v677, 112
        %v768 = vpop.permute.xlu0 %767
        %769 = vrot.lane.b32.xlu0 %v677, 104
        %v770 = vpop.permute.xlu0 %769
        %772 = vrot.lane.b32.xlu0 %v754, 120
        %v773 = vpop.permute.xlu0 %772
        %775 = vrot.lane.b32.xlu0 %v754, 112
        %v776 = vpop.permute.xlu0 %775
        %778 = vrot.lane.b32.xlu0 %v754, 104
        %v779 = vpop.permute.xlu0 %778
        %vm781 = vcmask 64512
        %v782 = vsel %vm781, %v603, 0
        %v784 = vsel %vm781, %v677, 0
        %786 = vmatprep.subr.mxu0 0.0
        %787 = vmatpush1.xpose.msra.mxu0 %v784
        %788 = vmatprep.subr.mxu0 0.0
        %789 = vmatpush1.xpose.msra.mxu0 0.0
        %790 = vmatprep.subr.mxu0 0.0
        %791 = vmatpush1.xpose.msra.mxu0 0.0
        %792 = vmatprep.subr.mxu0 0.0
        %793 = vmatpush1.xpose.msra.mxu0 0.0
        %794 = vmatprep.subr.mxu0 0.0
        %795 = vmatpush1.xpose.msra.mxu0 0.0
        %796 = vmatprep.subr.mxu0 0.0
        %797 = vmatpush1.xpose.msra.mxu0 0.0
        %798 = vmatprep.subr.mxu0 0.0
        %799 = vmatpush1.xpose.msra.mxu0 0.0
        %800 = vmatprep.subr.mxu0 0.0
        %801 = vmatpush1.xpose.msra.mxu0 0.0
        %802 = vmatprep.subr.mxu0 0.0
        %803 = vmatpush1.xpose.msra.mxu0 0.0
        %804 = vmatprep.subr.mxu0 0.0
        %805 = vmatpush1.xpose.msra.mxu0 0.0
        %806 = vmatprep.subr.mxu0 0.0
        %807 = vmatpush1.xpose.msra.mxu0 0.0
        %808 = vmatprep.subr.mxu0 0.0
        %809 = vmatpush1.xpose.msra.mxu0 0.0
        %810 = vmatprep.subr.mxu0 0.0
        %811 = vmatpush1.xpose.msra.mxu0 0.0
        %812 = vmatprep.subr.mxu0 0.0
        %813 = vmatpush1.xpose.msra.mxu0 0.0
        %814 = vmatprep.subr.mxu0 0.0
        %815 = vmatpush1.xpose.msra.mxu0 0.0
        %816 = vmatprep.subr.mxu0 0.0
        %817 = vmatpush1.xpose.msra.mxu0 0.0
        %818 = vmatprep.subr.mxu0 0.0
        %819 = vmatpush1.xpose.msra.mxu0 0.0
        %820 = vmatprep.subr.mxu0 0.0
        %821 = vmatpush1.xpose.msra.mxu0 0.0
        %822 = vmatprep.subr.mxu0 0.0
        %823 = vmatpush1.xpose.msra.mxu0 0.0
        %824 = vmatprep.subr.mxu0 0.0
        %825 = vmatpush1.xpose.msra.mxu0 0.0
        %826 = vmatprep.subr.mxu0 0.0
        %827 = vmatpush1.xpose.msra.mxu0 0.0
        %828 = vmatprep.subr.mxu0 0.0
        %829 = vmatpush1.xpose.msra.mxu0 0.0
        %830 = vmatprep.subr.mxu0 0.0
        %831 = vmatpush1.xpose.msra.mxu0 0.0
        %832 = vmatprep.subr.mxu0 0.0
        %833 = vmatpush1.xpose.msra.mxu0 0.0
        %834 = vmatprep.subr.mxu0 0.0
        %835 = vmatpush1.xpose.msra.mxu0 0.0
        %836 = vmatprep.subr.mxu0 0.0
        %837 = vmatpush1.xpose.msra.mxu0 0.0
        %838 = vmatprep.subr.mxu0 0.0
        %839 = vmatpush1.xpose.msra.mxu0 0.0
        %840 = vmatprep.subr.mxu0 0.0
        %841 = vmatpush1.xpose.msra.mxu0 0.0
        %842 = vmatprep.subr.mxu0 0.0
        %843 = vmatpush1.xpose.msra.mxu0 0.0
        %844 = vmatprep.subr.mxu0 0.0
        %845 = vmatpush1.xpose.msra.mxu0 0.0
        %846 = vmatprep.subr.mxu0 0.0
        %847 = vmatpush1.xpose.msra.mxu0 0.0
        %848 = vmatprep.subr.mxu0 0.0
        %849 = vmatpush1.xpose.msra.mxu0 0.0
        %850 = vmatprep.mubr.f32.mxu0 0.0
        %851 = vmatmul.mubr.f32.gmra.mrb[0].mxu0 %v782
        %v852 = vpop.f32.mrb[0].mxu0
        %v853 = vadd.f32 0.0, %v852
        %v854 = vpop.f32.mrb[0].mxu0
        %855 = vdwg.mxu0
        %v856 = vsel %vm781, %v759, 0
        %v858 = vsel %vm781, %v766, 0
        %860 = vmatprep.subr.mxu0 0.0
        %861 = vmatpush1.xpose.msra.mxu0 %v858
        %862 = vmatprep.subr.mxu0 0.0
        %863 = vmatpush1.xpose.msra.mxu0 0.0
        %864 = vmatprep.subr.mxu0 0.0
        %865 = vmatpush1.xpose.msra.mxu0 0.0
        %866 = vmatprep.subr.mxu0 0.0
        %867 = vmatpush1.xpose.msra.mxu0 0.0
        %868 = vmatprep.subr.mxu0 0.0
        %869 = vmatpush1.xpose.msra.mxu0 0.0
        %870 = vmatprep.subr.mxu0 0.0
        %871 = vmatpush1.xpose.msra.mxu0 0.0
        %872 = vmatprep.subr.mxu0 0.0
        %873 = vmatpush1.xpose.msra.mxu0 0.0
        %874 = vmatprep.subr.mxu0 0.0
        %875 = vmatpush1.xpose.msra.mxu0 0.0
        %876 = vmatprep.subr.mxu0 0.0
        %877 = vmatpush1.xpose.msra.mxu0 0.0
        %878 = vmatprep.subr.mxu0 0.0
        %879 = vmatpush1.xpose.msra.mxu0 0.0
        %880 = vmatprep.subr.mxu0 0.0
        %881 = vmatpush1.xpose.msra.mxu0 0.0
        %882 = vmatprep.subr.mxu0 0.0
        %883 = vmatpush1.xpose.msra.mxu0 0.0
        %884 = vmatprep.subr.mxu0 0.0
        %885 = vmatpush1.xpose.msra.mxu0 0.0
        %886 = vmatprep.subr.mxu0 0.0
        %887 = vmatpush1.xpose.msra.mxu0 0.0
        %888 = vmatprep.subr.mxu0 0.0
        %889 = vmatpush1.xpose.msra.mxu0 0.0
        %890 = vmatprep.subr.mxu0 0.0
        %891 = vmatpush1.xpose.msra.mxu0 0.0
        %892 = vmatprep.subr.mxu0 0.0
        %893 = vmatpush1.xpose.msra.mxu0 0.0
        %894 = vmatprep.subr.mxu0 0.0
        %895 = vmatpush1.xpose.msra.mxu0 0.0
        %896 = vmatprep.subr.mxu0 0.0
        %897 = vmatpush1.xpose.msra.mxu0 0.0
        %898 = vmatprep.subr.mxu0 0.0
        %899 = vmatpush1.xpose.msra.mxu0 0.0
        %900 = vmatprep.subr.mxu0 0.0
        %901 = vmatpush1.xpose.msra.mxu0 0.0
        %902 = vmatprep.subr.mxu0 0.0
        %903 = vmatpush1.xpose.msra.mxu0 0.0
        %904 = vmatprep.subr.mxu0 0.0
        %905 = vmatpush1.xpose.msra.mxu0 0.0
        %906 = vmatprep.subr.mxu0 0.0
        %907 = vmatpush1.xpose.msra.mxu0 0.0
        %908 = vmatprep.subr.mxu0 0.0
        %909 = vmatpush1.xpose.msra.mxu0 0.0
        %910 = vmatprep.subr.mxu0 0.0
        %911 = vmatpush1.xpose.msra.mxu0 0.0
        %912 = vmatprep.subr.mxu0 0.0
        %913 = vmatpush1.xpose.msra.mxu0 0.0
        %914 = vmatprep.subr.mxu0 0.0
        %915 = vmatpush1.xpose.msra.mxu0 0.0
        %916 = vmatprep.subr.mxu0 0.0
        %917 = vmatpush1.xpose.msra.mxu0 0.0
        %918 = vmatprep.subr.mxu0 0.0
        %919 = vmatpush1.xpose.msra.mxu0 0.0
        %920 = vmatprep.subr.mxu0 0.0
        %921 = vmatpush1.xpose.msra.mxu0 0.0
        %922 = vmatprep.subr.mxu0 0.0
        %923 = vmatpush1.xpose.msra.mxu0 0.0
        %924 = vmatprep.mubr.f32.mxu0 0.0
        %925 = vmatmul.mubr.f32.gmra.mrb[0].mxu0 %v856
        %v926 = vpop.f32.mrb[0].mxu0
        %v927 = vadd.f32 0.0, %v926
        %v928 = vpop.f32.mrb[0].mxu0
        %929 = vdwg.mxu0
        %v930 = vsel %vm781, %v761, 0
        %v932 = vsel %vm781, %v768, 0
        %934 = vmatprep.subr.mxu0 0.0
        %935 = vmatpush1.xpose.msra.mxu0 %v932
        %936 = vmatprep.subr.mxu0 0.0
        %937 = vmatpush1.xpose.msra.mxu0 0.0
        %938 = vmatprep.subr.mxu0 0.0
        %939 = vmatpush1.xpose.msra.mxu0 0.0
        %940 = vmatprep.subr.mxu0 0.0
        %941 = vmatpush1.xpose.msra.mxu0 0.0
        %942 = vmatprep.subr.mxu0 0.0
        %943 = vmatpush1.xpose.msra.mxu0 0.0
        %944 = vmatprep.subr.mxu0 0.0
        %945 = vmatpush1.xpose.msra.mxu0 0.0
        %946 = vmatprep.subr.mxu0 0.0
        %947 = vmatpush1.xpose.msra.mxu0 0.0
        %948 = vmatprep.subr.mxu0 0.0
        %949 = vmatpush1.xpose.msra.mxu0 0.0
        %950 = vmatprep.subr.mxu0 0.0
        %951 = vmatpush1.xpose.msra.mxu0 0.0
        %952 = vmatprep.subr.mxu0 0.0
        %953 = vmatpush1.xpose.msra.mxu0 0.0
        %954 = vmatprep.subr.mxu0 0.0
        %955 = vmatpush1.xpose.msra.mxu0 0.0
        %956 = vmatprep.subr.mxu0 0.0
        %957 = vmatpush1.xpose.msra.mxu0 0.0
        %958 = vmatprep.subr.mxu0 0.0
        %959 = vmatpush1.xpose.msra.mxu0 0.0
        %960 = vmatprep.subr.mxu0 0.0
        %961 = vmatpush1.xpose.msra.mxu0 0.0
        %962 = vmatprep.subr.mxu0 0.0
        %963 = vmatpush1.xpose.msra.mxu0 0.0
        %964 = vmatprep.subr.mxu0 0.0
        %965 = vmatpush1.xpose.msra.mxu0 0.0
        %966 = vmatprep.subr.mxu0 0.0
        %967 = vmatpush1.xpose.msra.mxu0 0.0
        %968 = vmatprep.subr.mxu0 0.0
        %969 = vmatpush1.xpose.msra.mxu0 0.0
        %970 = vmatprep.subr.mxu0 0.0
        %971 = vmatpush1.xpose.msra.mxu0 0.0
        %972 = vmatprep.subr.mxu0 0.0
        %973 = vmatpush1.xpose.msra.mxu0 0.0
        %974 = vmatprep.subr.mxu0 0.0
        %975 = vmatpush1.xpose.msra.mxu0 0.0
        %976 = vmatprep.subr.mxu0 0.0
        %977 = vmatpush1.xpose.msra.mxu0 0.0
        %978 = vmatprep.subr.mxu0 0.0
        %979 = vmatpush1.xpose.msra.mxu0 0.0
        %980 = vmatprep.subr.mxu0 0.0
        %981 = vmatpush1.xpose.msra.mxu0 0.0
        %982 = vmatprep.subr.mxu0 0.0
        %983 = vmatpush1.xpose.msra.mxu0 0.0
        %984 = vmatprep.subr.mxu0 0.0
        %985 = vmatpush1.xpose.msra.mxu0 0.0
        %986 = vmatprep.subr.mxu0 0.0
        %987 = vmatpush1.xpose.msra.mxu0 0.0
        %988 = vmatprep.subr.mxu0 0.0
        %989 = vmatpush1.xpose.msra.mxu0 0.0
        %990 = vmatprep.subr.mxu0 0.0
        %991 = vmatpush1.xpose.msra.mxu0 0.0
        %992 = vmatprep.subr.mxu0 0.0
        %993 = vmatpush1.xpose.msra.mxu0 0.0
        %994 = vmatprep.subr.mxu0 0.0
        %995 = vmatpush1.xpose.msra.mxu0 0.0
        %996 = vmatprep.subr.mxu0 0.0
        %997 = vmatpush1.xpose.msra.mxu0 0.0
        %998 = vmatprep.mubr.f32.mxu0 0.0
        %999 = vmatmul.mubr.f32.gmra.mrb[0].mxu0 %v930
        %v1000 = vpop.f32.mrb[0].mxu0
        %v1001 = vadd.f32 0.0, %v1000
        %v1002 = vpop.f32.mrb[0].mxu0
        %1003 = vdwg.mxu0
        %v1004 = vsel %vm781, %v763, 0
        %v1006 = vsel %vm781, %v770, 0
        %1008 = vmatprep.subr.mxu0 0.0
        %1009 = vmatpush1.xpose.msra.mxu0 %v1006
        %1010 = vmatprep.subr.mxu0 0.0
        %1011 = vmatpush1.xpose.msra.mxu0 0.0
        %1012 = vmatprep.subr.mxu0 0.0
        %1013 = vmatpush1.xpose.msra.mxu0 0.0
        %1014 = vmatprep.subr.mxu0 0.0
        %1015 = vmatpush1.xpose.msra.mxu0 0.0
        %1016 = vmatprep.subr.mxu0 0.0
        %1017 = vmatpush1.xpose.msra.mxu0 0.0
        %1018 = vmatprep.subr.mxu0 0.0
        %1019 = vmatpush1.xpose.msra.mxu0 0.0
        %1020 = vmatprep.subr.mxu0 0.0
        %1021 = vmatpush1.xpose.msra.mxu0 0.0
        %1022 = vmatprep.subr.mxu0 0.0
        %1023 = vmatpush1.xpose.msra.mxu0 0.0
        %1024 = vmatprep.subr.mxu0 0.0
        %1025 = vmatpush1.xpose.msra.mxu0 0.0
        %1026 = vmatprep.subr.mxu0 0.0
        %1027 = vmatpush1.xpose.msra.mxu0 0.0
        %1028 = vmatprep.subr.mxu0 0.0
        %1029 = vmatpush1.xpose.msra.mxu0 0.0
        %1030 = vmatprep.subr.mxu0 0.0
        %1031 = vmatpush1.xpose.msra.mxu0 0.0
        %1032 = vmatprep.subr.mxu0 0.0
        %1033 = vmatpush1.xpose.msra.mxu0 0.0
        %1034 = vmatprep.subr.mxu0 0.0
        %1035 = vmatpush1.xpose.msra.mxu0 0.0
        %1036 = vmatprep.subr.mxu0 0.0
        %1037 = vmatpush1.xpose.msra.mxu0 0.0
        %1038 = vmatprep.subr.mxu0 0.0
        %1039 = vmatpush1.xpose.msra.mxu0 0.0
        %1040 = vmatprep.subr.mxu0 0.0
        %1041 = vmatpush1.xpose.msra.mxu0 0.0
        %1042 = vmatprep.subr.mxu0 0.0
        %1043 = vmatpush1.xpose.msra.mxu0 0.0
        %1044 = vmatprep.subr.mxu0 0.0
        %1045 = vmatpush1.xpose.msra.mxu0 0.0
        %1046 = vmatprep.subr.mxu0 0.0
        %1047 = vmatpush1.xpose.msra.mxu0 0.0
        %1048 = vmatprep.subr.mxu0 0.0
        %1049 = vmatpush1.xpose.msra.mxu0 0.0
        %1050 = vmatprep.subr.mxu0 0.0
        %1051 = vmatpush1.xpose.msra.mxu0 0.0
        %1052 = vmatprep.subr.mxu0 0.0
        %1053 = vmatpush1.xpose.msra.mxu0 0.0
        %1054 = vmatprep.subr.mxu0 0.0
        %1055 = vmatpush1.xpose.msra.mxu0 0.0
        %1056 = vmatprep.subr.mxu0 0.0
        %1057 = vmatpush1.xpose.msra.mxu0 0.0
        %1058 = vmatprep.subr.mxu0 0.0
        %1059 = vmatpush1.xpose.msra.mxu0 0.0
        %1060 = vmatprep.subr.mxu0 0.0
        %1061 = vmatpush1.xpose.msra.mxu0 0.0
        %1062 = vmatprep.subr.mxu0 0.0
        %1063 = vmatpush1.xpose.msra.mxu0 0.0
        %1064 = vmatprep.subr.mxu0 0.0
        %1065 = vmatpush1.xpose.msra.mxu0 0.0
        %1066 = vmatprep.subr.mxu0 0.0
        %1067 = vmatpush1.xpose.msra.mxu0 0.0
        %1068 = vmatprep.subr.mxu0 0.0
        %1069 = vmatpush1.xpose.msra.mxu0 0.0
        %1070 = vmatprep.subr.mxu0 0.0
        %1071 = vmatpush1.xpose.msra.mxu0 0.0
        %1072 = vmatprep.mubr.f32.mxu0 0.0
        %1073 = vmatmul.mubr.f32.gmra.mrb[0].mxu0 %v1004
        %v1074 = vpop.f32.mrb[0].mxu0
        %v1075 = vadd.f32 0.0, %v1074
        %v1076 = vpop.f32.mrb[0].mxu0
        %1077 = vdwg.mxu0
        %v1078 = vsel %vm781, %v853, -inf
        %1079 = vmax.xlane.f32.xlu0 %v1078
        %v1080 = vpop.xlane.xlu0 %1079
        %v1081 = vsel %vm781, %v927, -inf
        %1082 = vmax.xlane.f32.xlu0 %v1081
        %v1083 = vpop.xlane.xlu0 %1082
        %v1084 = vsel %vm781, %v1001, -inf
        %1085 = vmax.xlane.f32.xlu0 %v1084
        %v1086 = vpop.xlane.xlu0 %1085
        %v1087 = vsel %vm781, %v1075, -inf
        %1088 = vmax.xlane.f32.xlu0 %v1087
        %v1089 = vpop.xlane.xlu0 %1088
        %v1090 = vsub.f32 %v853, %v1080
        %v1091 = vsub.f32 %v927, %v1083
        %v1092 = vsub.f32 %v1001, %v1086
        %v1093 = vsub.f32 %v1075, %v1089
        %v1094 = vmul.f32 %v1090, 1.442695
        %v1095 = vpow.pop %v1094
        %v1096 = vmul.f32 %v1091, 1.442695
        %v1097 = vpow.pop %v1096
        %v1098 = vmul.f32 %v1092, 1.442695
        %v1099 = vpow.pop %v1098
        %v1100 = vmul.f32 %v1093, 1.442695
        %v1101 = vpow.pop %v1100
        %v1102 = vsel %vm781, %v1095, 0.0
        %1103 = vadd.xlane.f32.xlu0 %v1102
        %v1104 = vpop.xlane.xlu0 %1103
        %v1105 = vsel %vm781, %v1097, 0.0
        %1106 = vadd.xlane.f32.xlu0 %v1105
        %v1107 = vpop.xlane.xlu0 %1106
        %v1108 = vsel %vm781, %v1099, 0.0
        %1109 = vadd.xlane.f32.xlu0 %v1108
        %v1110 = vpop.xlane.xlu0 %1109
        %v1111 = vsel %vm781, %v1101, 0.0
        %1112 = vadd.xlane.f32.xlu0 %v1111
        %v1113 = vpop.xlane.xlu0 %1112
        %v1114 = vrcp.pop %v1104
        %v1115 = vrcp.pop %v1107
        %v1116 = vrcp.pop %v1110
        %v1117 = vrcp.pop %v1113
        %v1118 = vmul.f32 %v1095, %v1114
        %v1119 = vmul.f32 %v1097, %v1115
        %v1120 = vmul.f32 %v1099, %v1116
        %v1121 = vmul.f32 %v1101, %v1117
        %v1123 = vsel %vm781, %v1118, 0
        %1125 = vmatprep.subr.mxu0 0.0
        %1126 = vmatpush1.msra.mxu0 %v754
        %1127 = vmatprep.subr.mxu0 0.0
        %1128 = vmatpush1.msra.mxu0 0.0
        %1129 = vmatprep.subr.mxu0 0.0
        %1130 = vmatpush1.msra.mxu0 0.0
        %1131 = vmatprep.subr.mxu0 0.0
        %1132 = vmatpush1.msra.mxu0 0.0
        %1133 = vmatprep.subr.mxu0 0.0
        %1134 = vmatpush1.msra.mxu0 0.0
        %1135 = vmatprep.subr.mxu0 0.0
        %1136 = vmatpush1.msra.mxu0 0.0
        %1137 = vmatprep.subr.mxu0 0.0
        %1138 = vmatpush1.msra.mxu0 0.0
        %1139 = vmatprep.subr.mxu0 0.0
        %1140 = vmatpush1.msra.mxu0 0.0
        %1141 = vmatprep.subr.mxu0 0.0
        %1142 = vmatpush1.msra.mxu0 0.0
        %1143 = vmatprep.subr.mxu0 0.0
        %1144 = vmatpush1.msra.mxu0 0.0
        %1145 = vmatprep.subr.mxu0 0.0
        %1146 = vmatpush1.msra.mxu0 0.0
        %1147 = vmatprep.subr.mxu0 0.0
        %1148 = vmatpush1.msra.mxu0 0.0
        %1149 = vmatprep.subr.mxu0 0.0
        %1150 = vmatpush1.msra.mxu0 0.0
        %1151 = vmatprep.subr.mxu0 0.0
        %1152 = vmatpush1.msra.mxu0 0.0
        %1153 = vmatprep.subr.mxu0 0.0
        %1154 = vmatpush1.msra.mxu0 0.0
        %1155 = vmatprep.subr.mxu0 0.0
        %1156 = vmatpush1.msra.mxu0 0.0
        %1157 = vmatprep.subr.mxu0 0.0
        %1158 = vmatpush1.msra.mxu0 0.0
        %1159 = vmatprep.subr.mxu0 0.0
        %1160 = vmatpush1.msra.mxu0 0.0
        %1161 = vmatprep.subr.mxu0 0.0
        %1162 = vmatpush1.msra.mxu0 0.0
        %1163 = vmatprep.subr.mxu0 0.0
        %1164 = vmatpush1.msra.mxu0 0.0
        %1165 = vmatprep.subr.mxu0 0.0
        %1166 = vmatpush1.msra.mxu0 0.0
        %1167 = vmatprep.subr.mxu0 0.0
        %1168 = vmatpush1.msra.mxu0 0.0
        %1169 = vmatprep.subr.mxu0 0.0
        %1170 = vmatpush1.msra.mxu0 0.0
        %1171 = vmatprep.subr.mxu0 0.0
        %1172 = vmatpush1.msra.mxu0 0.0
        %1173 = vmatprep.subr.mxu0 0.0
        %1174 = vmatpush1.msra.mxu0 0.0
        %1175 = vmatprep.subr.mxu0 0.0
        %1176 = vmatpush1.msra.mxu0 0.0
        %1177 = vmatprep.subr.mxu0 0.0
        %1178 = vmatpush1.msra.mxu0 0.0
        %1179 = vmatprep.subr.mxu0 0.0
        %1180 = vmatpush1.msra.mxu0 0.0
        %1181 = vmatprep.subr.mxu0 0.0
        %1182 = vmatpush1.msra.mxu0 0.0
        %1183 = vmatprep.subr.mxu0 0.0
        %1184 = vmatpush1.msra.mxu0 0.0
        %1185 = vmatprep.subr.mxu0 0.0
        %1186 = vmatpush1.msra.mxu0 0.0
        %1187 = vmatprep.subr.mxu0 0.0
        %1188 = vmatpush1.msra.mxu0 0.0
        %1189 = vmatprep.mubr.f32.mxu0 0.0
        %1190 = vmatmul.mubr.f32.gmra.mrb[0].mxu0 %v1123
        %v1191 = vpop.f32.mrb[0].mxu0
        %v1192 = vadd.f32 0.0, %v1191
        %v1193 = vpop.f32.mrb[0].mxu0
        %1194 = vdwg.mxu0
        %v1196 = vsel %vm781, %v1119, 0
        %1198 = vmatprep.subr.mxu0 0.0
        %1199 = vmatpush1.msra.mxu0 %v773
        %1200 = vmatprep.subr.mxu0 0.0
        %1201 = vmatpush1.msra.mxu0 0.0
        %1202 = vmatprep.subr.mxu0 0.0
        %1203 = vmatpush1.msra.mxu0 0.0
        %1204 = vmatprep.subr.mxu0 0.0
        %1205 = vmatpush1.msra.mxu0 0.0
        %1206 = vmatprep.subr.mxu0 0.0
        %1207 = vmatpush1.msra.mxu0 0.0
        %1208 = vmatprep.subr.mxu0 0.0
        %1209 = vmatpush1.msra.mxu0 0.0
        %1210 = vmatprep.subr.mxu0 0.0
        %1211 = vmatpush1.msra.mxu0 0.0
        %1212 = vmatprep.subr.mxu0 0.0
        %1213 = vmatpush1.msra.mxu0 0.0
        %1214 = vmatprep.subr.mxu0 0.0
        %1215 = vmatpush1.msra.mxu0 0.0
        %1216 = vmatprep.subr.mxu0 0.0
        %1217 = vmatpush1.msra.mxu0 0.0
        %1218 = vmatprep.subr.mxu0 0.0
        %1219 = vmatpush1.msra.mxu0 0.0
        %1220 = vmatprep.subr.mxu0 0.0
        %1221 = vmatpush1.msra.mxu0 0.0
        %1222 = vmatprep.subr.mxu0 0.0
        %1223 = vmatpush1.msra.mxu0 0.0
        %1224 = vmatprep.subr.mxu0 0.0
        %1225 = vmatpush1.msra.mxu0 0.0
        %1226 = vmatprep.subr.mxu0 0.0
        %1227 = vmatpush1.msra.mxu0 0.0
        %1228 = vmatprep.subr.mxu0 0.0
        %1229 = vmatpush1.msra.mxu0 0.0
        %1230 = vmatprep.subr.mxu0 0.0
        %1231 = vmatpush1.msra.mxu0 0.0
        %1232 = vmatprep.subr.mxu0 0.0
        %1233 = vmatpush1.msra.mxu0 0.0
        %1234 = vmatprep.subr.mxu0 0.0
        %1235 = vmatpush1.msra.mxu0 0.0
        %1236 = vmatprep.subr.mxu0 0.0
        %1237 = vmatpush1.msra.mxu0 0.0
        %1238 = vmatprep.subr.mxu0 0.0
        %1239 = vmatpush1.msra.mxu0 0.0
        %1240 = vmatprep.subr.mxu0 0.0
        %1241 = vmatpush1.msra.mxu0 0.0
        %1242 = vmatprep.subr.mxu0 0.0
        %1243 = vmatpush1.msra.mxu0 0.0
        %1244 = vmatprep.subr.mxu0 0.0
        %1245 = vmatpush1.msra.mxu0 0.0
        %1246 = vmatprep.subr.mxu0 0.0
        %1247 = vmatpush1.msra.mxu0 0.0
        %1248 = vmatprep.subr.mxu0 0.0
        %1249 = vmatpush1.msra.mxu0 0.0
        %1250 = vmatprep.subr.mxu0 0.0
        %1251 = vmatpush1.msra.mxu0 0.0
        %1252 = vmatprep.subr.mxu0 0.0
        %1253 = vmatpush1.msra.mxu0 0.0
        %1254 = vmatprep.subr.mxu0 0.0
        %1255 = vmatpush1.msra.mxu0 0.0
        %1256 = vmatprep.subr.mxu0 0.0
        %1257 = vmatpush1.msra.mxu0 0.0
        %1258 = vmatprep.subr.mxu0 0.0
        %1259 = vmatpush1.msra.mxu0 0.0
        %1260 = vmatprep.subr.mxu0 0.0
        %1261 = vmatpush1.msra.mxu0 0.0
        %1262 = vmatprep.mubr.f32.mxu0 0.0
        %1263 = vmatmul.mubr.f32.gmra.mrb[0].mxu0 %v1196
        %v1264 = vpop.f32.mrb[0].mxu0
        %v1265 = vadd.f32 0.0, %v1264
        %v1266 = vpop.f32.mrb[0].mxu0
        %1267 = vdwg.mxu0
        %v1269 = vsel %vm781, %v1120, 0
        %1271 = vmatprep.subr.mxu0 0.0
        %1272 = vmatpush1.msra.mxu0 %v776
        %1273 = vmatprep.subr.mxu0 0.0
        %1274 = vmatpush1.msra.mxu0 0.0
        %1275 = vmatprep.subr.mxu0 0.0
        %1276 = vmatpush1.msra.mxu0 0.0
        %1277 = vmatprep.subr.mxu0 0.0
        %1278 = vmatpush1.msra.mxu0 0.0
        %1279 = vmatprep.subr.mxu0 0.0
        %1280 = vmatpush1.msra.mxu0 0.0
        %1281 = vmatprep.subr.mxu0 0.0
        %1282 = vmatpush1.msra.mxu0 0.0
        %1283 = vmatprep.subr.mxu0 0.0
        %1284 = vmatpush1.msra.mxu0 0.0
        %1285 = vmatprep.subr.mxu0 0.0
        %1286 = vmatpush1.msra.mxu0 0.0
        %1287 = vmatprep.subr.mxu0 0.0
        %1288 = vmatpush1.msra.mxu0 0.0
        %1289 = vmatprep.subr.mxu0 0.0
        %1290 = vmatpush1.msra.mxu0 0.0
        %1291 = vmatprep.subr.mxu0 0.0
        %1292 = vmatpush1.msra.mxu0 0.0
        %1293 = vmatprep.subr.mxu0 0.0
        %1294 = vmatpush1.msra.mxu0 0.0
        %1295 = vmatprep.subr.mxu0 0.0
        %1296 = vmatpush1.msra.mxu0 0.0
        %1297 = vmatprep.subr.mxu0 0.0
        %1298 = vmatpush1.msra.mxu0 0.0
        %1299 = vmatprep.subr.mxu0 0.0
        %1300 = vmatpush1.msra.mxu0 0.0
        %1301 = vmatprep.subr.mxu0 0.0
        %1302 = vmatpush1.msra.mxu0 0.0
        %1303 = vmatprep.subr.mxu0 0.0
        %1304 = vmatpush1.msra.mxu0 0.0
        %1305 = vmatprep.subr.mxu0 0.0
        %1306 = vmatpush1.msra.mxu0 0.0
        %1307 = vmatprep.subr.mxu0 0.0
        %1308 = vmatpush1.msra.mxu0 0.0
        %1309 = vmatprep.subr.mxu0 0.0
        %1310 = vmatpush1.msra.mxu0 0.0
        %1311 = vmatprep.subr.mxu0 0.0
        %1312 = vmatpush1.msra.mxu0 0.0
        %1313 = vmatprep.subr.mxu0 0.0
        %1314 = vmatpush1.msra.mxu0 0.0
        %1315 = vmatprep.subr.mxu0 0.0
        %1316 = vmatpush1.msra.mxu0 0.0
        %1317 = vmatprep.subr.mxu0 0.0
        %1318 = vmatpush1.msra.mxu0 0.0
        %1319 = vmatprep.subr.mxu0 0.0
        %1320 = vmatpush1.msra.mxu0 0.0
        %1321 = vmatprep.subr.mxu0 0.0
        %1322 = vmatpush1.msra.mxu0 0.0
        %1323 = vmatprep.subr.mxu0 0.0
        %1324 = vmatpush1.msra.mxu0 0.0
        %1325 = vmatprep.subr.mxu0 0.0
        %1326 = vmatpush1.msra.mxu0 0.0
        %1327 = vmatprep.subr.mxu0 0.0
        %1328 = vmatpush1.msra.mxu0 0.0
        %1329 = vmatprep.subr.mxu0 0.0
        %1330 = vmatpush1.msra.mxu0 0.0
        %1331 = vmatprep.subr.mxu0 0.0
        %1332 = vmatpush1.msra.mxu0 0.0
        %1333 = vmatprep.subr.mxu0 0.0
        %1334 = vmatpush1.msra.mxu0 0.0
        %1335 = vmatprep.mubr.f32.mxu0 0.0
        %1336 = vmatmul.mubr.f32.gmra.mrb[0].mxu0 %v1269
        %v1337 = vpop.f32.mrb[0].mxu0
        %v1338 = vadd.f32 0.0, %v1337
        %v1339 = vpop.f32.mrb[0].mxu0
        %1340 = vdwg.mxu0
        %v1342 = vsel %vm781, %v1121, 0
        %1344 = vmatprep.subr.mxu0 0.0
        %1345 = vmatpush1.msra.mxu0 %v779
        %1346 = vmatprep.subr.mxu0 0.0
        %1347 = vmatpush1.msra.mxu0 0.0
        %1348 = vmatprep.subr.mxu0 0.0
        %1349 = vmatpush1.msra.mxu0 0.0
        %1350 = vmatprep.subr.mxu0 0.0
        %1351 = vmatpush1.msra.mxu0 0.0
        %1352 = vmatprep.subr.mxu0 0.0
        %1353 = vmatpush1.msra.mxu0 0.0
        %1354 = vmatprep.subr.mxu0 0.0
        %1355 = vmatpush1.msra.mxu0 0.0
        %1356 = vmatprep.subr.mxu0 0.0
        %1357 = vmatpush1.msra.mxu0 0.0
        %1358 = vmatprep.subr.mxu0 0.0
        %1359 = vmatpush1.msra.mxu0 0.0
        %1360 = vmatprep.subr.mxu0 0.0
        %1361 = vmatpush1.msra.mxu0 0.0
        %1362 = vmatprep.subr.mxu0 0.0
        %1363 = vmatpush1.msra.mxu0 0.0
        %1364 = vmatprep.subr.mxu0 0.0
        %1365 = vmatpush1.msra.mxu0 0.0
        %1366 = vmatprep.subr.mxu0 0.0
        %1367 = vmatpush1.msra.mxu0 0.0
        %1368 = vmatprep.subr.mxu0 0.0
        %1369 = vmatpush1.msra.mxu0 0.0
        %1370 = vmatprep.subr.mxu0 0.0
        %1371 = vmatpush1.msra.mxu0 0.0
        %1372 = vmatprep.subr.mxu0 0.0
        %1373 = vmatpush1.msra.mxu0 0.0
        %1374 = vmatprep.subr.mxu0 0.0
        %1375 = vmatpush1.msra.mxu0 0.0
        %1376 = vmatprep.subr.mxu0 0.0
        %1377 = vmatpush1.msra.mxu0 0.0
        %1378 = vmatprep.subr.mxu0 0.0
        %1379 = vmatpush1.msra.mxu0 0.0
        %1380 = vmatprep.subr.mxu0 0.0
        %1381 = vmatpush1.msra.mxu0 0.0
        %1382 = vmatprep.subr.mxu0 0.0
        %1383 = vmatpush1.msra.mxu0 0.0
        %1384 = vmatprep.subr.mxu0 0.0
        %1385 = vmatpush1.msra.mxu0 0.0
        %1386 = vmatprep.subr.mxu0 0.0
        %1387 = vmatpush1.msra.mxu0 0.0
        %1388 = vmatprep.subr.mxu0 0.0
        %1389 = vmatpush1.msra.mxu0 0.0
        %1390 = vmatprep.subr.mxu0 0.0
        %1391 = vmatpush1.msra.mxu0 0.0
        %1392 = vmatprep.subr.mxu0 0.0
        %1393 = vmatpush1.msra.mxu0 0.0
        %1394 = vmatprep.subr.mxu0 0.0
        %1395 = vmatpush1.msra.mxu0 0.0
        %1396 = vmatprep.subr.mxu0 0.0
        %1397 = vmatpush1.msra.mxu0 0.0
        %1398 = vmatprep.subr.mxu0 0.0
        %1399 = vmatpush1.msra.mxu0 0.0
        %1400 = vmatprep.subr.mxu0 0.0
        %1401 = vmatpush1.msra.mxu0 0.0
        %1402 = vmatprep.subr.mxu0 0.0
        %1403 = vmatpush1.msra.mxu0 0.0
        %1404 = vmatprep.subr.mxu0 0.0
        %1405 = vmatpush1.msra.mxu0 0.0
        %1406 = vmatprep.subr.mxu0 0.0
        %1407 = vmatpush1.msra.mxu0 0.0
        %1408 = vmatprep.mubr.f32.mxu0 0.0
        %1409 = vmatmul.mubr.f32.gmra.mrb[0].mxu0 %v1342
        %v1410 = vpop.f32.mrb[0].mxu0
        %v1411 = vadd.f32 0.0, %v1410
        %v1412 = vpop.f32.mrb[0].mxu0
        %1413 = vdwg.mxu0
        %1415 = vrot.lane.b32.xlu0 %v1265, 8
        %v1416 = vpop.permute.xlu0 %1415
        %1419 = vrot.lane.b32.xlu0 %v1338, 16
        %v1420 = vpop.permute.xlu0 %1419
        %1423 = vrot.lane.b32.xlu0 %v1411, 24
        %v1424 = vpop.permute.xlu0 %1423
        %v1426 = vsel %vm781, %v1192, %v1416
        %vm1427 = vcmask 130048
        %v1428 = vsel %vm1427, %v1426, %v1420
        %vm1429 = vcmask 195584
        %v1430 = vsel %vm1429, %v1428, %v1424
        %v1431 = vlaneseq
        %v1432 = vshrl.u32 %v1431, 7
        %v1433 = vsub.s32 3, %v1432
        %v1434 = vrot.slane %v506, %v1433
        %v1436 = vsel %vm532, %v1430, 0
        %1438 = vmatprep.subr.mxu0 0.0
        %1439 = vmatpush1.msra.mxu0 %v524
        %1440 = vmatprep.subr.mxu0 0.0
        %1441 = vmatpush1.msra.mxu0 %v525
        %1442 = vmatprep.subr.mxu0 0.0
        %1443 = vmatpush1.msra.mxu0 %v526
        %1444 = vmatprep.subr.mxu0 0.0
        %1445 = vmatpush1.msra.mxu0 %v527
        %1446 = vmatprep.subr.mxu0 0.0
        %1447 = vmatpush1.msra.mxu0 0.0
        %1448 = vmatprep.subr.mxu0 0.0
        %1449 = vmatpush1.msra.mxu0 0.0
        %1450 = vmatprep.subr.mxu0 0.0
        %1451 = vmatpush1.msra.mxu0 0.0
        %1452 = vmatprep.subr.mxu0 0.0
        %1453 = vmatpush1.msra.mxu0 0.0
        %1454 = vmatprep.subr.mxu0 0.0
        %1455 = vmatpush1.msra.mxu0 0.0
        %1456 = vmatprep.subr.mxu0 0.0
        %1457 = vmatpush1.msra.mxu0 0.0
        %1458 = vmatprep.subr.mxu0 0.0
        %1459 = vmatpush1.msra.mxu0 0.0
        %1460 = vmatprep.subr.mxu0 0.0
        %1461 = vmatpush1.msra.mxu0 0.0
        %1462 = vmatprep.subr.mxu0 0.0
        %1463 = vmatpush1.msra.mxu0 0.0
        %1464 = vmatprep.subr.mxu0 0.0
        %1465 = vmatpush1.msra.mxu0 0.0
        %1466 = vmatprep.subr.mxu0 0.0
        %1467 = vmatpush1.msra.mxu0 0.0
        %1468 = vmatprep.subr.mxu0 0.0
        %1469 = vmatpush1.msra.mxu0 0.0
        %1470 = vmatprep.subr.mxu0 0.0
        %1471 = vmatpush1.msra.mxu0 0.0
        %1472 = vmatprep.subr.mxu0 0.0
        %1473 = vmatpush1.msra.mxu0 0.0
        %1474 = vmatprep.subr.mxu0 0.0
        %1475 = vmatpush1.msra.mxu0 0.0
        %1476 = vmatprep.subr.mxu0 0.0
        %1477 = vmatpush1.msra.mxu0 0.0
        %1478 = vmatprep.subr.mxu0 0.0
        %1479 = vmatpush1.msra.mxu0 0.0
        %1480 = vmatprep.subr.mxu0 0.0
        %1481 = vmatpush1.msra.mxu0 0.0
        %1482 = vmatprep.subr.mxu0 0.0
        %1483 = vmatpush1.msra.mxu0 0.0
        %1484 = vmatprep.subr.mxu0 0.0
        %1485 = vmatpush1.msra.mxu0 0.0
        %1486 = vmatprep.subr.mxu0 0.0
        %1487 = vmatpush1.msra.mxu0 0.0
        %1488 = vmatprep.subr.mxu0 0.0
        %1489 = vmatpush1.msra.mxu0 0.0
        %1490 = vmatprep.subr.mxu0 0.0
        %1491 = vmatpush1.msra.mxu0 0.0
        %1492 = vmatprep.subr.mxu0 0.0
        %1493 = vmatpush1.msra.mxu0 0.0
        %1494 = vmatprep.subr.mxu0 0.0
        %1495 = vmatpush1.msra.mxu0 0.0
        %1496 = vmatprep.subr.mxu0 0.0
        %1497 = vmatpush1.msra.mxu0 0.0
        %1498 = vmatprep.subr.mxu0 0.0
        %1499 = vmatpush1.msra.mxu0 0.0
        %1500 = vmatprep.subr.mxu0 0.0
        %1501 = vmatpush1.msra.mxu0 0.0
        %1502 = vmatprep.mubr.f32.mxu0 0.0
        %1503 = vmatmul.mubr.f32.gmra.mrb[0].mxu0 %v1436
        %v1504 = vpop.f32.mrb[0].mxu0
        %v1505 = vadd.f32 %v1434, %v1504
        %v1506 = vpop.f32.mrb[0].mxu0
        %1507 = vdwg.mxu0
        %v1508 = vadd.f32 %v500, %v1505
        %v1509 = vsel %vm532, %v1508, 0.0
        %1510 = vadd.xlane.f32.xlu0 %v1509
        %v1511 = vpop.xlane.xlu0 %1510
        %v1512 = vrcp.pop 32.0
        %v1513 = vmul.f32 %v1511, %v1512
        %v1514 = vsub.f32 %v1508, %v1513
        %v1515 = vmul.f32 %v1514, %v1514
        %v1516 = vsel %vm532, %v1515, 0.0
        %1517 = vadd.xlane.f32.xlu0 %v1516
        %v1518 = vpop.xlane.xlu0 %1517
        %v1519 = vmul.f32 %v1518, %v1512
        %v1520 = vadd.f32 %v1519, 1e-05
        %v1521 = vrsqrt.pop %v1520
        %v1522 = vmul.f32 %v1514, %v1521
        %v1523 = vlaneseq
        %v1524 = vshrl.u32 %v1523, 7
        %v1525 = vsub.s32 1, %v1524
        %v1526 = vrot.slane %v507, %v1525
        %v1527 = vmul.f32 %v1522, %v1526
        %v1528 = vlaneseq
        %v1529 = vshrl.u32 %v1528, 7
        %v1530 = vsub.s32 2, %v1529
        %v1531 = vrot.slane %v507, %v1530
        %v1532 = vadd.f32 %v1527, %v1531
        %v1533 = vadd.f32 %v1532, %v501
        %s1534 = scalar_lea.vmem %s392, 128 [#allocation3]
        %v1535 = vld [vmem:[%s1534] sm:$0xff]
        %v1536 = vld [vmem:[%s1534 + $0x8] sm:$0xff]
        %v1537 = vld [vmem:[%s1534 + $0x10] sm:$0xff]
        %v1538 = vld [vmem:[%s1534 + $0x18] sm:$0xff]
        %s1539 = scalar_lea.vmem %s392, 160 [#allocation3]
        %v1540 = vld [vmem:[%s1539] sm:$0xff]
        %v1541 = vld [vmem:[%s1539 + $0x8] sm:$0xff]
        %v1542 = vld [vmem:[%s1539 + $0x10] sm:$0xff]
        %v1543 = vld [vmem:[%s1539 + $0x18] sm:$0xff]
        %s1544 = scalar_lea.vmem %s392, 192 [#allocation3]
        %v1545 = vld [vmem:[%s1544] sm:$0xff]
        %v1546 = vld [vmem:[%s1544 + $0x8] sm:$0xff]
        %v1547 = vld [vmem:[%s1544 + $0x10] sm:$0xff]
        %v1548 = vld [vmem:[%s1544 + $0x18] sm:$0xff]
        %s1549 = scalar_lea.vmem %s392, 224 [#allocation3]
        %v1550 = vld [vmem:[%s1549] sm:$0xff]
        %v1551 = vld [vmem:[%s1549 + $0x8] sm:$0xff]
        %v1552 = vld [vmem:[%s1549 + $0x10] sm:$0xff]
        %v1553 = vld [vmem:[%s1549 + $0x18] sm:$0xff]
        %v1554 = vlaneseq
        %v1555 = vshrl.u32 %v1554, 7
        %v1556 = vsub.s32 4, %v1555
        %v1557 = vrot.slane %v506, %v1556
        %v1559 = vsel %vm532, %v1533, 0
        %1561 = vmatprep.subr.mxu0 0.0
        %1562 = vmatpush1.msra.mxu0 %v1535
        %1563 = vmatprep.subr.mxu0 0.0
        %1564 = vmatpush1.msra.mxu0 %v1536
        %1565 = vmatprep.subr.mxu0 0.0
        %1566 = vmatpush1.msra.mxu0 %v1537
        %1567 = vmatprep.subr.mxu0 0.0
        %1568 = vmatpush1.msra.mxu0 %v1538
        %1569 = vmatprep.subr.mxu0 0.0
        %1570 = vmatpush1.msra.mxu0 0.0
        %1571 = vmatprep.subr.mxu0 0.0
        %1572 = vmatpush1.msra.mxu0 0.0
        %1573 = vmatprep.subr.mxu0 0.0
        %1574 = vmatpush1.msra.mxu0 0.0
        %1575 = vmatprep.subr.mxu0 0.0
        %1576 = vmatpush1.msra.mxu0 0.0
        %1577 = vmatprep.subr.mxu0 0.0
        %1578 = vmatpush1.msra.mxu0 0.0
        %1579 = vmatprep.subr.mxu0 0.0
        %1580 = vmatpush1.msra.mxu0 0.0
        %1581 = vmatprep.subr.mxu0 0.0
        %1582 = vmatpush1.msra.mxu0 0.0
        %1583 = vmatprep.subr.mxu0 0.0
        %1584 = vmatpush1.msra.mxu0 0.0
        %1585 = vmatprep.subr.mxu0 0.0
        %1586 = vmatpush1.msra.mxu0 0.0
        %1587 = vmatprep.subr.mxu0 0.0
        %1588 = vmatpush1.msra.mxu0 0.0
        %1589 = vmatprep.subr.mxu0 0.0
        %1590 = vmatpush1.msra.mxu0 0.0
        %1591 = vmatprep.subr.mxu0 0.0
        %1592 = vmatpush1.msra.mxu0 0.0
        %1593 = vmatprep.subr.mxu0 0.0
        %1594 = vmatpush1.msra.mxu0 0.0
        %1595 = vmatprep.subr.mxu0 0.0
        %1596 = vmatpush1.msra.mxu0 0.0
        %1597 = vmatprep.subr.mxu0 0.0
        %1598 = vmatpush1.msra.mxu0 0.0
        %1599 = vmatprep.subr.mxu0 0.0
        %1600 = vmatpush1.msra.mxu0 0.0
        %1601 = vmatprep.subr.mxu0 0.0
        %1602 = vmatpush1.msra.mxu0 0.0
        %1603 = vmatprep.subr.mxu0 0.0
        %1604 = vmatpush1.msra.mxu0 0.0
        %1605 = vmatprep.subr.mxu0 0.0
        %1606 = vmatpush1.msra.mxu0 0.0
        %1607 = vmatprep.subr.mxu0 0.0
        %1608 = vmatpush1.msra.mxu0 0.0
        %1609 = vmatprep.subr.mxu0 0.0
        %1610 = vmatpush1.msra.mxu0 0.0
        %1611 = vmatprep.subr.mxu0 0.0
        %1612 = vmatpush1.msra.mxu0 0.0
        %1613 = vmatprep.subr.mxu0 0.0
        %1614 = vmatpush1.msra.mxu0 0.0
        %1615 = vmatprep.subr.mxu0 0.0
        %1616 = vmatpush1.msra.mxu0 0.0
        %1617 = vmatprep.subr.mxu0 0.0
        %1618 = vmatpush1.msra.mxu0 0.0
        %1619 = vmatprep.subr.mxu0 0.0
        %1620 = vmatpush1.msra.mxu0 0.0
        %1621 = vmatprep.subr.mxu0 0.0
        %1622 = vmatpush1.msra.mxu0 0.0
        %1623 = vmatprep.subr.mxu0 0.0
        %1624 = vmatpush1.msra.mxu0 0.0
        %1625 = vmatprep.mubr.f32.mxu0 0.0
        %1626 = vmatmul.mubr.f32.gmra.mrb[0].mxu0 %v1559
        %v1627 = vpop.f32.mrb[0].mxu0
        %v1628 = vadd.f32 %v1557, %v1627
        %v1629 = vpop.f32.mrb[0].mxu0
        %1630 = vdwg.mxu0
        %v1631 = vlaneseq
        %v1632 = vshrl.u32 %v1631, 7
        %v1633 = vsub.s32 5, %v1632
        %v1634 = vrot.slane %v506, %v1633
        %v1636 = vsel %vm532, %v504, 0
        %v1639 = vsel %vm532, %v505, 0
        %1641 = vmatprep.subr.mxu0 0.0
        %1642 = vmatpush1.msra.mxu0 %v1540
        %1643 = vmatprep.subr.mxu0 0.0
        %1644 = vmatpush1.msra.mxu0 %v1541
        %1645 = vmatprep.subr.mxu0 0.0
        %1646 = vmatpush1.msra.mxu0 %v1542
        %1647 = vmatprep.subr.mxu0 0.0
        %1648 = vmatpush1.msra.mxu0 %v1543
        %1649 = vmatprep.subr.mxu0 0.0
        %1650 = vmatpush1.msra.mxu0 0.0
        %1651 = vmatprep.subr.mxu0 0.0
        %1652 = vmatpush1.msra.mxu0 0.0
        %1653 = vmatprep.subr.mxu0 0.0
        %1654 = vmatpush1.msra.mxu0 0.0
        %1655 = vmatprep.subr.mxu0 0.0
        %1656 = vmatpush1.msra.mxu0 0.0
        %1657 = vmatprep.subr.mxu0 0.0
        %1658 = vmatpush1.msra.mxu0 0.0
        %1659 = vmatprep.subr.mxu0 0.0
        %1660 = vmatpush1.msra.mxu0 0.0
        %1661 = vmatprep.subr.mxu0 0.0
        %1662 = vmatpush1.msra.mxu0 0.0
        %1663 = vmatprep.subr.mxu0 0.0
        %1664 = vmatpush1.msra.mxu0 0.0
        %1665 = vmatprep.subr.mxu0 0.0
        %1666 = vmatpush1.msra.mxu0 0.0
        %1667 = vmatprep.subr.mxu0 0.0
        %1668 = vmatpush1.msra.mxu0 0.0
        %1669 = vmatprep.subr.mxu0 0.0
        %1670 = vmatpush1.msra.mxu0 0.0
        %1671 = vmatprep.subr.mxu0 0.0
        %1672 = vmatpush1.msra.mxu0 0.0
        %1673 = vmatprep.subr.mxu0 0.0
        %1674 = vmatpush1.msra.mxu0 0.0
        %1675 = vmatprep.subr.mxu0 0.0
        %1676 = vmatpush1.msra.mxu0 0.0
        %1677 = vmatprep.subr.mxu0 0.0
        %1678 = vmatpush1.msra.mxu0 0.0
        %1679 = vmatprep.subr.mxu0 0.0
        %1680 = vmatpush1.msra.mxu0 0.0
        %1681 = vmatprep.subr.mxu0 0.0
        %1682 = vmatpush1.msra.mxu0 0.0
        %1683 = vmatprep.subr.mxu0 0.0
        %1684 = vmatpush1.msra.mxu0 0.0
        %1685 = vmatprep.subr.mxu0 0.0
        %1686 = vmatpush1.msra.mxu0 0.0
        %1687 = vmatprep.subr.mxu0 0.0
        %1688 = vmatpush1.msra.mxu0 0.0
        %1689 = vmatprep.subr.mxu0 0.0
        %1690 = vmatpush1.msra.mxu0 0.0
        %1691 = vmatprep.subr.mxu0 0.0
        %1692 = vmatpush1.msra.mxu0 0.0
        %1693 = vmatprep.subr.mxu0 0.0
        %1694 = vmatpush1.msra.mxu0 0.0
        %1695 = vmatprep.subr.mxu0 0.0
        %1696 = vmatpush1.msra.mxu0 0.0
        %1697 = vmatprep.subr.mxu0 0.0
        %1698 = vmatpush1.msra.mxu0 0.0
        %1699 = vmatprep.subr.mxu0 0.0
        %1700 = vmatpush1.msra.mxu0 0.0
        %1701 = vmatprep.subr.mxu0 0.0
        %1702 = vmatpush1.msra.mxu0 0.0
        %1703 = vmatprep.subr.mxu0 0.0
        %1704 = vmatpush1.msra.mxu0 0.0
        %1705 = vmatprep.mubr.f32.mxu0 0.0
        %1706 = vmatmul.mubr.f32.gmra.mrb[0].mxu0 %v1636
        %v1707 = vpop.f32.mrb[0].mxu0
        %v1708 = vadd.f32 %v1634, %v1707
        %v1709 = vpop.f32.mrb[0].mxu0
        %1710 = vmatprep.mubr.f32.mxu0 0.0
        %1711 = vmatmul.mubr.f32.gmra.mrb[0].mxu0 %v1639
        %v1712 = vpop.f32.mrb[0].mxu0
        %v1713 = vadd.f32 %v1634, %v1712
        %v1714 = vpop.f32.mrb[0].mxu0
        %1715 = vdwg.mxu0
        %v1716 = vlaneseq
        %v1717 = vshrl.u32 %v1716, 7
        %v1718 = vsub.s32 6, %v1717
        %v1719 = vrot.slane %v506, %v1718
        %v1721 = vsel %vm532, %v502, 0
        %v1724 = vsel %vm532, %v503, 0
        %1726 = vmatprep.subr.mxu0 0.0
        %1727 = vmatpush1.msra.mxu0 %v1545
        %1728 = vmatprep.subr.mxu0 0.0
        %1729 = vmatpush1.msra.mxu0 %v1546
        %1730 = vmatprep.subr.mxu0 0.0
        %1731 = vmatpush1.msra.mxu0 %v1547
        %1732 = vmatprep.subr.mxu0 0.0
        %1733 = vmatpush1.msra.mxu0 %v1548
        %1734 = vmatprep.subr.mxu0 0.0
        %1735 = vmatpush1.msra.mxu0 0.0
        %1736 = vmatprep.subr.mxu0 0.0
        %1737 = vmatpush1.msra.mxu0 0.0
        %1738 = vmatprep.subr.mxu0 0.0
        %1739 = vmatpush1.msra.mxu0 0.0
        %1740 = vmatprep.subr.mxu0 0.0
        %1741 = vmatpush1.msra.mxu0 0.0
        %1742 = vmatprep.subr.mxu0 0.0
        %1743 = vmatpush1.msra.mxu0 0.0
        %1744 = vmatprep.subr.mxu0 0.0
        %1745 = vmatpush1.msra.mxu0 0.0
        %1746 = vmatprep.subr.mxu0 0.0
        %1747 = vmatpush1.msra.mxu0 0.0
        %1748 = vmatprep.subr.mxu0 0.0
        %1749 = vmatpush1.msra.mxu0 0.0
        %1750 = vmatprep.subr.mxu0 0.0
        %1751 = vmatpush1.msra.mxu0 0.0
        %1752 = vmatprep.subr.mxu0 0.0
        %1753 = vmatpush1.msra.mxu0 0.0
        %1754 = vmatprep.subr.mxu0 0.0
        %1755 = vmatpush1.msra.mxu0 0.0
        %1756 = vmatprep.subr.mxu0 0.0
        %1757 = vmatpush1.msra.mxu0 0.0
        %1758 = vmatprep.subr.mxu0 0.0
        %1759 = vmatpush1.msra.mxu0 0.0
        %1760 = vmatprep.subr.mxu0 0.0
        %1761 = vmatpush1.msra.mxu0 0.0
        %1762 = vmatprep.subr.mxu0 0.0
        %1763 = vmatpush1.msra.mxu0 0.0
        %1764 = vmatprep.subr.mxu0 0.0
        %1765 = vmatpush1.msra.mxu0 0.0
        %1766 = vmatprep.subr.mxu0 0.0
        %1767 = vmatpush1.msra.mxu0 0.0
        %1768 = vmatprep.subr.mxu0 0.0
        %1769 = vmatpush1.msra.mxu0 0.0
        %1770 = vmatprep.subr.mxu0 0.0
        %1771 = vmatpush1.msra.mxu0 0.0
        %1772 = vmatprep.subr.mxu0 0.0
        %1773 = vmatpush1.msra.mxu0 0.0
        %1774 = vmatprep.subr.mxu0 0.0
        %1775 = vmatpush1.msra.mxu0 0.0
        %1776 = vmatprep.subr.mxu0 0.0
        %1777 = vmatpush1.msra.mxu0 0.0
        %1778 = vmatprep.subr.mxu0 0.0
        %1779 = vmatpush1.msra.mxu0 0.0
        %1780 = vmatprep.subr.mxu0 0.0
        %1781 = vmatpush1.msra.mxu0 0.0
        %1782 = vmatprep.subr.mxu0 0.0
        %1783 = vmatpush1.msra.mxu0 0.0
        %1784 = vmatprep.subr.mxu0 0.0
        %1785 = vmatpush1.msra.mxu0 0.0
        %1786 = vmatprep.subr.mxu0 0.0
        %1787 = vmatpush1.msra.mxu0 0.0
        %1788 = vmatprep.subr.mxu0 0.0
        %1789 = vmatpush1.msra.mxu0 0.0
        %1790 = vmatprep.mubr.f32.mxu0 0.0
        %1791 = vmatmul.mubr.f32.gmra.mrb[0].mxu0 %v1721
        %v1792 = vpop.f32.mrb[0].mxu0
        %v1793 = vadd.f32 %v1719, %v1792
        %v1794 = vpop.f32.mrb[0].mxu0
        %1795 = vmatprep.mubr.f32.mxu0 0.0
        %1796 = vmatmul.mubr.f32.gmra.mrb[0].mxu0 %v1724
        %v1797 = vpop.f32.mrb[0].mxu0
        %v1798 = vadd.f32 %v1719, %v1797
        %v1799 = vpop.f32.mrb[0].mxu0
        %1800 = vdwg.mxu0
        %1802 = vrot.lane.b32.xlu0 %v1628, 120
        %v1803 = vpop.permute.xlu0 %1802
        %1804 = vrot.lane.b32.xlu0 %v1628, 112
        %v1805 = vpop.permute.xlu0 %1804
        %1806 = vrot.lane.b32.xlu0 %v1628, 104
        %v1807 = vpop.permute.xlu0 %1806
        %1810 = vrot.lane.b32.xlu0 %v1708, 120
        %v1811 = vpop.permute.xlu0 %1810
        %1812 = vrot.lane.b32.xlu0 %v1713, 120
        %v1813 = vpop.permute.xlu0 %1812
        %1814 = vrot.lane.b32.xlu0 %v1708, 112
        %v1815 = vpop.permute.xlu0 %1814
        %1816 = vrot.lane.b32.xlu0 %v1713, 112
        %v1817 = vpop.permute.xlu0 %1816
        %1818 = vrot.lane.b32.xlu0 %v1708, 104
        %v1819 = vpop.permute.xlu0 %1818
        %1820 = vrot.lane.b32.xlu0 %v1713, 104
        %v1821 = vpop.permute.xlu0 %1820
        %1824 = vrot.lane.b32.xlu0 %v1793, 120
        %v1825 = vpop.permute.xlu0 %1824
        %1826 = vrot.lane.b32.xlu0 %v1798, 120
        %v1827 = vpop.permute.xlu0 %1826
        %1830 = vrot.lane.b32.xlu0 %v1793, 112
        %v1831 = vpop.permute.xlu0 %1830
        %1832 = vrot.lane.b32.xlu0 %v1798, 112
        %v1833 = vpop.permute.xlu0 %1832
        %1836 = vrot.lane.b32.xlu0 %v1793, 104
        %v1837 = vpop.permute.xlu0 %1836
        %1838 = vrot.lane.b32.xlu0 %v1798, 104
        %v1839 = vpop.permute.xlu0 %1838
        %v1842 = vsel %vm781, %v1628, 0
        %v1844 = vsel %vm781, %v1708, 0
        %v1846 = vsel %vm781, %v1713, 0
        %1848 = vmatprep.subr.mxu0 0.0
        %1849 = vmatpush1.xpose.msra.mxu0 %v1844
        %1850 = vmatprep.subr.mxu0 0.0
        %1851 = vmatpush1.xpose.msra.mxu0 %v1846
        %1852 = vmatprep.subr.mxu0 0.0
        %1853 = vmatpush1.xpose.msra.mxu0 0.0
        %1854 = vmatprep.subr.mxu0 0.0
        %1855 = vmatpush1.xpose.msra.mxu0 0.0
        %1856 = vmatprep.subr.mxu0 0.0
        %1857 = vmatpush1.xpose.msra.mxu0 0.0
        %1858 = vmatprep.subr.mxu0 0.0
        %1859 = vmatpush1.xpose.msra.mxu0 0.0
        %1860 = vmatprep.subr.mxu0 0.0
        %1861 = vmatpush1.xpose.msra.mxu0 0.0
        %1862 = vmatprep.subr.mxu0 0.0
        %1863 = vmatpush1.xpose.msra.mxu0 0.0
        %1864 = vmatprep.subr.mxu0 0.0
        %1865 = vmatpush1.xpose.msra.mxu0 0.0
        %1866 = vmatprep.subr.mxu0 0.0
        %1867 = vmatpush1.xpose.msra.mxu0 0.0
        %1868 = vmatprep.subr.mxu0 0.0
        %1869 = vmatpush1.xpose.msra.mxu0 0.0
        %1870 = vmatprep.subr.mxu0 0.0
        %1871 = vmatpush1.xpose.msra.mxu0 0.0
        %1872 = vmatprep.subr.mxu0 0.0
        %1873 = vmatpush1.xpose.msra.mxu0 0.0
        %1874 = vmatprep.subr.mxu0 0.0
        %1875 = vmatpush1.xpose.msra.mxu0 0.0
        %1876 = vmatprep.subr.mxu0 0.0
        %1877 = vmatpush1.xpose.msra.mxu0 0.0
        %1878 = vmatprep.subr.mxu0 0.0
        %1879 = vmatpush1.xpose.msra.mxu0 0.0
        %1880 = vmatprep.subr.mxu0 0.0
        %1881 = vmatpush1.xpose.msra.mxu0 0.0
        %1882 = vmatprep.subr.mxu0 0.0
        %1883 = vmatpush1.xpose.msra.mxu0 0.0
        %1884 = vmatprep.subr.mxu0 0.0
        %1885 = vmatpush1.xpose.msra.mxu0 0.0
        %1886 = vmatprep.subr.mxu0 0.0
        %1887 = vmatpush1.xpose.msra.mxu0 0.0
        %1888 = vmatprep.subr.mxu0 0.0
        %1889 = vmatpush1.xpose.msra.mxu0 0.0
        %1890 = vmatprep.subr.mxu0 0.0
        %1891 = vmatpush1.xpose.msra.mxu0 0.0
        %1892 = vmatprep.subr.mxu0 0.0
        %1893 = vmatpush1.xpose.msra.mxu0 0.0
        %1894 = vmatprep.subr.mxu0 0.0
        %1895 = vmatpush1.xpose.msra.mxu0 0.0
        %1896 = vmatprep.subr.mxu0 0.0
        %1897 = vmatpush1.xpose.msra.mxu0 0.0
        %1898 = vmatprep.subr.mxu0 0.0
        %1899 = vmatpush1.xpose.msra.mxu0 0.0
        %1900 = vmatprep.subr.mxu0 0.0
        %1901 = vmatpush1.xpose.msra.mxu0 0.0
        %1902 = vmatprep.subr.mxu0 0.0
        %1903 = vmatpush1.xpose.msra.mxu0 0.0
        %1904 = vmatprep.subr.mxu0 0.0
        %1905 = vmatpush1.xpose.msra.mxu0 0.0
        %1906 = vmatprep.subr.mxu0 0.0
        %1907 = vmatpush1.xpose.msra.mxu0 0.0
        %1908 = vmatprep.subr.mxu0 0.0
        %1909 = vmatpush1.xpose.msra.mxu0 0.0
        %1910 = vmatprep.subr.mxu0 0.0
        %1911 = vmatpush1.xpose.msra.mxu0 0.0
        %1912 = vmatprep.mubr.f32.mxu0 0.0
        %1913 = vmatmul.mubr.f32.gmra.mrb[0].mxu0 %v1842
        %v1914 = vpop.f32.mrb[0].mxu0
        %v1915 = vadd.f32 0.0, %v1914
        %v1916 = vpop.f32.mrb[0].mxu0
        %1917 = vdwg.mxu0
        %v1918 = vsel %vm781, %v1803, 0
        %v1920 = vsel %vm781, %v1811, 0
        %v1922 = vsel %vm781, %v1813, 0
        %1924 = vmatprep.subr.mxu0 0.0
        %1925 = vmatpush1.xpose.msra.mxu0 %v1920
        %1926 = vmatprep.subr.mxu0 0.0
        %1927 = vmatpush1.xpose.msra.mxu0 %v1922
        %1928 = vmatprep.subr.mxu0 0.0
        %1929 = vmatpush1.xpose.msra.mxu0 0.0
        %1930 = vmatprep.subr.mxu0 0.0
        %1931 = vmatpush1.xpose.msra.mxu0 0.0
        %1932 = vmatprep.subr.mxu0 0.0
        %1933 = vmatpush1.xpose.msra.mxu0 0.0
        %1934 = vmatprep.subr.mxu0 0.0
        %1935 = vmatpush1.xpose.msra.mxu0 0.0
        %1936 = vmatprep.subr.mxu0 0.0
        %1937 = vmatpush1.xpose.msra.mxu0 0.0
        %1938 = vmatprep.subr.mxu0 0.0
        %1939 = vmatpush1.xpose.msra.mxu0 0.0
        %1940 = vmatprep.subr.mxu0 0.0
        %1941 = vmatpush1.xpose.msra.mxu0 0.0
        %1942 = vmatprep.subr.mxu0 0.0
        %1943 = vmatpush1.xpose.msra.mxu0 0.0
        %1944 = vmatprep.subr.mxu0 0.0
        %1945 = vmatpush1.xpose.msra.mxu0 0.0
        %1946 = vmatprep.subr.mxu0 0.0
        %1947 = vmatpush1.xpose.msra.mxu0 0.0
        %1948 = vmatprep.subr.mxu0 0.0
        %1949 = vmatpush1.xpose.msra.mxu0 0.0
        %1950 = vmatprep.subr.mxu0 0.0
        %1951 = vmatpush1.xpose.msra.mxu0 0.0
        %1952 = vmatprep.subr.mxu0 0.0
        %1953 = vmatpush1.xpose.msra.mxu0 0.0
        %1954 = vmatprep.subr.mxu0 0.0
        %1955 = vmatpush1.xpose.msra.mxu0 0.0
        %1956 = vmatprep.subr.mxu0 0.0
        %1957 = vmatpush1.xpose.msra.mxu0 0.0
        %1958 = vmatprep.subr.mxu0 0.0
        %1959 = vmatpush1.xpose.msra.mxu0 0.0
        %1960 = vmatprep.subr.mxu0 0.0
        %1961 = vmatpush1.xpose.msra.mxu0 0.0
        %1962 = vmatprep.subr.mxu0 0.0
        %1963 = vmatpush1.xpose.msra.mxu0 0.0
        %1964 = vmatprep.subr.mxu0 0.0
        %1965 = vmatpush1.xpose.msra.mxu0 0.0
        %1966 = vmatprep.subr.mxu0 0.0
        %1967 = vmatpush1.xpose.msra.mxu0 0.0
        %1968 = vmatprep.subr.mxu0 0.0
        %1969 = vmatpush1.xpose.msra.mxu0 0.0
        %1970 = vmatprep.subr.mxu0 0.0
        %1971 = vmatpush1.xpose.msra.mxu0 0.0
        %1972 = vmatprep.subr.mxu0 0.0
        %1973 = vmatpush1.xpose.msra.mxu0 0.0
        %1974 = vmatprep.subr.mxu0 0.0
        %1975 = vmatpush1.xpose.msra.mxu0 0.0
        %1976 = vmatprep.subr.mxu0 0.0
        %1977 = vmatpush1.xpose.msra.mxu0 0.0
        %1978 = vmatprep.subr.mxu0 0.0
        %1979 = vmatpush1.xpose.msra.mxu0 0.0
        %1980 = vmatprep.subr.mxu0 0.0
        %1981 = vmatpush1.xpose.msra.mxu0 0.0
        %1982 = vmatprep.subr.mxu0 0.0
        %1983 = vmatpush1.xpose.msra.mxu0 0.0
        %1984 = vmatprep.subr.mxu0 0.0
        %1985 = vmatpush1.xpose.msra.mxu0 0.0
        %1986 = vmatprep.subr.mxu0 0.0
        %1987 = vmatpush1.xpose.msra.mxu0 0.0
        %1988 = vmatprep.mubr.f32.mxu0 0.0
        %1989 = vmatmul.mubr.f32.gmra.mrb[0].mxu0 %v1918
        %v1990 = vpop.f32.mrb[0].mxu0
        %v1991 = vadd.f32 0.0, %v1990
        %v1992 = vpop.f32.mrb[0].mxu0
        %1993 = vdwg.mxu0
        %v1994 = vsel %vm781, %v1805, 0
        %v1996 = vsel %vm781, %v1815, 0
        %v1998 = vsel %vm781, %v1817, 0
        %2000 = vmatprep.subr.mxu0 0.0
        %2001 = vmatpush1.xpose.msra.mxu0 %v1996
        %2002 = vmatprep.subr.mxu0 0.0
        %2003 = vmatpush1.xpose.msra.mxu0 %v1998
        %2004 = vmatprep.subr.mxu0 0.0
        %2005 = vmatpush1.xpose.msra.mxu0 0.0
        %2006 = vmatprep.subr.mxu0 0.0
        %2007 = vmatpush1.xpose.msra.mxu0 0.0
        %2008 = vmatprep.subr.mxu0 0.0
        %2009 = vmatpush1.xpose.msra.mxu0 0.0
        %2010 = vmatprep.subr.mxu0 0.0
        %2011 = vmatpush1.xpose.msra.mxu0 0.0
        %2012 = vmatprep.subr.mxu0 0.0
        %2013 = vmatpush1.xpose.msra.mxu0 0.0
        %2014 = vmatprep.subr.mxu0 0.0
        %2015 = vmatpush1.xpose.msra.mxu0 0.0
        %2016 = vmatprep.subr.mxu0 0.0
        %2017 = vmatpush1.xpose.msra.mxu0 0.0
        %2018 = vmatprep.subr.mxu0 0.0
        %2019 = vmatpush1.xpose.msra.mxu0 0.0
        %2020 = vmatprep.subr.mxu0 0.0
        %2021 = vmatpush1.xpose.msra.mxu0 0.0
        %2022 = vmatprep.subr.mxu0 0.0
        %2023 = vmatpush1.xpose.msra.mxu0 0.0
        %2024 = vmatprep.subr.mxu0 0.0
        %2025 = vmatpush1.xpose.msra.mxu0 0.0
        %2026 = vmatprep.subr.mxu0 0.0
        %2027 = vmatpush1.xpose.msra.mxu0 0.0
        %2028 = vmatprep.subr.mxu0 0.0
        %2029 = vmatpush1.xpose.msra.mxu0 0.0
        %2030 = vmatprep.subr.mxu0 0.0
        %2031 = vmatpush1.xpose.msra.mxu0 0.0
        %2032 = vmatprep.subr.mxu0 0.0
        %2033 = vmatpush1.xpose.msra.mxu0 0.0
        %2034 = vmatprep.subr.mxu0 0.0
        %2035 = vmatpush1.xpose.msra.mxu0 0.0
        %2036 = vmatprep.subr.mxu0 0.0
        %2037 = vmatpush1.xpose.msra.mxu0 0.0
        %2038 = vmatprep.subr.mxu0 0.0
        %2039 = vmatpush1.xpose.msra.mxu0 0.0
        %2040 = vmatprep.subr.mxu0 0.0
        %2041 = vmatpush1.xpose.msra.mxu0 0.0
        %2042 = vmatprep.subr.mxu0 0.0
        %2043 = vmatpush1.xpose.msra.mxu0 0.0
        %2044 = vmatprep.subr.mxu0 0.0
        %2045 = vmatpush1.xpose.msra.mxu0 0.0
        %2046 = vmatprep.subr.mxu0 0.0
        %2047 = vmatpush1.xpose.msra.mxu0 0.0
        %2048 = vmatprep.subr.mxu0 0.0
        %2049 = vmatpush1.xpose.msra.mxu0 0.0
        %2050 = vmatprep.subr.mxu0 0.0
        %2051 = vmatpush1.xpose.msra.mxu0 0.0
        %2052 = vmatprep.subr.mxu0 0.0
        %2053 = vmatpush1.xpose.msra.mxu0 0.0
        %2054 = vmatprep.subr.mxu0 0.0
        %2055 = vmatpush1.xpose.msra.mxu0 0.0
        %2056 = vmatprep.subr.mxu0 0.0
        %2057 = vmatpush1.xpose.msra.mxu0 0.0
        %2058 = vmatprep.subr.mxu0 0.0
        %2059 = vmatpush1.xpose.msra.mxu0 0.0
        %2060 = vmatprep.subr.mxu0 0.0
        %2061 = vmatpush1.xpose.msra.mxu0 0.0
        %2062 = vmatprep.subr.mxu0 0.0
        %2063 = vmatpush1.xpose.msra.mxu0 0.0
        %2064 = vmatprep.mubr.f32.mxu0 0.0
        %2065 = vmatmul.mubr.f32.gmra.mrb[0].mxu0 %v1994
        %v2066 = vpop.f32.mrb[0].mxu0
        %v2067 = vadd.f32 0.0, %v2066
        %v2068 = vpop.f32.mrb[0].mxu0
        %2069 = vdwg.mxu0
        %v2070 = vsel %vm781, %v1807, 0
        %v2072 = vsel %vm781, %v1819, 0
        %v2074 = vsel %vm781, %v1821, 0
        %2076 = vmatprep.subr.mxu0 0.0
        %2077 = vmatpush1.xpose.msra.mxu0 %v2072
        %2078 = vmatprep.subr.mxu0 0.0
        %2079 = vmatpush1.xpose.msra.mxu0 %v2074
        %2080 = vmatprep.subr.mxu0 0.0
        %2081 = vmatpush1.xpose.msra.mxu0 0.0
        %2082 = vmatprep.subr.mxu0 0.0
        %2083 = vmatpush1.xpose.msra.mxu0 0.0
        %2084 = vmatprep.subr.mxu0 0.0
        %2085 = vmatpush1.xpose.msra.mxu0 0.0
        %2086 = vmatprep.subr.mxu0 0.0
        %2087 = vmatpush1.xpose.msra.mxu0 0.0
        %2088 = vmatprep.subr.mxu0 0.0
        %2089 = vmatpush1.xpose.msra.mxu0 0.0
        %2090 = vmatprep.subr.mxu0 0.0
        %2091 = vmatpush1.xpose.msra.mxu0 0.0
        %2092 = vmatprep.subr.mxu0 0.0
        %2093 = vmatpush1.xpose.msra.mxu0 0.0
        %2094 = vmatprep.subr.mxu0 0.0
        %2095 = vmatpush1.xpose.msra.mxu0 0.0
        %2096 = vmatprep.subr.mxu0 0.0
        %2097 = vmatpush1.xpose.msra.mxu0 0.0
        %2098 = vmatprep.subr.mxu0 0.0
        %2099 = vmatpush1.xpose.msra.mxu0 0.0
        %2100 = vmatprep.subr.mxu0 0.0
        %2101 = vmatpush1.xpose.msra.mxu0 0.0
        %2102 = vmatprep.subr.mxu0 0.0
        %2103 = vmatpush1.xpose.msra.mxu0 0.0
        %2104 = vmatprep.subr.mxu0 0.0
        %2105 = vmatpush1.xpose.msra.mxu0 0.0
        %2106 = vmatprep.subr.mxu0 0.0
        %2107 = vmatpush1.xpose.msra.mxu0 0.0
        %2108 = vmatprep.subr.mxu0 0.0
        %2109 = vmatpush1.xpose.msra.mxu0 0.0
        %2110 = vmatprep.subr.mxu0 0.0
        %2111 = vmatpush1.xpose.msra.mxu0 0.0
        %2112 = vmatprep.subr.mxu0 0.0
        %2113 = vmatpush1.xpose.msra.mxu0 0.0
        %2114 = vmatprep.subr.mxu0 0.0
        %2115 = vmatpush1.xpose.msra.mxu0 0.0
        %2116 = vmatprep.subr.mxu0 0.0
        %2117 = vmatpush1.xpose.msra.mxu0 0.0
        %2118 = vmatprep.subr.mxu0 0.0
        %2119 = vmatpush1.xpose.msra.mxu0 0.0
        %2120 = vmatprep.subr.mxu0 0.0
        %2121 = vmatpush1.xpose.msra.mxu0 0.0
        %2122 = vmatprep.subr.mxu0 0.0
        %2123 = vmatpush1.xpose.msra.mxu0 0.0
        %2124 = vmatprep.subr.mxu0 0.0
        %2125 = vmatpush1.xpose.msra.mxu0 0.0
        %2126 = vmatprep.subr.mxu0 0.0
        %2127 = vmatpush1.xpose.msra.mxu0 0.0
        %2128 = vmatprep.subr.mxu0 0.0
        %2129 = vmatpush1.xpose.msra.mxu0 0.0
        %2130 = vmatprep.subr.mxu0 0.0
        %2131 = vmatpush1.xpose.msra.mxu0 0.0
        %2132 = vmatprep.subr.mxu0 0.0
        %2133 = vmatpush1.xpose.msra.mxu0 0.0
        %2134 = vmatprep.subr.mxu0 0.0
        %2135 = vmatpush1.xpose.msra.mxu0 0.0
        %2136 = vmatprep.subr.mxu0 0.0
        %2137 = vmatpush1.xpose.msra.mxu0 0.0
        %2138 = vmatprep.subr.mxu0 0.0
        %2139 = vmatpush1.xpose.msra.mxu0 0.0
        %2140 = vmatprep.mubr.f32.mxu0 0.0
        %2141 = vmatmul.mubr.f32.gmra.mrb[0].mxu0 %v2070
        %v2142 = vpop.f32.mrb[0].mxu0
        %v2143 = vadd.f32 0.0, %v2142
        %v2144 = vpop.f32.mrb[0].mxu0
        %2145 = vdwg.mxu0
        %v2146 = vsel %vm1427, %v1915, -inf
        %2147 = vmax.xlane.f32.xlu0 %v2146
        %v2148 = vpop.xlane.xlu0 %2147
        %v2149 = vsel %vm1427, %v1991, -inf
        %2150 = vmax.xlane.f32.xlu0 %v2149
        %v2151 = vpop.xlane.xlu0 %2150
        %v2152 = vsel %vm1427, %v2067, -inf
        %2153 = vmax.xlane.f32.xlu0 %v2152
        %v2154 = vpop.xlane.xlu0 %2153
        %v2155 = vsel %vm1427, %v2143, -inf
        %2156 = vmax.xlane.f32.xlu0 %v2155
        %v2157 = vpop.xlane.xlu0 %2156
        %v2158 = vsub.f32 %v1915, %v2148
        %v2159 = vsub.f32 %v1991, %v2151
        %v2160 = vsub.f32 %v2067, %v2154
        %v2161 = vsub.f32 %v2143, %v2157
        %v2162 = vmul.f32 %v2158, 1.442695
        %v2163 = vpow.pop %v2162
        %v2164 = vmul.f32 %v2159, 1.442695
        %v2165 = vpow.pop %v2164
        %v2166 = vmul.f32 %v2160, 1.442695
        %v2167 = vpow.pop %v2166
        %v2168 = vmul.f32 %v2161, 1.442695
        %v2169 = vpow.pop %v2168
        %v2170 = vsel %vm1427, %v2163, 0.0
        %2171 = vadd.xlane.f32.xlu0 %v2170
        %v2172 = vpop.xlane.xlu0 %2171
        %v2173 = vsel %vm1427, %v2165, 0.0
        %2174 = vadd.xlane.f32.xlu0 %v2173
        %v2175 = vpop.xlane.xlu0 %2174
        %v2176 = vsel %vm1427, %v2167, 0.0
        %2177 = vadd.xlane.f32.xlu0 %v2176
        %v2178 = vpop.xlane.xlu0 %2177
        %v2179 = vsel %vm1427, %v2169, 0.0
        %2180 = vadd.xlane.f32.xlu0 %v2179
        %v2181 = vpop.xlane.xlu0 %2180
        %v2182 = vrcp.pop %v2172
        %v2183 = vrcp.pop %v2175
        %v2184 = vrcp.pop %v2178
        %v2185 = vrcp.pop %v2181
        %v2186 = vmul.f32 %v2163, %v2182
        %v2187 = vmul.f32 %v2165, %v2183
        %v2188 = vmul.f32 %v2167, %v2184
        %v2189 = vmul.f32 %v2169, %v2185
        %v2191 = vsel %vm1427, %v2186, 0
        %2193 = vmatprep.subr.mxu0 0.0
        %2194 = vmatpush1.msra.mxu0 %v1793
        %2195 = vmatprep.subr.mxu0 0.0
        %2196 = vmatpush1.msra.mxu0 %v1798
        %2197 = vmatprep.subr.mxu0 0.0
        %2198 = vmatpush1.msra.mxu0 0.0
        %2199 = vmatprep.subr.mxu0 0.0
        %2200 = vmatpush1.msra.mxu0 0.0
        %2201 = vmatprep.subr.mxu0 0.0
        %2202 = vmatpush1.msra.mxu0 0.0
        %2203 = vmatprep.subr.mxu0 0.0
        %2204 = vmatpush1.msra.mxu0 0.0
        %2205 = vmatprep.subr.mxu0 0.0
        %2206 = vmatpush1.msra.mxu0 0.0
        %2207 = vmatprep.subr.mxu0 0.0
        %2208 = vmatpush1.msra.mxu0 0.0
        %2209 = vmatprep.subr.mxu0 0.0
        %2210 = vmatpush1.msra.mxu0 0.0
        %2211 = vmatprep.subr.mxu0 0.0
        %2212 = vmatpush1.msra.mxu0 0.0
        %2213 = vmatprep.subr.mxu0 0.0
        %2214 = vmatpush1.msra.mxu0 0.0
        %2215 = vmatprep.subr.mxu0 0.0
        %2216 = vmatpush1.msra.mxu0 0.0
        %2217 = vmatprep.subr.mxu0 0.0
        %2218 = vmatpush1.msra.mxu0 0.0
        %2219 = vmatprep.subr.mxu0 0.0
        %2220 = vmatpush1.msra.mxu0 0.0
        %2221 = vmatprep.subr.mxu0 0.0
        %2222 = vmatpush1.msra.mxu0 0.0
        %2223 = vmatprep.subr.mxu0 0.0
        %2224 = vmatpush1.msra.mxu0 0.0
        %2225 = vmatprep.subr.mxu0 0.0
        %2226 = vmatpush1.msra.mxu0 0.0
        %2227 = vmatprep.subr.mxu0 0.0
        %2228 = vmatpush1.msra.mxu0 0.0
        %2229 = vmatprep.subr.mxu0 0.0
        %2230 = vmatpush1.msra.mxu0 0.0
        %2231 = vmatprep.subr.mxu0 0.0
        %2232 = vmatpush1.msra.mxu0 0.0
        %2233 = vmatprep.subr.mxu0 0.0
        %2234 = vmatpush1.msra.mxu0 0.0
        %2235 = vmatprep.subr.mxu0 0.0
        %2236 = vmatpush1.msra.mxu0 0.0
        %2237 = vmatprep.subr.mxu0 0.0
        %2238 = vmatpush1.msra.mxu0 0.0
        %2239 = vmatprep.subr.mxu0 0.0
        %2240 = vmatpush1.msra.mxu0 0.0
        %2241 = vmatprep.subr.mxu0 0.0
        %2242 = vmatpush1.msra.mxu0 0.0
        %2243 = vmatprep.subr.mxu0 0.0
        %2244 = vmatpush1.msra.mxu0 0.0
        %2245 = vmatprep.subr.mxu0 0.0
        %2246 = vmatpush1.msra.mxu0 0.0
        %2247 = vmatprep.subr.mxu0 0.0
        %2248 = vmatpush1.msra.mxu0 0.0
        %2249 = vmatprep.subr.mxu0 0.0
        %2250 = vmatpush1.msra.mxu0 0.0
        %2251 = vmatprep.subr.mxu0 0.0
        %2252 = vmatpush1.msra.mxu0 0.0
        %2253 = vmatprep.subr.mxu0 0.0
        %2254 = vmatpush1.msra.mxu0 0.0
        %2255 = vmatprep.subr.mxu0 0.0
        %2256 = vmatpush1.msra.mxu0 0.0
        %2257 = vmatprep.mubr.f32.mxu0 0.0
        %2258 = vmatmul.mubr.f32.gmra.mrb[0].mxu0 %v2191
        %v2259 = vpop.f32.mrb[0].mxu0
        %v2260 = vadd.f32 0.0, %v2259
        %v2261 = vpop.f32.mrb[0].mxu0
        %2262 = vdwg.mxu0
        %v2264 = vsel %vm1427, %v2187, 0
        %2266 = vmatprep.subr.mxu0 0.0
        %2267 = vmatpush1.msra.mxu0 %v1825
        %2268 = vmatprep.subr.mxu0 0.0
        %2269 = vmatpush1.msra.mxu0 %v1827
        %2270 = vmatprep.subr.mxu0 0.0
        %2271 = vmatpush1.msra.mxu0 0.0
        %2272 = vmatprep.subr.mxu0 0.0
        %2273 = vmatpush1.msra.mxu0 0.0
        %2274 = vmatprep.subr.mxu0 0.0
        %2275 = vmatpush1.msra.mxu0 0.0
        %2276 = vmatprep.subr.mxu0 0.0
        %2277 = vmatpush1.msra.mxu0 0.0
        %2278 = vmatprep.subr.mxu0 0.0
        %2279 = vmatpush1.msra.mxu0 0.0
        %2280 = vmatprep.subr.mxu0 0.0
        %2281 = vmatpush1.msra.mxu0 0.0
        %2282 = vmatprep.subr.mxu0 0.0
        %2283 = vmatpush1.msra.mxu0 0.0
        %2284 = vmatprep.subr.mxu0 0.0
        %2285 = vmatpush1.msra.mxu0 0.0
        %2286 = vmatprep.subr.mxu0 0.0
        %2287 = vmatpush1.msra.mxu0 0.0
        %2288 = vmatprep.subr.mxu0 0.0
        %2289 = vmatpush1.msra.mxu0 0.0
        %2290 = vmatprep.subr.mxu0 0.0
        %2291 = vmatpush1.msra.mxu0 0.0
        %2292 = vmatprep.subr.mxu0 0.0
        %2293 = vmatpush1.msra.mxu0 0.0
        %2294 = vmatprep.subr.mxu0 0.0
        %2295 = vmatpush1.msra.mxu0 0.0
        %2296 = vmatprep.subr.mxu0 0.0
        %2297 = vmatpush1.msra.mxu0 0.0
        %2298 = vmatprep.subr.mxu0 0.0
        %2299 = vmatpush1.msra.mxu0 0.0
        %2300 = vmatprep.subr.mxu0 0.0
        %2301 = vmatpush1.msra.mxu0 0.0
        %2302 = vmatprep.subr.mxu0 0.0
        %2303 = vmatpush1.msra.mxu0 0.0
        %2304 = vmatprep.subr.mxu0 0.0
        %2305 = vmatpush1.msra.mxu0 0.0
        %2306 = vmatprep.subr.mxu0 0.0
        %2307 = vmatpush1.msra.mxu0 0.0
        %2308 = vmatprep.subr.mxu0 0.0
        %2309 = vmatpush1.msra.mxu0 0.0
        %2310 = vmatprep.subr.mxu0 0.0
        %2311 = vmatpush1.msra.mxu0 0.0
        %2312 = vmatprep.subr.mxu0 0.0
        %2313 = vmatpush1.msra.mxu0 0.0
        %2314 = vmatprep.subr.mxu0 0.0
        %2315 = vmatpush1.msra.mxu0 0.0
        %2316 = vmatprep.subr.mxu0 0.0
        %2317 = vmatpush1.msra.mxu0 0.0
        %2318 = vmatprep.subr.mxu0 0.0
        %2319 = vmatpush1.msra.mxu0 0.0
        %2320 = vmatprep.subr.mxu0 0.0
        %2321 = vmatpush1.msra.mxu0 0.0
        %2322 = vmatprep.subr.mxu0 0.0
        %2323 = vmatpush1.msra.mxu0 0.0
        %2324 = vmatprep.subr.mxu0 0.0
        %2325 = vmatpush1.msra.mxu0 0.0
        %2326 = vmatprep.subr.mxu0 0.0
        %2327 = vmatpush1.msra.mxu0 0.0
        %2328 = vmatprep.subr.mxu0 0.0
        %2329 = vmatpush1.msra.mxu0 0.0
        %2330 = vmatprep.mubr.f32.mxu0 0.0
        %2331 = vmatmul.mubr.f32.gmra.mrb[0].mxu0 %v2264
        %v2332 = vpop.f32.mrb[0].mxu0
        %v2333 = vadd.f32 0.0, %v2332
        %v2334 = vpop.f32.mrb[0].mxu0
        %2335 = vdwg.mxu0
        %v2337 = vsel %vm1427, %v2188, 0
        %2339 = vmatprep.subr.mxu0 0.0
        %2340 = vmatpush1.msra.mxu0 %v1831
        %2341 = vmatprep.subr.mxu0 0.0
        %2342 = vmatpush1.msra.mxu0 %v1833
        %2343 = vmatprep.subr.mxu0 0.0
        %2344 = vmatpush1.msra.mxu0 0.0
        %2345 = vmatprep.subr.mxu0 0.0
        %2346 = vmatpush1.msra.mxu0 0.0
        %2347 = vmatprep.subr.mxu0 0.0
        %2348 = vmatpush1.msra.mxu0 0.0
        %2349 = vmatprep.subr.mxu0 0.0
        %2350 = vmatpush1.msra.mxu0 0.0
        %2351 = vmatprep.subr.mxu0 0.0
        %2352 = vmatpush1.msra.mxu0 0.0
        %2353 = vmatprep.subr.mxu0 0.0
        %2354 = vmatpush1.msra.mxu0 0.0
        %2355 = vmatprep.subr.mxu0 0.0
        %2356 = vmatpush1.msra.mxu0 0.0
        %2357 = vmatprep.subr.mxu0 0.0
        %2358 = vmatpush1.msra.mxu0 0.0
        %2359 = vmatprep.subr.mxu0 0.0
        %2360 = vmatpush1.msra.mxu0 0.0
        %2361 = vmatprep.subr.mxu0 0.0
        %2362 = vmatpush1.msra.mxu0 0.0
        %2363 = vmatprep.subr.mxu0 0.0
        %2364 = vmatpush1.msra.mxu0 0.0
        %2365 = vmatprep.subr.mxu0 0.0
        %2366 = vmatpush1.msra.mxu0 0.0
        %2367 = vmatprep.subr.mxu0 0.0
        %2368 = vmatpush1.msra.mxu0 0.0
        %2369 = vmatprep.subr.mxu0 0.0
        %2370 = vmatpush1.msra.mxu0 0.0
        %2371 = vmatprep.subr.mxu0 0.0
        %2372 = vmatpush1.msra.mxu0 0.0
        %2373 = vmatprep.subr.mxu0 0.0
        %2374 = vmatpush1.msra.mxu0 0.0
        %2375 = vmatprep.subr.mxu0 0.0
        %2376 = vmatpush1.msra.mxu0 0.0
        %2377 = vmatprep.subr.mxu0 0.0
        %2378 = vmatpush1.msra.mxu0 0.0
        %2379 = vmatprep.subr.mxu0 0.0
        %2380 = vmatpush1.msra.mxu0 0.0
        %2381 = vmatprep.subr.mxu0 0.0
        %2382 = vmatpush1.msra.mxu0 0.0
        %2383 = vmatprep.subr.mxu0 0.0
        %2384 = vmatpush1.msra.mxu0 0.0
        %2385 = vmatprep.subr.mxu0 0.0
        %2386 = vmatpush1.msra.mxu0 0.0
        %2387 = vmatprep.subr.mxu0 0.0
        %2388 = vmatpush1.msra.mxu0 0.0
        %2389 = vmatprep.subr.mxu0 0.0
        %2390 = vmatpush1.msra.mxu0 0.0
        %2391 = vmatprep.subr.mxu0 0.0
        %2392 = vmatpush1.msra.mxu0 0.0
        %2393 = vmatprep.subr.mxu0 0.0
        %2394 = vmatpush1.msra.mxu0 0.0
        %2395 = vmatprep.subr.mxu0 0.0
        %2396 = vmatpush1.msra.mxu0 0.0
        %2397 = vmatprep.subr.mxu0 0.0
        %2398 = vmatpush1.msra.mxu0 0.0
        %2399 = vmatprep.subr.mxu0 0.0
        %2400 = vmatpush1.msra.mxu0 0.0
        %2401 = vmatprep.subr.mxu0 0.0
        %2402 = vmatpush1.msra.mxu0 0.0
        %2403 = vmatprep.mubr.f32.mxu0 0.0
        %2404 = vmatmul.mubr.f32.gmra.mrb[0].mxu0 %v2337
        %v2405 = vpop.f32.mrb[0].mxu0
        %v2406 = vadd.f32 0.0, %v2405
        %v2407 = vpop.f32.mrb[0].mxu0
        %2408 = vdwg.mxu0
        %v2410 = vsel %vm1427, %v2189, 0
        %2412 = vmatprep.subr.mxu0 0.0
        %2413 = vmatpush1.msra.mxu0 %v1837
        %2414 = vmatprep.subr.mxu0 0.0
        %2415 = vmatpush1.msra.mxu0 %v1839
        %2416 = vmatprep.subr.mxu0 0.0
        %2417 = vmatpush1.msra.mxu0 0.0
        %2418 = vmatprep.subr.mxu0 0.0
        %2419 = vmatpush1.msra.mxu0 0.0
        %2420 = vmatprep.subr.mxu0 0.0
        %2421 = vmatpush1.msra.mxu0 0.0
        %2422 = vmatprep.subr.mxu0 0.0
        %2423 = vmatpush1.msra.mxu0 0.0
        %2424 = vmatprep.subr.mxu0 0.0
        %2425 = vmatpush1.msra.mxu0 0.0
        %2426 = vmatprep.subr.mxu0 0.0
        %2427 = vmatpush1.msra.mxu0 0.0
        %2428 = vmatprep.subr.mxu0 0.0
        %2429 = vmatpush1.msra.mxu0 0.0
        %2430 = vmatprep.subr.mxu0 0.0
        %2431 = vmatpush1.msra.mxu0 0.0
        %2432 = vmatprep.subr.mxu0 0.0
        %2433 = vmatpush1.msra.mxu0 0.0
        %2434 = vmatprep.subr.mxu0 0.0
        %2435 = vmatpush1.msra.mxu0 0.0
        %2436 = vmatprep.subr.mxu0 0.0
        %2437 = vmatpush1.msra.mxu0 0.0
        %2438 = vmatprep.subr.mxu0 0.0
        %2439 = vmatpush1.msra.mxu0 0.0
        %2440 = vmatprep.subr.mxu0 0.0
        %2441 = vmatpush1.msra.mxu0 0.0
        %2442 = vmatprep.subr.mxu0 0.0
        %2443 = vmatpush1.msra.mxu0 0.0
        %2444 = vmatprep.subr.mxu0 0.0
        %2445 = vmatpush1.msra.mxu0 0.0
        %2446 = vmatprep.subr.mxu0 0.0
        %2447 = vmatpush1.msra.mxu0 0.0
        %2448 = vmatprep.subr.mxu0 0.0
        %2449 = vmatpush1.msra.mxu0 0.0
        %2450 = vmatprep.subr.mxu0 0.0
        %2451 = vmatpush1.msra.mxu0 0.0
        %2452 = vmatprep.subr.mxu0 0.0
        %2453 = vmatpush1.msra.mxu0 0.0
        %2454 = vmatprep.subr.mxu0 0.0
        %2455 = vmatpush1.msra.mxu0 0.0
        %2456 = vmatprep.subr.mxu0 0.0
        %2457 = vmatpush1.msra.mxu0 0.0
        %2458 = vmatprep.subr.mxu0 0.0
        %2459 = vmatpush1.msra.mxu0 0.0
        %2460 = vmatprep.subr.mxu0 0.0
        %2461 = vmatpush1.msra.mxu0 0.0
        %2462 = vmatprep.subr.mxu0 0.0
        %2463 = vmatpush1.msra.mxu0 0.0
        %2464 = vmatprep.subr.mxu0 0.0
        %2465 = vmatpush1.msra.mxu0 0.0
        %2466 = vmatprep.subr.mxu0 0.0
        %2467 = vmatpush1.msra.mxu0 0.0
        %2468 = vmatprep.subr.mxu0 0.0
        %2469 = vmatpush1.msra.mxu0 0.0
        %2470 = vmatprep.subr.mxu0 0.0
        %2471 = vmatpush1.msra.mxu0 0.0
        %2472 = vmatprep.subr.mxu0 0.0
        %2473 = vmatpush1.msra.mxu0 0.0
        %2474 = vmatprep.subr.mxu0 0.0
        %2475 = vmatpush1.msra.mxu0 0.0
        %2476 = vmatprep.mubr.f32.mxu0 0.0
        %2477 = vmatmul.mubr.f32.gmra.mrb[0].mxu0 %v2410
        %v2478 = vpop.f32.mrb[0].mxu0
        %v2479 = vadd.f32 0.0, %v2478
        %v2480 = vpop.f32.mrb[0].mxu0
        %2481 = vdwg.mxu0
        %2483 = vrot.lane.b32.xlu0 %v2333, 8
        %v2484 = vpop.permute.xlu0 %2483
        %2487 = vrot.lane.b32.xlu0 %v2406, 16
        %v2488 = vpop.permute.xlu0 %2487
        %2491 = vrot.lane.b32.xlu0 %v2479, 24
        %v2492 = vpop.permute.xlu0 %2491
        %v2494 = vsel %vm781, %v2260, %v2484
        %v2495 = vsel %vm1427, %v2494, %v2488
        %v2496 = vsel %vm1429, %v2495, %v2492
        %v2497 = vlaneseq
        %v2498 = vshrl.u32 %v2497, 7
        %v2499 = vsub.s32 7, %v2498
        %v2500 = vrot.slane %v506, %v2499
        %v2502 = vsel %vm532, %v2496, 0
        %2504 = vmatprep.subr.mxu0 0.0
        %2505 = vmatpush1.msra.mxu0 %v1550
        %2506 = vmatprep.subr.mxu0 0.0
        %2507 = vmatpush1.msra.mxu0 %v1551
        %2508 = vmatprep.subr.mxu0 0.0
        %2509 = vmatpush1.msra.mxu0 %v1552
        %2510 = vmatprep.subr.mxu0 0.0
        %2511 = vmatpush1.msra.mxu0 %v1553
        %2512 = vmatprep.subr.mxu0 0.0
        %2513 = vmatpush1.msra.mxu0 0.0
        %2514 = vmatprep.subr.mxu0 0.0
        %2515 = vmatpush1.msra.mxu0 0.0
        %2516 = vmatprep.subr.mxu0 0.0
        %2517 = vmatpush1.msra.mxu0 0.0
        %2518 = vmatprep.subr.mxu0 0.0
        %2519 = vmatpush1.msra.mxu0 0.0
        %2520 = vmatprep.subr.mxu0 0.0
        %2521 = vmatpush1.msra.mxu0 0.0
        %2522 = vmatprep.subr.mxu0 0.0
        %2523 = vmatpush1.msra.mxu0 0.0
        %2524 = vmatprep.subr.mxu0 0.0
        %2525 = vmatpush1.msra.mxu0 0.0
        %2526 = vmatprep.subr.mxu0 0.0
        %2527 = vmatpush1.msra.mxu0 0.0
        %2528 = vmatprep.subr.mxu0 0.0
        %2529 = vmatpush1.msra.mxu0 0.0
        %2530 = vmatprep.subr.mxu0 0.0
        %2531 = vmatpush1.msra.mxu0 0.0
        %2532 = vmatprep.subr.mxu0 0.0
        %2533 = vmatpush1.msra.mxu0 0.0
        %2534 = vmatprep.subr.mxu0 0.0
        %2535 = vmatpush1.msra.mxu0 0.0
        %2536 = vmatprep.subr.mxu0 0.0
        %2537 = vmatpush1.msra.mxu0 0.0
        %2538 = vmatprep.subr.mxu0 0.0
        %2539 = vmatpush1.msra.mxu0 0.0
        %2540 = vmatprep.subr.mxu0 0.0
        %2541 = vmatpush1.msra.mxu0 0.0
        %2542 = vmatprep.subr.mxu0 0.0
        %2543 = vmatpush1.msra.mxu0 0.0
        %2544 = vmatprep.subr.mxu0 0.0
        %2545 = vmatpush1.msra.mxu0 0.0
        %2546 = vmatprep.subr.mxu0 0.0
        %2547 = vmatpush1.msra.mxu0 0.0
        %2548 = vmatprep.subr.mxu0 0.0
        %2549 = vmatpush1.msra.mxu0 0.0
        %2550 = vmatprep.subr.mxu0 0.0
        %2551 = vmatpush1.msra.mxu0 0.0
        %2552 = vmatprep.subr.mxu0 0.0
        %2553 = vmatpush1.msra.mxu0 0.0
        %2554 = vmatprep.subr.mxu0 0.0
        %2555 = vmatpush1.msra.mxu0 0.0
        %2556 = vmatprep.subr.mxu0 0.0
        %2557 = vmatpush1.msra.mxu0 0.0
        %2558 = vmatprep.subr.mxu0 0.0
        %2559 = vmatpush1.msra.mxu0 0.0
        %2560 = vmatprep.subr.mxu0 0.0
        %2561 = vmatpush1.msra.mxu0 0.0
        %2562 = vmatprep.subr.mxu0 0.0
        %2563 = vmatpush1.msra.mxu0 0.0
        %2564 = vmatprep.subr.mxu0 0.0
        %2565 = vmatpush1.msra.mxu0 0.0
        %2566 = vmatprep.subr.mxu0 0.0
        %2567 = vmatpush1.msra.mxu0 0.0
        %2568 = vmatprep.mubr.f32.mxu0 0.0
        %2569 = vmatmul.mubr.f32.gmra.mrb[0].mxu0 %v2502
        %v2570 = vpop.f32.mrb[0].mxu0
        %v2571 = vadd.f32 %v2500, %v2570
        %v2572 = vpop.f32.mrb[0].mxu0
        %2573 = vdwg.mxu0
        %v2574 = vadd.f32 %v1532, %v2571
        %v2575 = vsel %vm532, %v2574, 0.0
        %2576 = vadd.xlane.f32.xlu0 %v2575
        %v2577 = vpop.xlane.xlu0 %2576
        %v2578 = vmul.f32 %v2577, %v1512
        %v2579 = vsub.f32 %v2574, %v2578
        %v2580 = vmul.f32 %v2579, %v2579
        %v2581 = vsel %vm532, %v2580, 0.0
        %2582 = vadd.xlane.f32.xlu0 %v2581
        %v2583 = vpop.xlane.xlu0 %2582
        %v2584 = vmul.f32 %v2583, %v1512
        %v2585 = vadd.f32 %v2584, 1e-05
        %v2586 = vrsqrt.pop %v2585
        %v2587 = vmul.f32 %v2579, %v2586
        %v2588 = vlaneseq
        %v2589 = vshrl.u32 %v2588, 7
        %v2590 = vsub.s32 3, %v2589
        %v2591 = vrot.slane %v507, %v2590
        %v2592 = vmul.f32 %v2587, %v2591
        %v2593 = vlaneseq
        %v2594 = vshrl.u32 %v2593, 7
        %v2595 = vsub.s32 4, %v2594
        %v2596 = vrot.slane %v507, %v2595
        %v2597 = vadd.f32 %v2592, %v2596
        %v2598 = vld [vmem:[%s481] sm:$0xff]
        %v2599 = vld [vmem:[%s481 + $0x8] sm:$0xff]
        %v2600 = vld [vmem:[%s481 + $0x10] sm:$0xff]
        %v2601 = vld [vmem:[%s481 + $0x18] sm:$0xff]
        %v2602 = vld [vmem:[%s484] sm:$0x1]
        %v2604 = vlaneseq
        %v2605 = vshrl.u32 %v2604, 7
        %v2606 = vsub.s32 0, %v2605
        %v2607 = vrot.slane %v2602, %v2606
        %v2610 = vsel %vm532, %v2597, 0
        %2612 = vmatprep.subr.mxu0 0.0
        %2613 = vmatpush1.msra.mxu0 %v2598
        %2614 = vmatprep.subr.mxu0 0.0
        %2615 = vmatpush1.msra.mxu0 %v2599
        %2616 = vmatprep.subr.mxu0 0.0
        %2617 = vmatpush1.msra.mxu0 %v2600
        %2618 = vmatprep.subr.mxu0 0.0
        %2619 = vmatpush1.msra.mxu0 %v2601
        %2620 = vmatprep.subr.mxu0 0.0
        %2621 = vmatpush1.msra.mxu0 0.0
        %2622 = vmatprep.subr.mxu0 0.0
        %2623 = vmatpush1.msra.mxu0 0.0
        %2624 = vmatprep.subr.mxu0 0.0
        %2625 = vmatpush1.msra.mxu0 0.0
        %2626 = vmatprep.subr.mxu0 0.0
        %2627 = vmatpush1.msra.mxu0 0.0
        %2628 = vmatprep.subr.mxu0 0.0
        %2629 = vmatpush1.msra.mxu0 0.0
        %2630 = vmatprep.subr.mxu0 0.0
        %2631 = vmatpush1.msra.mxu0 0.0
        %2632 = vmatprep.subr.mxu0 0.0
        %2633 = vmatpush1.msra.mxu0 0.0
        %2634 = vmatprep.subr.mxu0 0.0
        %2635 = vmatpush1.msra.mxu0 0.0
        %2636 = vmatprep.subr.mxu0 0.0
        %2637 = vmatpush1.msra.mxu0 0.0
        %2638 = vmatprep.subr.mxu0 0.0
        %2639 = vmatpush1.msra.mxu0 0.0
        %2640 = vmatprep.subr.mxu0 0.0
        %2641 = vmatpush1.msra.mxu0 0.0
        %2642 = vmatprep.subr.mxu0 0.0
        %2643 = vmatpush1.msra.mxu0 0.0
        %2644 = vmatprep.subr.mxu0 0.0
        %2645 = vmatpush1.msra.mxu0 0.0
        %2646 = vmatprep.subr.mxu0 0.0
        %2647 = vmatpush1.msra.mxu0 0.0
        %2648 = vmatprep.subr.mxu0 0.0
        %2649 = vmatpush1.msra.mxu0 0.0
        %2650 = vmatprep.subr.mxu0 0.0
        %2651 = vmatpush1.msra.mxu0 0.0
        %2652 = vmatprep.subr.mxu0 0.0
        %2653 = vmatpush1.msra.mxu0 0.0
        %2654 = vmatprep.subr.mxu0 0.0
        %2655 = vmatpush1.msra.mxu0 0.0
        %2656 = vmatprep.subr.mxu0 0.0
        %2657 = vmatpush1.msra.mxu0 0.0
        %2658 = vmatprep.subr.mxu0 0.0
        %2659 = vmatpush1.msra.mxu0 0.0
        %2660 = vmatprep.subr.mxu0 0.0
        %2661 = vmatpush1.msra.mxu0 0.0
        %2662 = vmatprep.subr.mxu0 0.0
        %2663 = vmatpush1.msra.mxu0 0.0
        %2664 = vmatprep.subr.mxu0 0.0
        %2665 = vmatpush1.msra.mxu0 0.0
        %2666 = vmatprep.subr.mxu0 0.0
        %2667 = vmatpush1.msra.mxu0 0.0
        %2668 = vmatprep.subr.mxu0 0.0
        %2669 = vmatpush1.msra.mxu0 0.0
        %2670 = vmatprep.subr.mxu0 0.0
        %2671 = vmatpush1.msra.mxu0 0.0
        %2672 = vmatprep.subr.mxu0 0.0
        %2673 = vmatpush1.msra.mxu0 0.0
        %2674 = vmatprep.subr.mxu0 0.0
        %2675 = vmatpush1.msra.mxu0 0.0
        %2676 = vmatprep.mubr.f32.mxu0 0.0
        %2677 = vmatmul.mubr.f32.gmra.mrb[0].mxu0 %v2610
        %v2678 = vpop.f32.mrb[0].mxu0
        %v2679 = vadd.f32 %v2607, %v2678
        %v2680 = vpop.f32.mrb[0].mxu0
        %2681 = vdwg.mxu0
        %v2682 = vmax.f32 %v2679, 0.0
        %v2683 = vld [vmem:[%s489] sm:$0xff]
        %v2684 = vld [vmem:[%s489 + $0x8] sm:$0xff]
        %v2685 = vld [vmem:[%s489 + $0x10] sm:$0xff]
        %v2686 = vld [vmem:[%s489 + $0x18] sm:$0xff]
        %v2687 = vld [vmem:[%s489 + $0x20] sm:$0xff]
        %v2688 = vld [vmem:[%s489 + $0x28] sm:$0xff]
        %v2689 = vld [vmem:[%s489 + $0x30] sm:$0xff]
        %v2690 = vld [vmem:[%s489 + $0x38] sm:$0xff]
        %v2691 = vlaneseq
        %v2692 = vshrl.u32 %v2691, 7
        %v2693 = vsub.s32 0, %v2692
        %v2694 = vrot.slane %v507, %v2693
        %vm2695 = vcmask 523264
        %v2697 = vsel %vm2695, %v2682, 0
        %2699 = vmatprep.subr.mxu0 0.0
        %2700 = vmatpush1.msra.mxu0 %v2683
        %2701 = vmatprep.subr.mxu0 0.0
        %2702 = vmatpush1.msra.mxu0 %v2684
        %2703 = vmatprep.subr.mxu0 0.0
        %2704 = vmatpush1.msra.mxu0 %v2685
        %2705 = vmatprep.subr.mxu0 0.0
        %2706 = vmatpush1.msra.mxu0 %v2686
        %2707 = vmatprep.subr.mxu0 0.0
        %2708 = vmatpush1.msra.mxu0 %v2687
        %2709 = vmatprep.subr.mxu0 0.0
        %2710 = vmatpush1.msra.mxu0 %v2688
        %2711 = vmatprep.subr.mxu0 0.0
        %2712 = vmatpush1.msra.mxu0 %v2689
        %2713 = vmatprep.subr.mxu0 0.0
        %2714 = vmatpush1.msra.mxu0 %v2690
        %2715 = vmatprep.subr.mxu0 0.0
        %2716 = vmatpush1.msra.mxu0 0.0
        %2717 = vmatprep.subr.mxu0 0.0
        %2718 = vmatpush1.msra.mxu0 0.0
        %2719 = vmatprep.subr.mxu0 0.0
        %2720 = vmatpush1.msra.mxu0 0.0
        %2721 = vmatprep.subr.mxu0 0.0
        %2722 = vmatpush1.msra.mxu0 0.0
        %2723 = vmatprep.subr.mxu0 0.0
        %2724 = vmatpush1.msra.mxu0 0.0
        %2725 = vmatprep.subr.mxu0 0.0
        %2726 = vmatpush1.msra.mxu0 0.0
        %2727 = vmatprep.subr.mxu0 0.0
        %2728 = vmatpush1.msra.mxu0 0.0
        %2729 = vmatprep.subr.mxu0 0.0
        %2730 = vmatpush1.msra.mxu0 0.0
        %2731 = vmatprep.subr.mxu0 0.0
        %2732 = vmatpush1.msra.mxu0 0.0
        %2733 = vmatprep.subr.mxu0 0.0
        %2734 = vmatpush1.msra.mxu0 0.0
        %2735 = vmatprep.subr.mxu0 0.0
        %2736 = vmatpush1.msra.mxu0 0.0
        %2737 = vmatprep.subr.mxu0 0.0
        %2738 = vmatpush1.msra.mxu0 0.0
        %2739 = vmatprep.subr.mxu0 0.0
        %2740 = vmatpush1.msra.mxu0 0.0
        %2741 = vmatprep.subr.mxu0 0.0
        %2742 = vmatpush1.msra.mxu0 0.0
        %2743 = vmatprep.subr.mxu0 0.0
        %2744 = vmatpush1.msra.mxu0 0.0
        %2745 = vmatprep.subr.mxu0 0.0
        %2746 = vmatpush1.msra.mxu0 0.0
        %2747 = vmatprep.subr.mxu0 0.0
        %2748 = vmatpush1.msra.mxu0 0.0
        %2749 = vmatprep.subr.mxu0 0.0
        %2750 = vmatpush1.msra.mxu0 0.0
        %2751 = vmatprep.subr.mxu0 0.0
        %2752 = vmatpush1.msra.mxu0 0.0
        %2753 = vmatprep.subr.mxu0 0.0
        %2754 = vmatpush1.msra.mxu0 0.0
        %2755 = vmatprep.subr.mxu0 0.0
        %2756 = vmatpush1.msra.mxu0 0.0
        %2757 = vmatprep.subr.mxu0 0.0
        %2758 = vmatpush1.msra.mxu0 0.0
        %2759 = vmatprep.subr.mxu0 0.0
        %2760 = vmatpush1.msra.mxu0 0.0
        %2761 = vmatprep.subr.mxu0 0.0
        %2762 = vmatpush1.msra.mxu0 0.0
        %2763 = vmatprep.mubr.f32.mxu0 0.0
        %2764 = vmatmul.mubr.f32.gmra.mrb[0].mxu0 %v2697
        %v2765 = vpop.f32.mrb[0].mxu0
        %v2766 = vadd.f32 %v2694, %v2765
        %v2767 = vpop.f32.mrb[0].mxu0
        %2768 = vdwg.mxu0
        %v2769 = vadd.f32 %v2597, %v2766
        %v2770 = vsel %vm532, %v2769, 0.0
        %2771 = vadd.xlane.f32.xlu0 %v2770
        %v2772 = vpop.xlane.xlu0 %2771
        %v2773 = vmul.f32 %v2772, %v1512
        %v2774 = vsub.f32 %v2769, %v2773
        %v2775 = vmul.f32 %v2774, %v2774
        %v2776 = vsel %vm532, %v2775, 0.0
        %2777 = vadd.xlane.f32.xlu0 %v2776
        %v2778 = vpop.xlane.xlu0 %2777
        %v2779 = vmul.f32 %v2778, %v1512
        %v2780 = vadd.f32 %v2779, 1e-05
        %v2781 = vrsqrt.pop %v2780
        %v2782 = vmul.f32 %v2774, %v2781
        %v2783 = vlaneseq
        %v2784 = vshrl.u32 %v2783, 7
        %v2785 = vsub.s32 5, %v2784
        %v2786 = vrot.slane %v507, %v2785
        %v2787 = vmul.f32 %v2782, %v2786
        %v2788 = vlaneseq
        %v2789 = vshrl.u32 %v2788, 7
        %v2790 = vsub.s32 6, %v2789
        %v2791 = vrot.slane %v507, %v2790
        %v2792 = vadd.f32 %v2787, %v2791
        %2793 = vst.msk [vmem:[#allocation2] sm:$0xff] %vm532, %v2792
        %p2794 = scmp.eq.s32.totalorder %s28, 1
        // Predicated region
        $region65: #{transformer_decoder.1} parent=55 // pred_check
          %p2795 = pneg %p2794
        $region66: #{transformer_decoder.1} parent=55 // pred_check_branch
          %2797 = sbr.rel (%p2795) target = $region68
        $region67: #{transformer_decoder.1} parent=55 // pred_region
          %v2798 = vld [vmem:[%s3] sm:$0xff]
          %v2799 = vld [vmem:[%s3 + $0x8] sm:$0xff]
          %v2800 = vsel %vm532, %v2792, 0.0
          %2801 = vadd.xlane.f32.xlu0 %v2800
          %v2802 = vpop.xlane.xlu0 %2801
          %v2803 = vmul.f32 %v2802, %v1512
          %v2804 = vsub.f32 %v2792, %v2803
          %v2805 = vmul.f32 %v2804, %v2804
          %v2806 = vsel %vm532, %v2805, 0.0
          %2807 = vadd.xlane.f32.xlu0 %v2806
          %v2808 = vpop.xlane.xlu0 %2807
          %v2809 = vmul.f32 %v2808, %v1512
          %v2810 = vadd.f32 %v2809, 1e-05
          %v2811 = vrsqrt.pop %v2810
          %v2812 = vmul.f32 %v2804, %v2811
          %v2813 = vmul.f32 %v2812, %v2798
          %v2814 = vadd.f32 %v2813, %v2799
          %2815 = vst.msk [vmem:[%s493] sm:$0xff] %vm532, %v2814
        $region68: #{transformer_decoder.1} parent=55 // pred_fallthru
          _
        %p2816 = scmp.lt.s32.totalorder %s27, 1
        %s2817 = scalar_select %p2816, %s27, 1
        %s2818 = smul.addr %s2817, 8
        %s2819 = scalar_lea.vmem %s9, %s2818
        // Predicated region
        $region69: #{transformer_decoder.1} parent=55 // pred_check
          %p2820 = pneg %p282
        $region70: #{transformer_decoder.1} parent=55 // pred_check_branch
          %2822 = sbr.rel (%p2820) target = $region72
        $region71: #{transformer_decoder.1} parent=55 // pred_region
          _
        $region72: #{transformer_decoder.1} parent=55 // pred_fallthru
          _
      $region56: #{transformer_decoder.1} parent=5 // pred_fallthru
        _
      %p2823 = scmp.le.s32.totalorder 2, %s18
      // Predicated region
      $region73: #{transformer_decoder.1} parent=5 // pred_check
        %p2824 = pneg %p2823
      $region74: #{transformer_decoder.1} parent=5 // pred_check_branch
        %2826 = sbr.rel (%p2824) target = $region76
      $region75: #{transformer_decoder.1} parent=5 // pred_region
        %s2827 = ssub.s32 %s18, 2
        // Predicated region
        $region77: #{transformer_decoder.1} parent=75 // pred_check
          %p2828 = pneg %p288
        $region78: #{transformer_decoder.1} parent=75 // pred_check_branch
          %2830 = sbr.rel (%p2828) target = $region80
        $region79: #{transformer_decoder.1} parent=75 // pred_region
          %p2831 = scmp.lt.s32.totalorder %s29, 1
          %s2832 = scalar_select %p2831, %s29, 1
          %s2833 = smul.addr %s2832, 8
          %s2834 = scalar_lea.vmem %s9, %s2833
        $region80: #{transformer_decoder.1} parent=75 // pred_fallthru
          _
      $region76: #{transformer_decoder.1} parent=5 // pred_fallthru
        _
    $region6: #{transformer_decoder.1} parent=1 // loop_footer
      %s22 = sadd.s32 1, %s18
    $region7: #{transformer_decoder.1} parent=1 // loop_footer_branch
      %17 = sbr.rel target = $region3
    $region8: #{transformer_decoder.1} parent=1 // loop_exit
      _
    %2835 = vsyncpa [#allocation4], 1
    %s2836 = scalar_lea.sflag [#allocation4], 1
    %2837 = vsyncpa %s2836, 1

</llo_original>
